<compile_context>
chip_gen: v5e
topology: v5e:2x2
jax: 0.10.0
libtpu: 0.0.40
codegen_flags: <defaults>
</compile_context>

<pallas_src>
import functools

import jax
import jax.numpy as jnp
from jax.experimental import pallas as pl
from jax.experimental.pallas import tpu as pltpu


# ----------------------------- fused Pallas kernel ---------------------------


def _simsiam_view_kernel(
    xp_ref, cw_ref,                     # backbone
    w1_ref, g1_ref, b1_ref,             # projector L1
    w2_ref, g2_ref, b2_ref,             # projector L2
    w3_ref,                             # projector fc (bias cancelled by affine-free BN)
    w4_ref, g4_ref, b4_ref,             # predictor L1
    w5_ref, b5_ref,                     # predictor L2
    p_ref, z_ref,                       # outputs
    *, bsz, hh, ww, cin,
):
    """Full SimSiam forward for ONE view (grid step = one view).

    xp_ref: [B, H+2, W+2, Cin]   spatially padded NHWC image, bf16
    cw_ref: [9*Cin, Dpad]        conv weight ((kh,kw) outer / cin inner), bf16
    w*_ref: zero-padded bf16 weight matrices, g*/b* f32 BN affine params [1, *]
    p_ref / z_ref: [1, B, Cpad]  f32 predictor / projector outputs
    """
    eps = jnp.float32(1e-5)
    dpad = cw_ref.shape[1]
    rows = bsz * hh * ww

    # ---- backbone stand-in: conv3x3(pad=1) + ReLU + global average pool ----
    xp = xp_ref[...]                                   # [B, H+2, W+2, Cin]
    acc = jnp.zeros((rows, dpad), jnp.float32)
    k = 0
    for dh in range(3):                                # 9 shifted matmuls, f32 accumulate
        for dw in range(3):
            slab = xp[:, dh:dh + hh, dw:dw + ww, :].reshape(rows, cin)
            acc = acc + jnp.dot(
                slab,
                cw_ref[k * cin:(k + 1) * cin, :],
                preferred_element_type=jnp.float32,
            )
            k += 1
    acc = jnp.maximum(acc, 0.0)                                    # ReLU
    feat = jnp.mean(acc.reshape(bsz, hh * ww, dpad), axis=1)       # GAP -> [B, Dpad] f32

    # ---- helpers (BN training mode, per-view batch stats; MXU matmuls) ----
    def bn(x, gamma=None, beta=None):
        mean = jnp.mean(x, axis=0, keepdims=True)
        centered = x - mean
        var = jnp.mean(centered * centered, axis=0, keepdims=True)  # biased
        y = centered * jax.lax.rsqrt(var + eps)
        if gamma is not None:
            y = y * gamma + beta
        return y

    def mm(x, w_ref_):
        return jnp.dot(x.astype(jnp.bfloat16), w_ref_[...],
                       preferred_element_type=jnp.float32)

    # ---- projector: Lin(H,H,nb)->BN->ReLU->Lin(H,H,nb)->BN->ReLU->Lin(H,C)->BN(aff=False) ----
    h = jnp.maximum(bn(mm(feat, w1_ref), g1_ref[...], b1_ref[...]), 0.0)
    h = jnp.maximum(bn(mm(h, w2_ref), g2_ref[...], b2_ref[...]), 0.0)
    zp = bn(mm(h, w3_ref))                                         # [B, Cpad]
    z_ref[0] = zp

    # ---- predictor: Lin(C,P,nb)->BN->ReLU->Lin(P,C,bias) ----
    h = jnp.maximum(bn(mm(zp, w4_ref), g4_ref[...], b4_ref[...]), 0.0)
    p_ref[0] = mm(h, w5_ref) + b5_ref[...]


# ----------------------------- wrapper ----------------------------------------


def _simsiam_forward(x1, x2, conv_w, head, num_classes):
    bsz, cin, hh, ww = x1.shape
    dpad = conv_w.shape[1]
    cpad = head["w3"].shape[1]

    # Both views concatenated -> grid axis of size 2 ("parallel" across TensorCores).
    x = jnp.concatenate([x1, x2], axis=0)                          # [2B, Cin, H, W]
    x = jnp.transpose(x, (0, 2, 3, 1)).astype(jnp.bfloat16)        # NHWC
    x = jnp.pad(x, ((0, 0), (1, 1), (1, 1), (0, 0)))               # 3x3 conv pad=1

    args = (
        x, conv_w,
        head["w1"], head["g1"], head["b1"],
        head["w2"], head["g2"], head["b2"],
        head["w3"],
        head["w4"], head["g4"], head["b4"],
        head["w5"], head["b5"],
    )
    in_specs = [pl.BlockSpec((bsz, hh + 2, ww + 2, cin), lambda v: (v, 0, 0, 0))]
    in_specs += [pl.BlockSpec(a.shape, lambda v: (0, 0)) for a in args[1:]]  # all weights are 2D

    kernel = functools.partial(_simsiam_view_kernel, bsz=bsz, hh=hh, ww=ww, cin=cin)
    p, z = pl.pallas_call(
        kernel,
        out_shape=(
            jax.ShapeDtypeStruct((2, bsz, cpad), jnp.float32),
            jax.ShapeDtypeStruct((2, bsz, cpad), jnp.float32),
        ),
        grid=(2,),
        in_specs=in_specs,
        out_specs=(
            pl.BlockSpec((1, bsz, cpad), lambda v: (v, 0, 0)),
            pl.BlockSpec((1, bsz, cpad), lambda v: (v, 0, 0)),
        ),
        compiler_params=pltpu.CompilerParams(dimension_semantics=("parallel",)),
    )(*args)

    p = p[..., :num_classes]
    z = jax.lax.stop_gradient(z[..., :num_classes])                # .detach()
    return p[0], p[1], z[0], z[1]


simsiam_forward = jax.jit(_simsiam_forward, static_argnames=("num_classes",))


# ----------------------------- parameter init ---------------------------------


def _round_up(n, m=128):
    return ((n + m - 1) // m) * m


def _pad2d(x, rows, cols):
    return jnp.pad(x, ((0, rows - x.shape[0]), (0, cols - x.shape[1])))


def init_params(key, cin, hidden_dim, num_classes, prediction_dim):
    ks = jax.random.split(key, 8)
    dpad = _round_up(hidden_dim)
    cpad = _round_up(num_classes)
    ppad = _round_up(prediction_dim)
    f32, bf16 = jnp.float32, jnp.bfloat16

    def w(k, shape):
        return (0.05 * jax.random.normal(k, shape)).astype(f32)

    conv_w = _pad2d(w(ks[0], (9 * cin, hidden_dim)), 9 * cin, dpad).astype(bf16)
    head = {
        # projector
        "w1": _pad2d(w(ks[1], (hidden_dim, hidden_dim)), dpad, dpad).astype(bf16),
        "g1": _pad2d(jnp.ones((1, hidden_dim), f32), 1, dpad),
        "b1": jnp.zeros((1, dpad), f32),
        "w2": _pad2d(w(ks[2], (hidden_dim, hidden_dim)), dpad, dpad).astype(bf16),
        "g2": _pad2d(jnp.ones((1, hidden_dim), f32), 1, dpad),
        "b2": jnp.zeros((1, dpad), f32),
        "w3": _pad2d(w(ks[3], (hidden_dim, num_classes)), dpad, cpad).astype(bf16),
        # fc bias dropped (cancelled exactly by the following affine-free BatchNorm1d)
        # predictor
        "w4": _pad2d(w(ks[4], (num_classes, prediction_dim)), cpad, ppad).astype(bf16),
        "g4": _pad2d(jnp.ones((1, prediction_dim), f32), 1, ppad),
        "b4": jnp.zeros((1, ppad), f32),
        "w5": _pad2d(w(ks[5], (prediction_dim, num_classes)), ppad, cpad).astype(bf16),
        "b5": _pad2d((0.01 * jax.random.normal(ks[6], (1, num_classes))).astype(f32), 1, cpad),
    }
    return conv_w, head


# ----------------------------- main --------------------------------------------


if __name__ == "__main__":
    B, CIN, H, W = 2, 4, 16, 16
    HIDDEN_DIM = 32       # backbone feature dim (ResNet fc in-features, scaled down)
    NUM_CLASSES = 64      # SimSiam num_classes (scaled down from 2048)
    PREDICTION_DIM = 16   # SimSiam prediction_dim (scaled down from 512)

    key = jax.random.PRNGKey(0)
    k_x1, k_x2, k_p = jax.random.split(key, 3)
    x1 = jax.random.normal(k_x1, (B, CIN, H, W), dtype=jnp.float32)
    x2 = jax.random.normal(k_x2, (B, CIN, H, W), dtype=jnp.float32)

    conv_w, head_params = init_params(k_p, CIN, HIDDEN_DIM, NUM_CLASSES, PREDICTION_DIM)

    p1, p2, z1, z2 = simsiam_forward(x1, x2, conv_w, head_params, num_classes=NUM_CLASSES)
    jax.block_until_ready((p1, p2, z1, z2))

    assert p1.shape == (B, NUM_CLASSES) and p2.shape == (B, NUM_CLASSES)
    assert z1.shape == (B, NUM_CLASSES) and z2.shape == (B, NUM_CLASSES)
    assert bool(jnp.all(jnp.isfinite(p1))) and bool(jnp.all(jnp.isfinite(p2)))
    assert bool(jnp.all(jnp.isfinite(z1))) and bool(jnp.all(jnp.isfinite(z2)))
    print("KERNEL_OK")
</pallas_src>

<mosaic_0001>
module attributes {stable_mosaic.version = 11 : i64} {
  func.func @_simsiam_view_kernel(%arg0: i32, %arg1: memref<2x18x18x4xbf16, #tpu.memory_space<vmem>>, %arg2: memref<36x128xbf16, #tpu.memory_space<vmem>>, %arg3: memref<128x128xbf16, #tpu.memory_space<vmem>>, %arg4: memref<1x128xf32, #tpu.memory_space<vmem>>, %arg5: memref<1x128xf32, #tpu.memory_space<vmem>>, %arg6: memref<128x128xbf16, #tpu.memory_space<vmem>>, %arg7: memref<1x128xf32, #tpu.memory_space<vmem>>, %arg8: memref<1x128xf32, #tpu.memory_space<vmem>>, %arg9: memref<128x128xbf16, #tpu.memory_space<vmem>>, %arg10: memref<128x128xbf16, #tpu.memory_space<vmem>>, %arg11: memref<1x128xf32, #tpu.memory_space<vmem>>, %arg12: memref<1x128xf32, #tpu.memory_space<vmem>>, %arg13: memref<128x128xbf16, #tpu.memory_space<vmem>>, %arg14: memref<1x128xf32, #tpu.memory_space<vmem>>, %arg15: memref<1x2x128xf32, #tpu.memory_space<vmem>>, %arg16: memref<1x2x128xf32, #tpu.memory_space<vmem>>) attributes {dimension_semantics = [#tpu.dimension_semantics<parallel>], iteration_bounds = array<i64: 2>, scalar_prefetch = 0 : i64, scratch_operands = 0 : i64, tpu.core_type = #tpu.core_type<tc>, window_params = [{transform_indices = @transform_0, window_bounds = array<i64: 2, 18, 18, 4>}, {pipeline_mode = #tpu.pipeline_mode<synchronous>, transform_indices = @transform_1, window_bounds = array<i64: 36, 128>}, {pipeline_mode = #tpu.pipeline_mode<synchronous>, transform_indices = @transform_2, window_bounds = array<i64: 128, 128>}, {pipeline_mode = #tpu.pipeline_mode<synchronous>, transform_indices = @transform_3, window_bounds = array<i64: 1, 128>}, {pipeline_mode = #tpu.pipeline_mode<synchronous>, transform_indices = @transform_4, window_bounds = array<i64: 1, 128>}, {pipeline_mode = #tpu.pipeline_mode<synchronous>, transform_indices = @transform_5, window_bounds = array<i64: 128, 128>}, {pipeline_mode = #tpu.pipeline_mode<synchronous>, transform_indices = @transform_6, window_bounds = array<i64: 1, 128>}, {pipeline_mode = #tpu.pipeline_mode<synchronous>, transform_indices = @transform_7, window_bounds = array<i64: 1, 128>}, {pipeline_mode = #tpu.pipeline_mode<synchronous>, transform_indices = @transform_8, window_bounds = array<i64: 128, 128>}, {pipeline_mode = #tpu.pipeline_mode<synchronous>, transform_indices = @transform_9, window_bounds = array<i64: 128, 128>}, {pipeline_mode = #tpu.pipeline_mode<synchronous>, transform_indices = @transform_10, window_bounds = array<i64: 1, 128>}, {pipeline_mode = #tpu.pipeline_mode<synchronous>, transform_indices = @transform_11, window_bounds = array<i64: 1, 128>}, {pipeline_mode = #tpu.pipeline_mode<synchronous>, transform_indices = @transform_12, window_bounds = array<i64: 128, 128>}, {pipeline_mode = #tpu.pipeline_mode<synchronous>, transform_indices = @transform_13, window_bounds = array<i64: 1, 128>}, {transform_indices = @transform_14, window_bounds = array<i64: 1, 2, 128>}, {transform_indices = @transform_15, window_bounds = array<i64: 1, 2, 128>}]} {
    %c0 = arith.constant 0 : index
    %c0_0 = arith.constant 0 : index
    %c0_1 = arith.constant 0 : index
    %c0_2 = arith.constant 0 : index
    %0 = vector.load %arg1[%c0, %c0_0, %c0_1, %c0_2] : memref<2x18x18x4xbf16, #tpu.memory_space<vmem>>, vector<2x18x18x4xbf16>
    %cst = arith.constant 0.000000e+00 : f32
    %1 = vector.broadcast %cst : f32 to vector<512x128xf32>
    %2 = vector.extract_strided_slice %0 {offsets = [0, 0, 0, 0], sizes = [2, 16, 16, 4], strides = [1, 1, 1, 1]} : vector<2x18x18x4xbf16> to vector<2x16x16x4xbf16>
    %3 = vector.shape_cast %2 : vector<2x16x16x4xbf16> to vector<512x4xbf16>
    %c0_3 = arith.constant 0 : index
    %c0_4 = arith.constant 0 : index
    %4 = vector.load %arg2[%c0_3, %c0_4] : memref<36x128xbf16, #tpu.memory_space<vmem>>, vector<4x128xbf16>
    %cst_5 = arith.constant dense<0.000000e+00> : vector<512x128xf32>
    %5 = tpu.matmul %3, %4, %cst_5 {dimension_numbers = #tpu.dot_dimension_numbers<[1], [0], [0], [1], [0, 0, 1, 1], [], []>} : vector<512x4xbf16>, vector<4x128xbf16>, vector<512x128xf32> -> vector<512x128xf32>
    %6 = arith.addf %1, %5 : vector<512x128xf32>
    %7 = vector.extract_strided_slice %0 {offsets = [0, 0, 1, 0], sizes = [2, 16, 16, 4], strides = [1, 1, 1, 1]} : vector<2x18x18x4xbf16> to vector<2x16x16x4xbf16>
    %8 = vector.shape_cast %7 : vector<2x16x16x4xbf16> to vector<512x4xbf16>
    %c4 = arith.constant 4 : index
    %c0_6 = arith.constant 0 : index
    %9 = vector.load %arg2[%c4, %c0_6] : memref<36x128xbf16, #tpu.memory_space<vmem>>, vector<4x128xbf16>
    %cst_7 = arith.constant dense<0.000000e+00> : vector<512x128xf32>
    %10 = tpu.matmul %8, %9, %cst_7 {dimension_numbers = #tpu.dot_dimension_numbers<[1], [0], [0], [1], [0, 0, 1, 1], [], []>} : vector<512x4xbf16>, vector<4x128xbf16>, vector<512x128xf32> -> vector<512x128xf32>
    %11 = arith.addf %6, %10 : vector<512x128xf32>
    %12 = vector.extract_strided_slice %0 {offsets = [0, 0, 2, 0], sizes = [2, 16, 16, 4], strides = [1, 1, 1, 1]} : vector<2x18x18x4xbf16> to vector<2x16x16x4xbf16>
    %13 = vector.shape_cast %12 : vector<2x16x16x4xbf16> to vector<512x4xbf16>
    %c8 = arith.constant 8 : index
    %c0_8 = arith.constant 0 : index
    %14 = vector.load %arg2[%c8, %c0_8] : memref<36x128xbf16, #tpu.memory_space<vmem>>, vector<4x128xbf16>
    %cst_9 = arith.constant dense<0.000000e+00> : vector<512x128xf32>
    %15 = tpu.matmul %13, %14, %cst_9 {dimension_numbers = #tpu.dot_dimension_numbers<[1], [0], [0], [1], [0, 0, 1, 1], [], []>} : vector<512x4xbf16>, vector<4x128xbf16>, vector<512x128xf32> -> vector<512x128xf32>
    %16 = arith.addf %11, %15 : vector<512x128xf32>
    %17 = vector.extract_strided_slice %0 {offsets = [0, 1, 0, 0], sizes = [2, 16, 16, 4], strides = [1, 1, 1, 1]} : vector<2x18x18x4xbf16> to vector<2x16x16x4xbf16>
    %18 = vector.shape_cast %17 : vector<2x16x16x4xbf16> to vector<512x4xbf16>
    %c12 = arith.constant 12 : index
    %c0_10 = arith.constant 0 : index
    %19 = vector.load %arg2[%c12, %c0_10] : memref<36x128xbf16, #tpu.memory_space<vmem>>, vector<4x128xbf16>
    %cst_11 = arith.constant dense<0.000000e+00> : vector<512x128xf32>
    %20 = tpu.matmul %18, %19, %cst_11 {dimension_numbers = #tpu.dot_dimension_numbers<[1], [0], [0], [1], [0, 0, 1, 1], [], []>} : vector<512x4xbf16>, vector<4x128xbf16>, vector<512x128xf32> -> vector<512x128xf32>
    %21 = arith.addf %16, %20 : vector<512x128xf32>
    %22 = vector.extract_strided_slice %0 {offsets = [0, 1, 1, 0], sizes = [2, 16, 16, 4], strides = [1, 1, 1, 1]} : vector<2x18x18x4xbf16> to vector<2x16x16x4xbf16>
    %23 = vector.shape_cast %22 : vector<2x16x16x4xbf16> to vector<512x4xbf16>
    %c16 = arith.constant 16 : index
    %c0_12 = arith.constant 0 : index
    %24 = vector.load %arg2[%c16, %c0_12] : memref<36x128xbf16, #tpu.memory_space<vmem>>, vector<4x128xbf16>
    %cst_13 = arith.constant dense<0.000000e+00> : vector<512x128xf32>
    %25 = tpu.matmul %23, %24, %cst_13 {dimension_numbers = #tpu.dot_dimension_numbers<[1], [0], [0], [1], [0, 0, 1, 1], [], []>} : vector<512x4xbf16>, vector<4x128xbf16>, vector<512x128xf32> -> vector<512x128xf32>
    %26 = arith.addf %21, %25 : vector<512x128xf32>
    %27 = vector.extract_strided_slice %0 {offsets = [0, 1, 2, 0], sizes = [2, 16, 16, 4], strides = [1, 1, 1, 1]} : vector<2x18x18x4xbf16> to vector<2x16x16x4xbf16>
    %28 = vector.shape_cast %27 : vector<2x16x16x4xbf16> to vector<512x4xbf16>
    %c20 = arith.constant 20 : index
    %c0_14 = arith.constant 0 : index
    %29 = vector.load %arg2[%c20, %c0_14] : memref<36x128xbf16, #tpu.memory_space<vmem>>, vector<4x128xbf16>
    %cst_15 = arith.constant dense<0.000000e+00> : vector<512x128xf32>
    %30 = tpu.matmul %28, %29, %cst_15 {dimension_numbers = #tpu.dot_dimension_numbers<[1], [0], [0], [1], [0, 0, 1, 1], [], []>} : vector<512x4xbf16>, vector<4x128xbf16>, vector<512x128xf32> -> vector<512x128xf32>
    %31 = arith.addf %26, %30 : vector<512x128xf32>
    %32 = vector.extract_strided_slice %0 {offsets = [0, 2, 0, 0], sizes = [2, 16, 16, 4], strides = [1, 1, 1, 1]} : vector<2x18x18x4xbf16> to vector<2x16x16x4xbf16>
    %33 = vector.shape_cast %32 : vector<2x16x16x4xbf16> to vector<512x4xbf16>
    %c24 = arith.constant 24 : index
    %c0_16 = arith.constant 0 : index
    %34 = vector.load %arg2[%c24, %c0_16] : memref<36x128xbf16, #tpu.memory_space<vmem>>, vector<4x128xbf16>
    %cst_17 = arith.constant dense<0.000000e+00> : vector<512x128xf32>
    %35 = tpu.matmul %33, %34, %cst_17 {dimension_numbers = #tpu.dot_dimension_numbers<[1], [0], [0], [1], [0, 0, 1, 1], [], []>} : vector<512x4xbf16>, vector<4x128xbf16>, vector<512x128xf32> -> vector<512x128xf32>
    %36 = arith.addf %31, %35 : vector<512x128xf32>
    %37 = vector.extract_strided_slice %0 {offsets = [0, 2, 1, 0], sizes = [2, 16, 16, 4], strides = [1, 1, 1, 1]} : vector<2x18x18x4xbf16> to vector<2x16x16x4xbf16>
    %38 = vector.shape_cast %37 : vector<2x16x16x4xbf16> to vector<512x4xbf16>
    %c28 = arith.constant 28 : index
    %c0_18 = arith.constant 0 : index
    %39 = vector.load %arg2[%c28, %c0_18] : memref<36x128xbf16, #tpu.memory_space<vmem>>, vector<4x128xbf16>
    %cst_19 = arith.constant dense<0.000000e+00> : vector<512x128xf32>
    %40 = tpu.matmul %38, %39, %cst_19 {dimension_numbers = #tpu.dot_dimension_numbers<[1], [0], [0], [1], [0, 0, 1, 1], [], []>} : vector<512x4xbf16>, vector<4x128xbf16>, vector<512x128xf32> -> vector<512x128xf32>
    %41 = arith.addf %36, %40 : vector<512x128xf32>
    %42 = vector.extract_strided_slice %0 {offsets = [0, 2, 2, 0], sizes = [2, 16, 16, 4], strides = [1, 1, 1, 1]} : vector<2x18x18x4xbf16> to vector<2x16x16x4xbf16>
    %43 = vector.shape_cast %42 : vector<2x16x16x4xbf16> to vector<512x4xbf16>
    %c32 = arith.constant 32 : index
    %c0_20 = arith.constant 0 : index
    %44 = vector.load %arg2[%c32, %c0_20] : memref<36x128xbf16, #tpu.memory_space<vmem>>, vector<4x128xbf16>
    %cst_21 = arith.constant dense<0.000000e+00> : vector<512x128xf32>
    %45 = tpu.matmul %43, %44, %cst_21 {dimension_numbers = #tpu.dot_dimension_numbers<[1], [0], [0], [1], [0, 0, 1, 1], [], []>} : vector<512x4xbf16>, vector<4x128xbf16>, vector<512x128xf32> -> vector<512x128xf32>
    %46 = arith.addf %41, %45 : vector<512x128xf32>
    %cst_22 = arith.constant 0.000000e+00 : f32
    %47 = vector.broadcast %cst_22 : f32 to vector<512x128xf32>
    %48 = arith.maximumf %46, %47 : vector<512x128xf32>
    %49 = vector.shape_cast %48 : vector<512x128xf32> to vector<2x256x128xf32>
    %cst_23 = arith.constant dense<0.000000e+00> : vector<2x128xf32>
    %50 = vector.multi_reduction <add>, %49, %cst_23 [1] : vector<2x256x128xf32> to vector<2x128xf32>
    %cst_24 = arith.constant 2.560000e+02 : f32
    %51 = vector.broadcast %cst_24 : f32 to vector<2x128xf32>
    %52 = arith.divf %50, %51 : vector<2x128xf32>
    %53 = arith.truncf %52 : vector<2x128xf32> to vector<2x128xbf16>
    %c0_25 = arith.constant 0 : index
    %c0_26 = arith.constant 0 : index
    %54 = vector.load %arg3[%c0_25, %c0_26] : memref<128x128xbf16, #tpu.memory_space<vmem>>, vector<128x128xbf16>
    %cst_27 = arith.constant dense<0.000000e+00> : vector<2x128xf32>
    %55 = tpu.matmul %53, %54, %cst_27 {dimension_numbers = #tpu.dot_dimension_numbers<[1], [0], [0], [1], [0, 0, 1, 1], [], []>} : vector<2x128xbf16>, vector<128x128xbf16>, vector<2x128xf32> -> vector<2x128xf32>
    %c0_28 = arith.constant 0 : index
    %c0_29 = arith.constant 0 : index
    %56 = vector.load %arg4[%c0_28, %c0_29] : memref<1x128xf32, #tpu.memory_space<vmem>>, vector<1x128xf32>
    %c0_30 = arith.constant 0 : index
    %c0_31 = arith.constant 0 : index
    %57 = vector.load %arg5[%c0_30, %c0_31] : memref<1x128xf32, #tpu.memory_space<vmem>>, vector<1x128xf32>
    %cst_32 = arith.constant dense<0.000000e+00> : vector<128xf32>
    %58 = vector.multi_reduction <add>, %55, %cst_32 [0] : vector<2x128xf32> to vector<128xf32>
    %59 = vector.shape_cast %58 : vector<128xf32> to vector<1x128xf32>
    %cst_33 = arith.constant 2.000000e+00 : f32
    %60 = vector.broadcast %cst_33 : f32 to vector<1x128xf32>
    %61 = arith.divf %59, %60 : vector<1x128xf32>
    %62 = vector.broadcast %61 : vector<1x128xf32> to vector<2x128xf32>
    %63 = arith.subf %55, %62 : vector<2x128xf32>
    %64 = arith.mulf %63, %63 : vector<2x128xf32>
    %cst_34 = arith.constant dense<0.000000e+00> : vector<128xf32>
    %65 = vector.multi_reduction <add>, %64, %cst_34 [0] : vector<2x128xf32> to vector<128xf32>
    %66 = vector.shape_cast %65 : vector<128xf32> to vector<1x128xf32>
    %cst_35 = arith.constant 2.000000e+00 : f32
    %67 = vector.broadcast %cst_35 : f32 to vector<1x128xf32>
    %68 = arith.divf %66, %67 : vector<1x128xf32>
    %cst_36 = arith.constant 9.99999974E-6 : f32
    %69 = vector.broadcast %cst_36 : f32 to vector<1x128xf32>
    %70 = arith.addf %68, %69 : vector<1x128xf32>
    %71 = math.rsqrt %70 : vector<1x128xf32>
    %72 = vector.broadcast %71 : vector<1x128xf32> to vector<2x128xf32>
    %73 = arith.mulf %63, %72 : vector<2x128xf32>
    %74 = vector.broadcast %56 : vector<1x128xf32> to vector<2x128xf32>
    %75 = arith.mulf %73, %74 : vector<2x128xf32>
    %76 = vector.broadcast %57 : vector<1x128xf32> to vector<2x128xf32>
    %77 = arith.addf %75, %76 : vector<2x128xf32>
    %cst_37 = arith.constant 0.000000e+00 : f32
    %78 = vector.broadcast %cst_37 : f32 to vector<2x128xf32>
    %79 = arith.maximumf %77, %78 : vector<2x128xf32>
    %80 = arith.truncf %79 : vector<2x128xf32> to vector<2x128xbf16>
    %c0_38 = arith.constant 0 : index
    %c0_39 = arith.constant 0 : index
    %81 = vector.load %arg6[%c0_38, %c0_39] : memref<128x128xbf16, #tpu.memory_space<vmem>>, vector<128x128xbf16>
    %cst_40 = arith.constant dense<0.000000e+00> : vector<2x128xf32>
    %82 = tpu.matmul %80, %81, %cst_40 {dimension_numbers = #tpu.dot_dimension_numbers<[1], [0], [0], [1], [0, 0, 1, 1], [], []>} : vector<2x128xbf16>, vector<128x128xbf16>, vector<2x128xf32> -> vector<2x128xf32>
    %c0_41 = arith.constant 0 : index
    %c0_42 = arith.constant 0 : index
    %83 = vector.load %arg7[%c0_41, %c0_42] : memref<1x128xf32, #tpu.memory_space<vmem>>, vector<1x128xf32>
    %c0_43 = arith.constant 0 : index
    %c0_44 = arith.constant 0 : index
    %84 = vector.load %arg8[%c0_43, %c0_44] : memref<1x128xf32, #tpu.memory_space<vmem>>, vector<1x128xf32>
    %cst_45 = arith.constant dense<0.000000e+00> : vector<128xf32>
    %85 = vector.multi_reduction <add>, %82, %cst_45 [0] : vector<2x128xf32> to vector<128xf32>
    %86 = vector.shape_cast %85 : vector<128xf32> to vector<1x128xf32>
    %cst_46 = arith.constant 2.000000e+00 : f32
    %87 = vector.broadcast %cst_46 : f32 to vector<1x128xf32>
    %88 = arith.divf %86, %87 : vector<1x128xf32>
    %89 = vector.broadcast %88 : vector<1x128xf32> to vector<2x128xf32>
    %90 = arith.subf %82, %89 : vector<2x128xf32>
    %91 = arith.mulf %90, %90 : vector<2x128xf32>
    %cst_47 = arith.constant dense<0.000000e+00> : vector<128xf32>
    %92 = vector.multi_reduction <add>, %91, %cst_47 [0] : vector<2x128xf32> to vector<128xf32>
    %93 = vector.shape_cast %92 : vector<128xf32> to vector<1x128xf32>
    %cst_48 = arith.constant 2.000000e+00 : f32
    %94 = vector.broadcast %cst_48 : f32 to vector<1x128xf32>
    %95 = arith.divf %93, %94 : vector<1x128xf32>
    %cst_49 = arith.constant 9.99999974E-6 : f32
    %96 = vector.broadcast %cst_49 : f32 to vector<1x128xf32>
    %97 = arith.addf %95, %96 : vector<1x128xf32>
    %98 = math.rsqrt %97 : vector<1x128xf32>
    %99 = vector.broadcast %98 : vector<1x128xf32> to vector<2x128xf32>
    %100 = arith.mulf %90, %99 : vector<2x128xf32>
    %101 = vector.broadcast %83 : vector<1x128xf32> to vector<2x128xf32>
    %102 = arith.mulf %100, %101 : vector<2x128xf32>
    %103 = vector.broadcast %84 : vector<1x128xf32> to vector<2x128xf32>
    %104 = arith.addf %102, %103 : vector<2x128xf32>
    %cst_50 = arith.constant 0.000000e+00 : f32
    %105 = vector.broadcast %cst_50 : f32 to vector<2x128xf32>
    %106 = arith.maximumf %104, %105 : vector<2x128xf32>
    %107 = arith.truncf %106 : vector<2x128xf32> to vector<2x128xbf16>
    %c0_51 = arith.constant 0 : index
    %c0_52 = arith.constant 0 : index
    %108 = vector.load %arg9[%c0_51, %c0_52] : memref<128x128xbf16, #tpu.memory_space<vmem>>, vector<128x128xbf16>
    %cst_53 = arith.constant dense<0.000000e+00> : vector<2x128xf32>
    %109 = tpu.matmul %107, %108, %cst_53 {dimension_numbers = #tpu.dot_dimension_numbers<[1], [0], [0], [1], [0, 0, 1, 1], [], []>} : vector<2x128xbf16>, vector<128x128xbf16>, vector<2x128xf32> -> vector<2x128xf32>
    %cst_54 = arith.constant dense<0.000000e+00> : vector<128xf32>
    %110 = vector.multi_reduction <add>, %109, %cst_54 [0] : vector<2x128xf32> to vector<128xf32>
    %111 = vector.shape_cast %110 : vector<128xf32> to vector<1x128xf32>
    %cst_55 = arith.constant 2.000000e+00 : f32
    %112 = vector.broadcast %cst_55 : f32 to vector<1x128xf32>
    %113 = arith.divf %111, %112 : vector<1x128xf32>
    %114 = vector.broadcast %113 : vector<1x128xf32> to vector<2x128xf32>
    %115 = arith.subf %109, %114 : vector<2x128xf32>
    %116 = arith.mulf %115, %115 : vector<2x128xf32>
    %cst_56 = arith.constant dense<0.000000e+00> : vector<128xf32>
    %117 = vector.multi_reduction <add>, %116, %cst_56 [0] : vector<2x128xf32> to vector<128xf32>
    %118 = vector.shape_cast %117 : vector<128xf32> to vector<1x128xf32>
    %cst_57 = arith.constant 2.000000e+00 : f32
    %119 = vector.broadcast %cst_57 : f32 to vector<1x128xf32>
    %120 = arith.divf %118, %119 : vector<1x128xf32>
    %cst_58 = arith.constant 9.99999974E-6 : f32
    %121 = vector.broadcast %cst_58 : f32 to vector<1x128xf32>
    %122 = arith.addf %120, %121 : vector<1x128xf32>
    %123 = math.rsqrt %122 : vector<1x128xf32>
    %124 = vector.broadcast %123 : vector<1x128xf32> to vector<2x128xf32>
    %125 = arith.mulf %115, %124 : vector<2x128xf32>
    %c0_59 = arith.constant 0 : index
    %c0_60 = arith.constant 0 : index
    %c0_61 = arith.constant 0 : index
    %126 = vector.load %arg16[%c0_59, %c0_60, %c0_61] : memref<1x2x128xf32, #tpu.memory_space<vmem>>, vector<1x2x128xf32>
    %127 = vector.shape_cast %126 : vector<1x2x128xf32> to vector<2x128xf32>
    %128 = vector.shape_cast %125 : vector<2x128xf32> to vector<1x2x128xf32>
    tpu.vector_store %arg16[%c0_59, %c0_60, %c0_61], %128 {strides = array<i32>} : memref<1x2x128xf32, #tpu.memory_space<vmem>>, vector<1x2x128xf32>,
    %129 = arith.truncf %125 : vector<2x128xf32> to vector<2x128xbf16>
    %c0_62 = arith.constant 0 : index
    %c0_63 = arith.constant 0 : index
    %130 = vector.load %arg10[%c0_62, %c0_63] : memref<128x128xbf16, #tpu.memory_space<vmem>>, vector<128x128xbf16>
    %cst_64 = arith.constant dense<0.000000e+00> : vector<2x128xf32>
    %131 = tpu.matmul %129, %130, %cst_64 {dimension_numbers = #tpu.dot_dimension_numbers<[1], [0], [0], [1], [0, 0, 1, 1], [], []>} : vector<2x128xbf16>, vector<128x128xbf16>, vector<2x128xf32> -> vector<2x128xf32>
    %c0_65 = arith.constant 0 : index
    %c0_66 = arith.constant 0 : index
    %132 = vector.load %arg11[%c0_65, %c0_66] : memref<1x128xf32, #tpu.memory_space<vmem>>, vector<1x128xf32>
    %c0_67 = arith.constant 0 : index
    %c0_68 = arith.constant 0 : index
    %133 = vector.load %arg12[%c0_67, %c0_68] : memref<1x128xf32, #tpu.memory_space<vmem>>, vector<1x128xf32>
    %cst_69 = arith.constant dense<0.000000e+00> : vector<128xf32>
    %134 = vector.multi_reduction <add>, %131, %cst_69 [0] : vector<2x128xf32> to vector<128xf32>
    %135 = vector.shape_cast %134 : vector<128xf32> to vector<1x128xf32>
    %cst_70 = arith.constant 2.000000e+00 : f32
    %136 = vector.broadcast %cst_70 : f32 to vector<1x128xf32>
    %137 = arith.divf %135, %136 : vector<1x128xf32>
    %138 = vector.broadcast %137 : vector<1x128xf32> to vector<2x128xf32>
    %139 = arith.subf %131, %138 : vector<2x128xf32>
    %140 = arith.mulf %139, %139 : vector<2x128xf32>
    %cst_71 = arith.constant dense<0.000000e+00> : vector<128xf32>
    %141 = vector.multi_reduction <add>, %140, %cst_71 [0] : vector<2x128xf32> to vector<128xf32>
    %142 = vector.shape_cast %141 : vector<128xf32> to vector<1x128xf32>
    %cst_72 = arith.constant 2.000000e+00 : f32
    %143 = vector.broadcast %cst_72 : f32 to vector<1x128xf32>
    %144 = arith.divf %142, %143 : vector<1x128xf32>
    %cst_73 = arith.constant 9.99999974E-6 : f32
    %145 = vector.broadcast %cst_73 : f32 to vector<1x128xf32>
    %146 = arith.addf %144, %145 : vector<1x128xf32>
    %147 = math.rsqrt %146 : vector<1x128xf32>
    %148 = vector.broadcast %147 : vector<1x128xf32> to vector<2x128xf32>
    %149 = arith.mulf %139, %148 : vector<2x128xf32>
    %150 = vector.broadcast %132 : vector<1x128xf32> to vector<2x128xf32>
    %151 = arith.mulf %149, %150 : vector<2x128xf32>
    %152 = vector.broadcast %133 : vector<1x128xf32> to vector<2x128xf32>
    %153 = arith.addf %151, %152 : vector<2x128xf32>
    %cst_74 = arith.constant 0.000000e+00 : f32
    %154 = vector.broadcast %cst_74 : f32 to vector<2x128xf32>
    %155 = arith.maximumf %153, %154 : vector<2x128xf32>
    %156 = arith.truncf %155 : vector<2x128xf32> to vector<2x128xbf16>
    %c0_75 = arith.constant 0 : index
    %c0_76 = arith.constant 0 : index
    %157 = vector.load %arg13[%c0_75, %c0_76] : memref<128x128xbf16, #tpu.memory_space<vmem>>, vector<128x128xbf16>
    %cst_77 = arith.constant dense<0.000000e+00> : vector<2x128xf32>
    %158 = tpu.matmul %156, %157, %cst_77 {dimension_numbers = #tpu.dot_dimension_numbers<[1], [0], [0], [1], [0, 0, 1, 1], [], []>} : vector<2x128xbf16>, vector<128x128xbf16>, vector<2x128xf32> -> vector<2x128xf32>
    %c0_78 = arith.constant 0 : index
    %c0_79 = arith.constant 0 : index
    %159 = vector.load %arg14[%c0_78, %c0_79] : memref<1x128xf32, #tpu.memory_space<vmem>>, vector<1x128xf32>
    %160 = vector.broadcast %159 : vector<1x128xf32> to vector<2x128xf32>
    %161 = arith.addf %158, %160 : vector<2x128xf32>
    %c0_80 = arith.constant 0 : index
    %c0_81 = arith.constant 0 : index
    %c0_82 = arith.constant 0 : index
    %162 = vector.load %arg15[%c0_80, %c0_81, %c0_82] : memref<1x2x128xf32, #tpu.memory_space<vmem>>, vector<1x2x128xf32>
    %163 = vector.shape_cast %162 : vector<1x2x128xf32> to vector<2x128xf32>
    %164 = vector.shape_cast %161 : vector<2x128xf32> to vector<1x2x128xf32>
    tpu.vector_store %arg15[%c0_80, %c0_81, %c0_82], %164 {strides = array<i32>} : memref<1x2x128xf32, #tpu.memory_space<vmem>>, vector<1x2x128xf32>,
    return
  }
  func.func @transform_0(%arg0: i32) -> (i32, i32, i32, i32) {
    %c0_i32 = arith.constant 0 : i32
    %c0_i32_0 = arith.constant 0 : i32
    %c0_i32_1 = arith.constant 0 : i32
    %c0_i32_2 = arith.constant 0 : i32
    return %arg0, %c0_i32, %c0_i32_0, %c0_i32_1 : i32, i32, i32, i32
  }
  func.func @transform_1(%arg0: i32) -> (i32, i32) {
    %c0_i32 = arith.constant 0 : i32
    %c0_i32_0 = arith.constant 0 : i32
    %c0_i32_1 = arith.constant 0 : i32
    return %c0_i32, %c0_i32_0 : i32, i32
  }
  func.func @transform_2(%arg0: i32) -> (i32, i32) {
    %c0_i32 = arith.constant 0 : i32
    %c0_i32_0 = arith.constant 0 : i32
    %c0_i32_1 = arith.constant 0 : i32
    return %c0_i32, %c0_i32_0 : i32, i32
  }
  func.func @transform_3(%arg0: i32) -> (i32, i32) {
    %c0_i32 = arith.constant 0 : i32
    %c0_i32_0 = arith.constant 0 : i32
    %c0_i32_1 = arith.constant 0 : i32
    return %c0_i32, %c0_i32_0 : i32, i32
  }
  func.func @transform_4(%arg0: i32) -> (i32, i32) {
    %c0_i32 = arith.constant 0 : i32
    %c0_i32_0 = arith.constant 0 : i32
    %c0_i32_1 = arith.constant 0 : i32
    return %c0_i32, %c0_i32_0 : i32, i32
  }
  func.func @transform_5(%arg0: i32) -> (i32, i32) {
    %c0_i32 = arith.constant 0 : i32
    %c0_i32_0 = arith.constant 0 : i32
    %c0_i32_1 = arith.constant 0 : i32
    return %c0_i32, %c0_i32_0 : i32, i32
  }
  func.func @transform_6(%arg0: i32) -> (i32, i32) {
    %c0_i32 = arith.constant 0 : i32
    %c0_i32_0 = arith.constant 0 : i32
    %c0_i32_1 = arith.constant 0 : i32
    return %c0_i32, %c0_i32_0 : i32, i32
  }
  func.func @transform_7(%arg0: i32) -> (i32, i32) {
    %c0_i32 = arith.constant 0 : i32
    %c0_i32_0 = arith.constant 0 : i32
    %c0_i32_1 = arith.constant 0 : i32
    return %c0_i32, %c0_i32_0 : i32, i32
  }
  func.func @transform_8(%arg0: i32) -> (i32, i32) {
    %c0_i32 = arith.constant 0 : i32
    %c0_i32_0 = arith.constant 0 : i32
    %c0_i32_1 = arith.constant 0 : i32
    return %c0_i32, %c0_i32_0 : i32, i32
  }
  func.func @transform_9(%arg0: i32) -> (i32, i32) {
    %c0_i32 = arith.constant 0 : i32
    %c0_i32_0 = arith.constant 0 : i32
    %c0_i32_1 = arith.constant 0 : i32
    return %c0_i32, %c0_i32_0 : i32, i32
  }
  func.func @transform_10(%arg0: i32) -> (i32, i32) {
    %c0_i32 = arith.constant 0 : i32
    %c0_i32_0 = arith.constant 0 : i32
    %c0_i32_1 = arith.constant 0 : i32
    return %c0_i32, %c0_i32_0 : i32, i32
  }
  func.func @transform_11(%arg0: i32) -> (i32, i32) {
    %c0_i32 = arith.constant 0 : i32
    %c0_i32_0 = arith.constant 0 : i32
    %c0_i32_1 = arith.constant 0 : i32
    return %c0_i32, %c0_i32_0 : i32, i32
  }
  func.func @transform_12(%arg0: i32) -> (i32, i32) {
    %c0_i32 = arith.constant 0 : i32
    %c0_i32_0 = arith.constant 0 : i32
    %c0_i32_1 = arith.constant 0 : i32
    return %c0_i32, %c0_i32_0 : i32, i32
  }
  func.func @transform_13(%arg0: i32) -> (i32, i32) {
    %c0_i32 = arith.constant 0 : i32
    %c0_i32_0 = arith.constant 0 : i32
    %c0_i32_1 = arith.constant 0 : i32
    return %c0_i32, %c0_i32_0 : i32, i32
  }
  func.func @transform_14(%arg0: i32) -> (i32, i32, i32) {
    %c0_i32 = arith.constant 0 : i32
    %c0_i32_0 = arith.constant 0 : i32
    %c0_i32_1 = arith.constant 0 : i32
    return %arg0, %c0_i32, %c0_i32_0 : i32, i32, i32
  }
  func.func @transform_15(%arg0: i32) -> (i32, i32, i32) {
    %c0_i32 = arith.constant 0 : i32
    %c0_i32_0 = arith.constant 0 : i32
    %c0_i32_1 = arith.constant 0 : i32
    return %arg0, %c0_i32, %c0_i32_0 : i32, i32, i32
  }
}

</mosaic_0001>

<llo_original>
// kernel: _simsiam_forward.1
$region0: #{_simsiam_forward.1}
  #allocation0 [shape = 'u32[]', space=smem, size = 0x4, offset = 0x4, fixed_abs, tag = 'smem constant byte address 0x4 - core index']
  #allocation1 [shape = 'u32[72,128]{1,0:T(1,128)}', space=vmem, size = 0x9000, scoped, tag = 'internal scratch']
  %s0 = inlined_call_operand.vmem [shape: bf16[4,18,18,4], index: 0, kind: input, shape index: {}]
  %s1 = inlined_call_operand.vmem [shape: bf16[36,128], index: 1, kind: input, shape index: {}]
  %s2 = inlined_call_operand.vmem [shape: bf16[128,128], index: 2, kind: input, shape index: {}]
  %s3 = inlined_call_operand.vmem [shape: f32[1,128], index: 3, kind: input, shape index: {}]
  %s4 = inlined_call_operand.vmem [shape: f32[1,128], index: 4, kind: input, shape index: {}]
  %s5 = inlined_call_operand.vmem [shape: bf16[128,128], index: 5, kind: input, shape index: {}]
  %s6 = inlined_call_operand.vmem [shape: f32[1,128], index: 6, kind: input, shape index: {}]
  %s7 = inlined_call_operand.vmem [shape: f32[1,128], index: 7, kind: input, shape index: {}]
  %s8 = inlined_call_operand.vmem [shape: bf16[128,128], index: 8, kind: input, shape index: {}]
  %s9 = inlined_call_operand.vmem [shape: bf16[128,128], index: 9, kind: input, shape index: {}]
  %s10 = inlined_call_operand.vmem [shape: f32[1,128], index: 10, kind: input, shape index: {}]
  %s11 = inlined_call_operand.vmem [shape: f32[1,128], index: 11, kind: input, shape index: {}]
  %s12 = inlined_call_operand.vmem [shape: bf16[128,128], index: 12, kind: input, shape index: {}]
  %s13 = inlined_call_operand.vmem [shape: f32[1,128], index: 13, kind: input, shape index: {}]
  %s14 = inlined_call_operand.vmem [shape: f32[2,2,128], index: 14, kind: output, shape index: {0}]
  %s15 = inlined_call_operand.vmem [shape: f32[2,2,128], index: 15, kind: output, shape index: {1}]
  %16 = xla_tuple %s14, %s15
  %s17 = sld [smem:[#allocation0]]
  $region97: #{_simsiam_forward.1} parent=0
    _
  %s19 = ssub.s32 1, %s17
  %s20 = scalar_select 0, %s19, %s17
  loop: start=0, step=1, limit=4
  $region2: #{_simsiam_forward.1} parent=0 // loop_pre_header
    _
  $region3: #{_simsiam_forward.1} parent=0 // loop_header
    %s22 = sphi 0, %s26
    %p23 = scmp.ge.s32.totalorder %s22, 4
    %s32 = sphi 0, %s34
    %s35 = sphi 0, %s32
    %s36 = sphi 0, %s35
    %s52 = sphi 0, %s36
    %s56 = sphi 0, %s56
    %s58 = sphi 0, %s56
    %s59 = sphi 0, %s58
    %s73 = sphi 0, %s59
    %s77 = sphi 0, %s77
    %s79 = sphi 0, %s77
    %s80 = sphi 0, %s79
    %s94 = sphi 0, %s80
    %s98 = sphi 0, %s98
    %s100 = sphi 0, %s98
    %s101 = sphi 0, %s100
    %s115 = sphi 0, %s101
    %s119 = sphi 0, %s119
    %s121 = sphi 0, %s119
    %s122 = sphi 0, %s121
    %s136 = sphi 0, %s122
    %s140 = sphi 0, %s140
    %s142 = sphi 0, %s140
    %s143 = sphi 0, %s142
    %s157 = sphi 0, %s143
    %s161 = sphi 0, %s161
    %s163 = sphi 0, %s161
    %s164 = sphi 0, %s163
    %s178 = sphi 0, %s164
    %s182 = sphi 0, %s182
    %s184 = sphi 0, %s182
    %s185 = sphi 0, %s184
    %s199 = sphi 0, %s185
    %s203 = sphi 0, %s203
    %s205 = sphi 0, %s203
    %s206 = sphi 0, %s205
    %s220 = sphi 0, %s206
    %s224 = sphi 0, %s224
    %s226 = sphi 0, %s224
    %s227 = sphi 0, %s226
    %s241 = sphi 0, %s227
    %s245 = sphi 0, %s245
    %s247 = sphi 0, %s245
    %s248 = sphi 0, %s247
    %s262 = sphi 0, %s248
    %s266 = sphi 0, %s266
    %s268 = sphi 0, %s266
    %s269 = sphi 0, %s268
    %s283 = sphi 0, %s269
    %s287 = sphi 0, %s287
    %s289 = sphi 0, %s287
    %s290 = sphi 0, %s289
    %s304 = sphi 0, %s290
    %s308 = sphi 0, %s308
    %s310 = sphi 0, %s308
    %s311 = sphi 0, %s310
    %s325 = sphi 0, %s311
    %s331 = sphi 0, %s333
    %s334 = sphi 0, %s331
    %s335 = sphi 0, %s334
    %s351 = sphi 0, %s335
    %s357 = sphi 0, %s359
    %s360 = sphi 0, %s357
    %s361 = sphi 0, %s360
    %s377 = sphi 0, %s361
  $region4: #{_simsiam_forward.1} parent=0 // loop_header_branch
    %25 = sbr.rel (%p23) target = $region8
  $region5: #{_simsiam_forward.1} parent=0 // loop_body
    %s27 = ssub.s32 %s22, 1
    %s28 = ssub.s32 %s22, 2
    %s29 = sadd.s32 %s22, 1
    %s30 = ssub.s32 %s22, %s29
    %p31 = scmp.eq.s32.totalorder %s30, 0
    %s33 = sadd.s32 %s32, 1
    %s34 = scalar_select %p31, %s32, %s33
    %p37 = pneg %p31
    %p38 = scmp.eq.s32.totalorder %s22, 1
    %p39 = por %p37, %p38
    %p40 = scmp.ne.s32.totalorder %s32, %s35
    %p41 = scmp.eq.s32.totalorder %s22, 0
    %p42 = por %p40, %p41
    %p43 = scmp.ne.s32.totalorder %s32, %s35
    %p44 = scmp.eq.s32.totalorder %s27, 1
    %p45 = por %p43, %p44
    %p46 = scmp.ne.s32.totalorder %s35, %s36
    %p47 = scmp.eq.s32.totalorder %s27, 0
    %p48 = por %p46, %p47
    %p49 = scmp.ne.s32.totalorder %s35, %s36
    %p50 = scmp.eq.s32.totalorder %s28, 1
    %p51 = por %p49, %p50
    %p53 = scmp.ne.s32.totalorder %s36, %s52
    %p54 = scmp.eq.s32.totalorder %s28, 0
    %p55 = por %p53, %p54
    %s57 = sadd.s32 %s56, 1
    %p60 = scmp.eq.s32.totalorder %s22, 1
    %p61 = scmp.ne.s32.totalorder %s56, %s58
    %p62 = scmp.eq.s32.totalorder %s22, 0
    %p63 = por %p61, %p62
    %p64 = scmp.ne.s32.totalorder %s56, %s58
    %p65 = scmp.eq.s32.totalorder %s27, 1
    %p66 = por %p64, %p65
    %p67 = scmp.ne.s32.totalorder %s58, %s59
    %p68 = scmp.eq.s32.totalorder %s27, 0
    %p69 = por %p67, %p68
    %p70 = scmp.ne.s32.totalorder %s58, %s59
    %p71 = scmp.eq.s32.totalorder %s28, 1
    %p72 = por %p70, %p71
    %p74 = scmp.ne.s32.totalorder %s59, %s73
    %p75 = scmp.eq.s32.totalorder %s28, 0
    %p76 = por %p74, %p75
    %s78 = sadd.s32 %s77, 1
    %p81 = scmp.eq.s32.totalorder %s22, 1
    %p82 = scmp.ne.s32.totalorder %s77, %s79
    %p83 = scmp.eq.s32.totalorder %s22, 0
    %p84 = por %p82, %p83
    %p85 = scmp.ne.s32.totalorder %s77, %s79
    %p86 = scmp.eq.s32.totalorder %s27, 1
    %p87 = por %p85, %p86
    %p88 = scmp.ne.s32.totalorder %s79, %s80
    %p89 = scmp.eq.s32.totalorder %s27, 0
    %p90 = por %p88, %p89
    %p91 = scmp.ne.s32.totalorder %s79, %s80
    %p92 = scmp.eq.s32.totalorder %s28, 1
    %p93 = por %p91, %p92
    %p95 = scmp.ne.s32.totalorder %s80, %s94
    %p96 = scmp.eq.s32.totalorder %s28, 0
    %p97 = por %p95, %p96
    %s99 = sadd.s32 %s98, 1
    %p102 = scmp.eq.s32.totalorder %s22, 1
    %p103 = scmp.ne.s32.totalorder %s98, %s100
    %p104 = scmp.eq.s32.totalorder %s22, 0
    %p105 = por %p103, %p104
    %p106 = scmp.ne.s32.totalorder %s98, %s100
    %p107 = scmp.eq.s32.totalorder %s27, 1
    %p108 = por %p106, %p107
    %p109 = scmp.ne.s32.totalorder %s100, %s101
    %p110 = scmp.eq.s32.totalorder %s27, 0
    %p111 = por %p109, %p110
    %p112 = scmp.ne.s32.totalorder %s100, %s101
    %p113 = scmp.eq.s32.totalorder %s28, 1
    %p114 = por %p112, %p113
    %p116 = scmp.ne.s32.totalorder %s101, %s115
    %p117 = scmp.eq.s32.totalorder %s28, 0
    %p118 = por %p116, %p117
    %s120 = sadd.s32 %s119, 1
    %p123 = scmp.eq.s32.totalorder %s22, 1
    %p124 = scmp.ne.s32.totalorder %s119, %s121
    %p125 = scmp.eq.s32.totalorder %s22, 0
    %p126 = por %p124, %p125
    %p127 = scmp.ne.s32.totalorder %s119, %s121
    %p128 = scmp.eq.s32.totalorder %s27, 1
    %p129 = por %p127, %p128
    %p130 = scmp.ne.s32.totalorder %s121, %s122
    %p131 = scmp.eq.s32.totalorder %s27, 0
    %p132 = por %p130, %p131
    %p133 = scmp.ne.s32.totalorder %s121, %s122
    %p134 = scmp.eq.s32.totalorder %s28, 1
    %p135 = por %p133, %p134
    %p137 = scmp.ne.s32.totalorder %s122, %s136
    %p138 = scmp.eq.s32.totalorder %s28, 0
    %p139 = por %p137, %p138
    %s141 = sadd.s32 %s140, 1
    %p144 = scmp.eq.s32.totalorder %s22, 1
    %p145 = scmp.ne.s32.totalorder %s140, %s142
    %p146 = scmp.eq.s32.totalorder %s22, 0
    %p147 = por %p145, %p146
    %p148 = scmp.ne.s32.totalorder %s140, %s142
    %p149 = scmp.eq.s32.totalorder %s27, 1
    %p150 = por %p148, %p149
    %p151 = scmp.ne.s32.totalorder %s142, %s143
    %p152 = scmp.eq.s32.totalorder %s27, 0
    %p153 = por %p151, %p152
    %p154 = scmp.ne.s32.totalorder %s142, %s143
    %p155 = scmp.eq.s32.totalorder %s28, 1
    %p156 = por %p154, %p155
    %p158 = scmp.ne.s32.totalorder %s143, %s157
    %p159 = scmp.eq.s32.totalorder %s28, 0
    %p160 = por %p158, %p159
    %s162 = sadd.s32 %s161, 1
    %p165 = scmp.eq.s32.totalorder %s22, 1
    %p166 = scmp.ne.s32.totalorder %s161, %s163
    %p167 = scmp.eq.s32.totalorder %s22, 0
    %p168 = por %p166, %p167
    %p169 = scmp.ne.s32.totalorder %s161, %s163
    %p170 = scmp.eq.s32.totalorder %s27, 1
    %p171 = por %p169, %p170
    %p172 = scmp.ne.s32.totalorder %s163, %s164
    %p173 = scmp.eq.s32.totalorder %s27, 0
    %p174 = por %p172, %p173
    %p175 = scmp.ne.s32.totalorder %s163, %s164
    %p176 = scmp.eq.s32.totalorder %s28, 1
    %p177 = por %p175, %p176
    %p179 = scmp.ne.s32.totalorder %s164, %s178
    %p180 = scmp.eq.s32.totalorder %s28, 0
    %p181 = por %p179, %p180
    %s183 = sadd.s32 %s182, 1
    %p186 = scmp.eq.s32.totalorder %s22, 1
    %p187 = scmp.ne.s32.totalorder %s182, %s184
    %p188 = scmp.eq.s32.totalorder %s22, 0
    %p189 = por %p187, %p188
    %p190 = scmp.ne.s32.totalorder %s182, %s184
    %p191 = scmp.eq.s32.totalorder %s27, 1
    %p192 = por %p190, %p191
    %p193 = scmp.ne.s32.totalorder %s184, %s185
    %p194 = scmp.eq.s32.totalorder %s27, 0
    %p195 = por %p193, %p194
    %p196 = scmp.ne.s32.totalorder %s184, %s185
    %p197 = scmp.eq.s32.totalorder %s28, 1
    %p198 = por %p196, %p197
    %p200 = scmp.ne.s32.totalorder %s185, %s199
    %p201 = scmp.eq.s32.totalorder %s28, 0
    %p202 = por %p200, %p201
    %s204 = sadd.s32 %s203, 1
    %p207 = scmp.eq.s32.totalorder %s22, 1
    %p208 = scmp.ne.s32.totalorder %s203, %s205
    %p209 = scmp.eq.s32.totalorder %s22, 0
    %p210 = por %p208, %p209
    %p211 = scmp.ne.s32.totalorder %s203, %s205
    %p212 = scmp.eq.s32.totalorder %s27, 1
    %p213 = por %p211, %p212
    %p214 = scmp.ne.s32.totalorder %s205, %s206
    %p215 = scmp.eq.s32.totalorder %s27, 0
    %p216 = por %p214, %p215
    %p217 = scmp.ne.s32.totalorder %s205, %s206
    %p218 = scmp.eq.s32.totalorder %s28, 1
    %p219 = por %p217, %p218
    %p221 = scmp.ne.s32.totalorder %s206, %s220
    %p222 = scmp.eq.s32.totalorder %s28, 0
    %p223 = por %p221, %p222
    %s225 = sadd.s32 %s224, 1
    %p228 = scmp.eq.s32.totalorder %s22, 1
    %p229 = scmp.ne.s32.totalorder %s224, %s226
    %p230 = scmp.eq.s32.totalorder %s22, 0
    %p231 = por %p229, %p230
    %p232 = scmp.ne.s32.totalorder %s224, %s226
    %p233 = scmp.eq.s32.totalorder %s27, 1
    %p234 = por %p232, %p233
    %p235 = scmp.ne.s32.totalorder %s226, %s227
    %p236 = scmp.eq.s32.totalorder %s27, 0
    %p237 = por %p235, %p236
    %p238 = scmp.ne.s32.totalorder %s226, %s227
    %p239 = scmp.eq.s32.totalorder %s28, 1
    %p240 = por %p238, %p239
    %p242 = scmp.ne.s32.totalorder %s227, %s241
    %p243 = scmp.eq.s32.totalorder %s28, 0
    %p244 = por %p242, %p243
    %s246 = sadd.s32 %s245, 1
    %p249 = scmp.eq.s32.totalorder %s22, 1
    %p250 = scmp.ne.s32.totalorder %s245, %s247
    %p251 = scmp.eq.s32.totalorder %s22, 0
    %p252 = por %p250, %p251
    %p253 = scmp.ne.s32.totalorder %s245, %s247
    %p254 = scmp.eq.s32.totalorder %s27, 1
    %p255 = por %p253, %p254
    %p256 = scmp.ne.s32.totalorder %s247, %s248
    %p257 = scmp.eq.s32.totalorder %s27, 0
    %p258 = por %p256, %p257
    %p259 = scmp.ne.s32.totalorder %s247, %s248
    %p260 = scmp.eq.s32.totalorder %s28, 1
    %p261 = por %p259, %p260
    %p263 = scmp.ne.s32.totalorder %s248, %s262
    %p264 = scmp.eq.s32.totalorder %s28, 0
    %p265 = por %p263, %p264
    %s267 = sadd.s32 %s266, 1
    %p270 = scmp.eq.s32.totalorder %s22, 1
    %p271 = scmp.ne.s32.totalorder %s266, %s268
    %p272 = scmp.eq.s32.totalorder %s22, 0
    %p273 = por %p271, %p272
    %p274 = scmp.ne.s32.totalorder %s266, %s268
    %p275 = scmp.eq.s32.totalorder %s27, 1
    %p276 = por %p274, %p275
    %p277 = scmp.ne.s32.totalorder %s268, %s269
    %p278 = scmp.eq.s32.totalorder %s27, 0
    %p279 = por %p277, %p278
    %p280 = scmp.ne.s32.totalorder %s268, %s269
    %p281 = scmp.eq.s32.totalorder %s28, 1
    %p282 = por %p280, %p281
    %p284 = scmp.ne.s32.totalorder %s269, %s283
    %p285 = scmp.eq.s32.totalorder %s28, 0
    %p286 = por %p284, %p285
    %s288 = sadd.s32 %s287, 1
    %p291 = scmp.eq.s32.totalorder %s22, 1
    %p292 = scmp.ne.s32.totalorder %s287, %s289
    %p293 = scmp.eq.s32.totalorder %s22, 0
    %p294 = por %p292, %p293
    %p295 = scmp.ne.s32.totalorder %s287, %s289
    %p296 = scmp.eq.s32.totalorder %s27, 1
    %p297 = por %p295, %p296
    %p298 = scmp.ne.s32.totalorder %s289, %s290
    %p299 = scmp.eq.s32.totalorder %s27, 0
    %p300 = por %p298, %p299
    %p301 = scmp.ne.s32.totalorder %s289, %s290
    %p302 = scmp.eq.s32.totalorder %s28, 1
    %p303 = por %p301, %p302
    %p305 = scmp.ne.s32.totalorder %s290, %s304
    %p306 = scmp.eq.s32.totalorder %s28, 0
    %p307 = por %p305, %p306
    %s309 = sadd.s32 %s308, 1
    %p312 = scmp.eq.s32.totalorder %s22, 1
    %p313 = scmp.ne.s32.totalorder %s308, %s310
    %p314 = scmp.eq.s32.totalorder %s22, 0
    %p315 = por %p313, %p314
    %p316 = scmp.ne.s32.totalorder %s308, %s310
    %p317 = scmp.eq.s32.totalorder %s27, 1
    %p318 = por %p316, %p317
    %p319 = scmp.ne.s32.totalorder %s310, %s311
    %p320 = scmp.eq.s32.totalorder %s27, 0
    %p321 = por %p319, %p320
    %p322 = scmp.ne.s32.totalorder %s310, %s311
    %p323 = scmp.eq.s32.totalorder %s28, 1
    %p324 = por %p322, %p323
    %p326 = scmp.ne.s32.totalorder %s311, %s325
    %p327 = scmp.eq.s32.totalorder %s28, 0
    %p328 = por %p326, %p327
    %s329 = ssub.s32 %s22, %s29
    %p330 = scmp.eq.s32.totalorder %s329, 0
    %s332 = sadd.s32 %s331, 1
    %s333 = scalar_select %p330, %s331, %s332
    %p336 = pneg %p330
    %p337 = scmp.eq.s32.totalorder %s22, 1
    %p338 = por %p336, %p337
    %p339 = scmp.ne.s32.totalorder %s331, %s334
    %p340 = scmp.eq.s32.totalorder %s22, 0
    %p341 = por %p339, %p340
    %p342 = scmp.ne.s32.totalorder %s331, %s334
    %p343 = scmp.eq.s32.totalorder %s27, 1
    %p344 = por %p342, %p343
    %p345 = scmp.ne.s32.totalorder %s334, %s335
    %p346 = scmp.eq.s32.totalorder %s27, 0
    %p347 = por %p345, %p346
    %p348 = scmp.ne.s32.totalorder %s334, %s335
    %p349 = scmp.eq.s32.totalorder %s28, 1
    %p350 = por %p348, %p349
    %p352 = scmp.ne.s32.totalorder %s335, %s351
    %p353 = scmp.eq.s32.totalorder %s28, 0
    %p354 = por %p352, %p353
    %s355 = ssub.s32 %s22, %s29
    %p356 = scmp.eq.s32.totalorder %s355, 0
    %s358 = sadd.s32 %s357, 1
    %s359 = scalar_select %p356, %s357, %s358
    %p362 = pneg %p356
    %p363 = scmp.eq.s32.totalorder %s22, 1
    %p364 = por %p362, %p363
    %p365 = scmp.ne.s32.totalorder %s357, %s360
    %p366 = scmp.eq.s32.totalorder %s22, 0
    %p367 = por %p365, %p366
    %p368 = scmp.ne.s32.totalorder %s357, %s360
    %p369 = scmp.eq.s32.totalorder %s27, 1
    %p370 = por %p368, %p369
    %p371 = scmp.ne.s32.totalorder %s360, %s361
    %p372 = scmp.eq.s32.totalorder %s27, 0
    %p373 = por %p371, %p372
    %p374 = scmp.ne.s32.totalorder %s360, %s361
    %p375 = scmp.eq.s32.totalorder %s28, 1
    %p376 = por %p374, %p375
    %p378 = scmp.ne.s32.totalorder %s361, %s377
    %p379 = scmp.eq.s32.totalorder %s28, 0
    %p380 = por %p378, %p379
    %p381 = scmp.le.s32.totalorder 1, %s22
    %p382 = scmp.lt.s32.totalorder %s22, 3
    %p383 = pnand %p381, %p382
    %p384 = pneg %p383
    // Predicated region
    $region9: #{_simsiam_forward.1} parent=5 // pred_check
      _
    $region10: #{_simsiam_forward.1} parent=5 // pred_check_branch
      %386 = sbr.rel (%p383) target = $region12
    $region11: #{_simsiam_forward.1} parent=5 // pred_region
      %s387 = ssub.s32 %s22, 1
      // Predicated region
      $region13: #{_simsiam_forward.1} parent=11 // pred_check
        %p388 = pneg %p69
      $region14: #{_simsiam_forward.1} parent=11 // pred_check_branch
        %390 = sbr.rel (%p388) target = $region16
      $region15: #{_simsiam_forward.1} parent=11 // pred_region
        _
      $region16: #{_simsiam_forward.1} parent=11 // pred_fallthru
        _
      // Predicated region
      $region17: #{_simsiam_forward.1} parent=11 // pred_check
        %p391 = pneg %p90
      $region18: #{_simsiam_forward.1} parent=11 // pred_check_branch
        %393 = sbr.rel (%p391) target = $region20
      $region19: #{_simsiam_forward.1} parent=11 // pred_region
        _
      $region20: #{_simsiam_forward.1} parent=11 // pred_fallthru
        _
      // Predicated region
      $region21: #{_simsiam_forward.1} parent=11 // pred_check
        %p394 = pneg %p111
      $region22: #{_simsiam_forward.1} parent=11 // pred_check_branch
        %396 = sbr.rel (%p394) target = $region24
      $region23: #{_simsiam_forward.1} parent=11 // pred_region
        _
      $region24: #{_simsiam_forward.1} parent=11 // pred_fallthru
        _
      // Predicated region
      $region25: #{_simsiam_forward.1} parent=11 // pred_check
        %p397 = pneg %p132
      $region26: #{_simsiam_forward.1} parent=11 // pred_check_branch
        %399 = sbr.rel (%p397) target = $region28
      $region27: #{_simsiam_forward.1} parent=11 // pred_region
        _
      $region28: #{_simsiam_forward.1} parent=11 // pred_fallthru
        _
      // Predicated region
      $region29: #{_simsiam_forward.1} parent=11 // pred_check
        %p400 = pneg %p153
      $region30: #{_simsiam_forward.1} parent=11 // pred_check_branch
        %402 = sbr.rel (%p400) target = $region32
      $region31: #{_simsiam_forward.1} parent=11 // pred_region
        _
      $region32: #{_simsiam_forward.1} parent=11 // pred_fallthru
        _
      // Predicated region
      $region33: #{_simsiam_forward.1} parent=11 // pred_check
        %p403 = pneg %p174
      $region34: #{_simsiam_forward.1} parent=11 // pred_check_branch
        %405 = sbr.rel (%p403) target = $region36
      $region35: #{_simsiam_forward.1} parent=11 // pred_region
        _
      $region36: #{_simsiam_forward.1} parent=11 // pred_fallthru
        _
      // Predicated region
      $region37: #{_simsiam_forward.1} parent=11 // pred_check
        %p406 = pneg %p195
      $region38: #{_simsiam_forward.1} parent=11 // pred_check_branch
        %408 = sbr.rel (%p406) target = $region40
      $region39: #{_simsiam_forward.1} parent=11 // pred_region
        _
      $region40: #{_simsiam_forward.1} parent=11 // pred_fallthru
        _
      // Predicated region
      $region41: #{_simsiam_forward.1} parent=11 // pred_check
        %p409 = pneg %p216
      $region42: #{_simsiam_forward.1} parent=11 // pred_check_branch
        %411 = sbr.rel (%p409) target = $region44
      $region43: #{_simsiam_forward.1} parent=11 // pred_region
        _
      $region44: #{_simsiam_forward.1} parent=11 // pred_fallthru
        _
      // Predicated region
      $region45: #{_simsiam_forward.1} parent=11 // pred_check
        %p412 = pneg %p237
      $region46: #{_simsiam_forward.1} parent=11 // pred_check_branch
        %414 = sbr.rel (%p412) target = $region48
      $region47: #{_simsiam_forward.1} parent=11 // pred_region
        _
      $region48: #{_simsiam_forward.1} parent=11 // pred_fallthru
        _
      // Predicated region
      $region49: #{_simsiam_forward.1} parent=11 // pred_check
        %p415 = pneg %p258
      $region50: #{_simsiam_forward.1} parent=11 // pred_check_branch
        %417 = sbr.rel (%p415) target = $region52
      $region51: #{_simsiam_forward.1} parent=11 // pred_region
        _
      $region52: #{_simsiam_forward.1} parent=11 // pred_fallthru
        _
      // Predicated region
      $region53: #{_simsiam_forward.1} parent=11 // pred_check
        %p418 = pneg %p279
      $region54: #{_simsiam_forward.1} parent=11 // pred_check_branch
        %420 = sbr.rel (%p418) target = $region56
      $region55: #{_simsiam_forward.1} parent=11 // pred_region
        _
      $region56: #{_simsiam_forward.1} parent=11 // pred_fallthru
        _
      // Predicated region
      $region57: #{_simsiam_forward.1} parent=11 // pred_check
        %p421 = pneg %p300
      $region58: #{_simsiam_forward.1} parent=11 // pred_check_branch
        %423 = sbr.rel (%p421) target = $region60
      $region59: #{_simsiam_forward.1} parent=11 // pred_region
        _
      $region60: #{_simsiam_forward.1} parent=11 // pred_fallthru
        _
      // Predicated region
      $region61: #{_simsiam_forward.1} parent=11 // pred_check
        %p424 = pneg %p321
      $region62: #{_simsiam_forward.1} parent=11 // pred_check_branch
        %426 = sbr.rel (%p424) target = $region64
      $region63: #{_simsiam_forward.1} parent=11 // pred_region
        _
      $region64: #{_simsiam_forward.1} parent=11 // pred_fallthru
        _
    $region12: #{_simsiam_forward.1} parent=5 // pred_fallthru
      _
    %p427 = scmp.lt.s32.totalorder %s22, 2
    // Predicated region
    $region65: #{_simsiam_forward.1} parent=5 // pred_check
      %p428 = pneg %p427
    $region66: #{_simsiam_forward.1} parent=5 // pred_check_branch
      %430 = sbr.rel (%p428) target = $region68
    $region67: #{_simsiam_forward.1} parent=5 // pred_region
      // Predicated region
      $region69: #{_simsiam_forward.1} parent=67 // pred_check
        %p431 = pneg %p42
      $region70: #{_simsiam_forward.1} parent=67 // pred_check_branch
        %433 = sbr.rel (%p431) target = $region72
      $region71: #{_simsiam_forward.1} parent=67 // pred_region
        %s434 = smul.u32 2, %s22
        %p435 = scmp.lt.s32.totalorder %s434, 3
        %s436 = scalar_select %p435, %s434, 3
        %s437 = smul.addr %s436, 54
        %s438 = smul.addr %s437, 4
        %s439 = scalar_lea.vmem %s0, %s438
        %s440 = smul.u32 2, %s22
      $region72: #{_simsiam_forward.1} parent=67 // pred_fallthru
        _
    $region68: #{_simsiam_forward.1} parent=5 // pred_fallthru
      _
    %p441 = scmp.le.s32.totalorder 1, %s22
    %p442 = scmp.lt.s32.totalorder %s22, 3
    %p443 = pnand %p441, %p442
    %p444 = pneg %p443
    // Predicated region
    $region73: #{_simsiam_forward.1} parent=5 // pred_check
      _
    $region74: #{_simsiam_forward.1} parent=5 // pred_check_branch
      %446 = sbr.rel (%p443) target = $region76
    $region75: #{_simsiam_forward.1} parent=5 // pred_region
      %s447 = ssub.s32 %s22, 1
      %s448 = smul.u32 2, %s27
      %p449 = scmp.lt.s32.totalorder %s448, 3
      %s450 = scalar_select %p449, %s448, 3
      %s451 = smul.addr %s450, 54
      %s452 = smul.addr %s451, 4
      %s453 = scalar_lea.vmem %s0, %s452
      %p454 = pneg %p48
      %p455 = pneg %p45
      %p456 = pneg %p69
      %p457 = pneg %p66
      %p458 = pneg %p90
      %p459 = pneg %p87
      %p460 = pneg %p111
      %p461 = pneg %p108
      %p462 = pneg %p132
      %p463 = pneg %p129
      %p464 = pneg %p153
      %p465 = pneg %p150
      %p466 = pneg %p174
      %p467 = pneg %p171
      %p468 = pneg %p195
      %p469 = pneg %p192
      %p470 = pneg %p216
      %p471 = pneg %p213
      %p472 = pneg %p237
      %p473 = pneg %p234
      %p474 = pneg %p258
      %p475 = pneg %p255
      %p476 = pneg %p279
      %p477 = pneg %p276
      %p478 = pneg %p300
      %p479 = pneg %p297
      %p480 = pneg %p321
      %p481 = pneg %p318
      %p482 = pneg %p347
      %p483 = pneg %p344
      %p484 = scmp.lt.s32.totalorder %s27, 1
      %s485 = scalar_select %p484, %s27, 1
      %s486 = smul.addr %s485, 2
      %s487 = scalar_lea.vmem %s14, %s486
      %p488 = pneg %p373
      %p489 = pneg %p370
      %p490 = scmp.lt.s32.totalorder %s27, 1
      %s491 = scalar_select %p490, %s27, 1
      %s492 = smul.addr %s491, 2
      %s493 = scalar_lea.vmem %s15, %s492
      %s494 = smul.u32 2, %s27
      %p495 = scmp.lt.s32.totalorder %s494, 3
      %s496 = scalar_select %p495, %s494, 3
      %s497 = smul.addr %s496, 54
      %s498 = smul.addr %s497, 4
      %s499 = scalar_lea.vmem %s0, %s498
      %s500 = smul.u32 2, %s27
      %p501 = scmp.lt.s32.totalorder %s27, 1
      %s502 = scalar_select %p501, %s27, 1
      %s503 = smul.addr %s502, 2
      %s504 = scalar_lea.vmem %s14, %s503
      %p505 = scmp.lt.s32.totalorder %s27, 1
      %s506 = scalar_select %p505, %s27, 1
      %s507 = smul.addr %s506, 2
      %s508 = scalar_lea.vmem %s15, %s507
      %v510 = vld [vmem:[%s499] sm:$0xf]
      %v511 = vld [vmem:[%s499 + $0x4] sm:$0xf]
      %v512 = vld [vmem:[%s499 + $0x8] sm:$0x1]
      %v513 = vld [vmem:[%s499 + $0xc] sm:$0xf]
      %v514 = vld [vmem:[%s499 + $0x10] sm:$0xf]
      %v515 = vld [vmem:[%s499 + $0x14] sm:$0x1]
      %v516 = vld [vmem:[%s499 + $0x18] sm:$0xf]
      %v517 = vld [vmem:[%s499 + $0x1c] sm:$0xf]
      %v518 = vld [vmem:[%s499 + $0x20] sm:$0x1]
      %v519 = vld [vmem:[%s499 + $0x24] sm:$0xf]
      %v520 = vld [vmem:[%s499 + $0x28] sm:$0xf]
      %v521 = vld [vmem:[%s499 + $0x2c] sm:$0x1]
      %v522 = vld [vmem:[%s499 + $0x30] sm:$0xf]
      %v523 = vld [vmem:[%s499 + $0x34] sm:$0xf]
      %v524 = vld [vmem:[%s499 + $0x38] sm:$0x1]
      %v525 = vld [vmem:[%s499 + $0x3c] sm:$0xf]
      %v526 = vld [vmem:[%s499 + $0x40] sm:$0xf]
      %v527 = vld [vmem:[%s499 + $0x44] sm:$0x1]
      %v528 = vld [vmem:[%s499 + $0x48] sm:$0xf]
      %v529 = vld [vmem:[%s499 + $0x4c] sm:$0xf]
      %v530 = vld [vmem:[%s499 + $0x50] sm:$0x1]
      %v531 = vld [vmem:[%s499 + $0x54] sm:$0xf]
      %v532 = vld [vmem:[%s499 + $0x58] sm:$0xf]
      %v533 = vld [vmem:[%s499 + $0x5c] sm:$0x1]
      %v534 = vld [vmem:[%s499 + $0x60] sm:$0xf]
      %v535 = vld [vmem:[%s499 + $0x64] sm:$0xf]
      %v536 = vld [vmem:[%s499 + $0x68] sm:$0x1]
      %v537 = vld [vmem:[%s499 + $0x6c] sm:$0xf]
      %v538 = vld [vmem:[%s499 + $0x70] sm:$0xf]
      %v539 = vld [vmem:[%s499 + $0x74] sm:$0x1]
      %v540 = vld [vmem:[%s499 + $0x78] sm:$0xf]
      %v541 = vld [vmem:[%s499 + $0x7c] sm:$0xf]
      %v542 = vld [vmem:[%s499 + $0x80] sm:$0x1]
      %v543 = vld [vmem:[%s499 + $0x84] sm:$0xf]
      %v544 = vld [vmem:[%s499 + $0x88] sm:$0xf]
      %v545 = vld [vmem:[%s499 + $0x8c] sm:$0x1]
      %v546 = vld [vmem:[%s499 + $0x90] sm:$0xf]
      %v547 = vld [vmem:[%s499 + $0x94] sm:$0xf]
      %v548 = vld [vmem:[%s499 + $0x98] sm:$0x1]
      %v549 = vld [vmem:[%s499 + $0x9c] sm:$0xf]
      %v550 = vld [vmem:[%s499 + $0xa0] sm:$0xf]
      %v551 = vld [vmem:[%s499 + $0xa4] sm:$0x1]
      %v552 = vld [vmem:[%s499 + $0xa8] sm:$0xf]
      %v553 = vld [vmem:[%s499 + $0xac] sm:$0xf]
      %v554 = vld [vmem:[%s499 + $0xb0] sm:$0x1]
      %v555 = vld [vmem:[%s499 + $0xb4] sm:$0xf]
      %v556 = vld [vmem:[%s499 + $0xb8] sm:$0xf]
      %v557 = vld [vmem:[%s499 + $0xbc] sm:$0x1]
      %v558 = vld [vmem:[%s499 + $0xc0] sm:$0xf]
      %v559 = vld [vmem:[%s499 + $0xc4] sm:$0xf]
      %v560 = vld [vmem:[%s499 + $0xc8] sm:$0x1]
      %v561 = vld [vmem:[%s499 + $0xcc] sm:$0xf]
      %v562 = vld [vmem:[%s499 + $0xd0] sm:$0xf]
      %v563 = vld [vmem:[%s499 + $0xd4] sm:$0x1]
      %v564 = vld [vmem:[%s499 + $0xd8] sm:$0xf]
      %v565 = vld [vmem:[%s499 + $0xdc] sm:$0xf]
      %v566 = vld [vmem:[%s499 + $0xe0] sm:$0x1]
      %v567 = vld [vmem:[%s499 + $0xe4] sm:$0xf]
      %v568 = vld [vmem:[%s499 + $0xe8] sm:$0xf]
      %v569 = vld [vmem:[%s499 + $0xec] sm:$0x1]
      %v570 = vld [vmem:[%s499 + $0xf0] sm:$0xf]
      %v571 = vld [vmem:[%s499 + $0xf4] sm:$0xf]
      %v572 = vld [vmem:[%s499 + $0xf8] sm:$0x1]
      %v573 = vld [vmem:[%s499 + $0xfc] sm:$0xf]
      %v574 = vld [vmem:[%s499 + $0x100] sm:$0xf]
      %v575 = vld [vmem:[%s499 + $0x104] sm:$0x1]
      %v576 = vld [vmem:[%s499 + $0x108] sm:$0xf]
      %v577 = vld [vmem:[%s499 + $0x10c] sm:$0xf]
      %v578 = vld [vmem:[%s499 + $0x110] sm:$0x1]
      %v579 = vld [vmem:[%s499 + $0x114] sm:$0xf]
      %v580 = vld [vmem:[%s499 + $0x118] sm:$0xf]
      %v581 = vld [vmem:[%s499 + $0x11c] sm:$0x1]
      %v582 = vld [vmem:[%s499 + $0x120] sm:$0xf]
      %v583 = vld [vmem:[%s499 + $0x124] sm:$0xf]
      %v584 = vld [vmem:[%s499 + $0x128] sm:$0x1]
      %v585 = vld [vmem:[%s499 + $0x12c] sm:$0xf]
      %v586 = vld [vmem:[%s499 + $0x130] sm:$0xf]
      %v587 = vld [vmem:[%s499 + $0x134] sm:$0x1]
      %v588 = vld [vmem:[%s499 + $0x138] sm:$0xf]
      %v589 = vld [vmem:[%s499 + $0x13c] sm:$0xf]
      %v590 = vld [vmem:[%s499 + $0x140] sm:$0x1]
      %v591 = vld [vmem:[%s499 + $0x144] sm:$0xf]
      %v592 = vld [vmem:[%s499 + $0x148] sm:$0xf]
      %v593 = vld [vmem:[%s499 + $0x14c] sm:$0x1]
      %v594 = vld [vmem:[%s499 + $0x150] sm:$0xf]
      %v595 = vld [vmem:[%s499 + $0x154] sm:$0xf]
      %v596 = vld [vmem:[%s499 + $0x158] sm:$0x1]
      %v597 = vld [vmem:[%s499 + $0x15c] sm:$0xf]
      %v598 = vld [vmem:[%s499 + $0x160] sm:$0xf]
      %v599 = vld [vmem:[%s499 + $0x164] sm:$0x1]
      %v600 = vld [vmem:[%s499 + $0x168] sm:$0xf]
      %v601 = vld [vmem:[%s499 + $0x16c] sm:$0xf]
      %v602 = vld [vmem:[%s499 + $0x170] sm:$0x1]
      %v603 = vld [vmem:[%s499 + $0x174] sm:$0xf]
      %v604 = vld [vmem:[%s499 + $0x178] sm:$0xf]
      %v605 = vld [vmem:[%s499 + $0x17c] sm:$0x1]
      %v606 = vld [vmem:[%s499 + $0x180] sm:$0xf]
      %v607 = vld [vmem:[%s499 + $0x184] sm:$0xf]
      %v608 = vld [vmem:[%s499 + $0x188] sm:$0x1]
      %v609 = vld [vmem:[%s499 + $0x18c] sm:$0xf]
      %v610 = vld [vmem:[%s499 + $0x190] sm:$0xf]
      %v611 = vld [vmem:[%s499 + $0x194] sm:$0x1]
      %v612 = vld [vmem:[%s499 + $0x198] sm:$0xf]
      %v613 = vld [vmem:[%s499 + $0x19c] sm:$0xf]
      %v614 = vld [vmem:[%s499 + $0x1a0] sm:$0x1]
      %v615 = vld [vmem:[%s499 + $0x1a4] sm:$0xf]
      %v616 = vld [vmem:[%s499 + $0x1a8] sm:$0xf]
      %v617 = vld [vmem:[%s499 + $0x1ac] sm:$0x1]
      %v618 = vld [vmem:[%s1] sm:$0x3]
      %vm619 = vsmask.f32 3328
      %vm620 = vsmask.f32 7440
      %vm621 = vmor %vm619, %vm620
      %v623 = vshrl.u32 %v510, 16
      %v625 = vrot.slane %v623, 4
      %v626 = vshll.u32 %v510, 16
      %v628 = vrot.slane %v626, 5
      %v629 = vor.u32 %v625, %v628
      %v630 = vrot.slane %v629, 4
      %v632 = vshll.u32 %v511, 16
      %v634 = vrot.slane %v632, 5
      %v635 = vsel %vm621, %v630, %v634
      %v636 = vshrl.u32 %v511, 16
      %v638 = vrot.slane %v636, 4
      %v639 = vor.u32 %v638, %v634
      %v640 = vrot.slane %v639, 4
      %v642 = vshll.u32 %v512, 16
      %v644 = vrot.slane %v642, 5
      %v645 = vsel %vm621, %v640, %v644
      %v647 = vshrl.u32 %v513, 16
      %v649 = vrot.slane %v647, 4
      %v650 = vshll.u32 %v513, 16
      %v652 = vrot.slane %v650, 5
      %v653 = vor.u32 %v649, %v652
      %v654 = vrot.slane %v653, 4
      %v656 = vshll.u32 %v514, 16
      %v658 = vrot.slane %v656, 5
      %v659 = vsel %vm621, %v654, %v658
      %v660 = vshrl.u32 %v514, 16
      %v662 = vrot.slane %v660, 4
      %v663 = vor.u32 %v662, %v658
      %v664 = vrot.slane %v663, 4
      %v666 = vshll.u32 %v515, 16
      %v668 = vrot.slane %v666, 5
      %v669 = vsel %vm621, %v664, %v668
      %v671 = vshrl.u32 %v516, 16
      %v673 = vrot.slane %v671, 4
      %v674 = vshll.u32 %v516, 16
      %v676 = vrot.slane %v674, 5
      %v677 = vor.u32 %v673, %v676
      %v678 = vrot.slane %v677, 4
      %v680 = vshll.u32 %v517, 16
      %v682 = vrot.slane %v680, 5
      %v683 = vsel %vm621, %v678, %v682
      %v684 = vshrl.u32 %v517, 16
      %v686 = vrot.slane %v684, 4
      %v687 = vor.u32 %v686, %v682
      %v688 = vrot.slane %v687, 4
      %v690 = vshll.u32 %v518, 16
      %v692 = vrot.slane %v690, 5
      %v693 = vsel %vm621, %v688, %v692
      %v695 = vshrl.u32 %v519, 16
      %v697 = vrot.slane %v695, 4
      %v698 = vshll.u32 %v519, 16
      %v700 = vrot.slane %v698, 5
      %v701 = vor.u32 %v697, %v700
      %v702 = vrot.slane %v701, 4
      %v704 = vshll.u32 %v520, 16
      %v706 = vrot.slane %v704, 5
      %v707 = vsel %vm621, %v702, %v706
      %v708 = vshrl.u32 %v520, 16
      %v710 = vrot.slane %v708, 4
      %v711 = vor.u32 %v710, %v706
      %v712 = vrot.slane %v711, 4
      %v714 = vshll.u32 %v521, 16
      %v716 = vrot.slane %v714, 5
      %v717 = vsel %vm621, %v712, %v716
      %v719 = vshrl.u32 %v522, 16
      %v721 = vrot.slane %v719, 4
      %v722 = vshll.u32 %v522, 16
      %v724 = vrot.slane %v722, 5
      %v725 = vor.u32 %v721, %v724
      %v726 = vrot.slane %v725, 4
      %v728 = vshll.u32 %v523, 16
      %v730 = vrot.slane %v728, 5
      %v731 = vsel %vm621, %v726, %v730
      %v732 = vshrl.u32 %v523, 16
      %v734 = vrot.slane %v732, 4
      %v735 = vor.u32 %v734, %v730
      %v736 = vrot.slane %v735, 4
      %v738 = vshll.u32 %v524, 16
      %v740 = vrot.slane %v738, 5
      %v741 = vsel %vm621, %v736, %v740
      %v743 = vshrl.u32 %v525, 16
      %v745 = vrot.slane %v743, 4
      %v746 = vshll.u32 %v525, 16
      %v748 = vrot.slane %v746, 5
      %v749 = vor.u32 %v745, %v748
      %v750 = vrot.slane %v749, 4
      %v752 = vshll.u32 %v526, 16
      %v754 = vrot.slane %v752, 5
      %v755 = vsel %vm621, %v750, %v754
      %v756 = vshrl.u32 %v526, 16
      %v758 = vrot.slane %v756, 4
      %v759 = vor.u32 %v758, %v754
      %v760 = vrot.slane %v759, 4
      %v762 = vshll.u32 %v527, 16
      %v764 = vrot.slane %v762, 5
      %v765 = vsel %vm621, %v760, %v764
      %v767 = vshrl.u32 %v528, 16
      %v769 = vrot.slane %v767, 4
      %v770 = vshll.u32 %v528, 16
      %v772 = vrot.slane %v770, 5
      %v773 = vor.u32 %v769, %v772
      %v774 = vrot.slane %v773, 4
      %v776 = vshll.u32 %v529, 16
      %v778 = vrot.slane %v776, 5
      %v779 = vsel %vm621, %v774, %v778
      %v780 = vshrl.u32 %v529, 16
      %v782 = vrot.slane %v780, 4
      %v783 = vor.u32 %v782, %v778
      %v784 = vrot.slane %v783, 4
      %v786 = vshll.u32 %v530, 16
      %v788 = vrot.slane %v786, 5
      %v789 = vsel %vm621, %v784, %v788
      %v791 = vshrl.u32 %v531, 16
      %v793 = vrot.slane %v791, 4
      %v794 = vshll.u32 %v531, 16
      %v796 = vrot.slane %v794, 5
      %v797 = vor.u32 %v793, %v796
      %v798 = vrot.slane %v797, 4
      %v800 = vshll.u32 %v532, 16
      %v802 = vrot.slane %v800, 5
      %v803 = vsel %vm621, %v798, %v802
      %v804 = vshrl.u32 %v532, 16
      %v806 = vrot.slane %v804, 4
      %v807 = vor.u32 %v806, %v802
      %v808 = vrot.slane %v807, 4
      %v810 = vshll.u32 %v533, 16
      %v812 = vrot.slane %v810, 5
      %v813 = vsel %vm621, %v808, %v812
      %v815 = vshrl.u32 %v534, 16
      %v817 = vrot.slane %v815, 4
      %v818 = vshll.u32 %v534, 16
      %v820 = vrot.slane %v818, 5
      %v821 = vor.u32 %v817, %v820
      %v822 = vrot.slane %v821, 4
      %v824 = vshll.u32 %v535, 16
      %v826 = vrot.slane %v824, 5
      %v827 = vsel %vm621, %v822, %v826
      %v828 = vshrl.u32 %v535, 16
      %v830 = vrot.slane %v828, 4
      %v831 = vor.u32 %v830, %v826
      %v832 = vrot.slane %v831, 4
      %v834 = vshll.u32 %v536, 16
      %v836 = vrot.slane %v834, 5
      %v837 = vsel %vm621, %v832, %v836
      %v839 = vshrl.u32 %v537, 16
      %v841 = vrot.slane %v839, 4
      %v842 = vshll.u32 %v537, 16
      %v844 = vrot.slane %v842, 5
      %v845 = vor.u32 %v841, %v844
      %v846 = vrot.slane %v845, 4
      %v848 = vshll.u32 %v538, 16
      %v850 = vrot.slane %v848, 5
      %v851 = vsel %vm621, %v846, %v850
      %v852 = vshrl.u32 %v538, 16
      %v854 = vrot.slane %v852, 4
      %v855 = vor.u32 %v854, %v850
      %v856 = vrot.slane %v855, 4
      %v858 = vshll.u32 %v539, 16
      %v860 = vrot.slane %v858, 5
      %v861 = vsel %vm621, %v856, %v860
      %v863 = vshrl.u32 %v540, 16
      %v865 = vrot.slane %v863, 4
      %v866 = vshll.u32 %v540, 16
      %v868 = vrot.slane %v866, 5
      %v869 = vor.u32 %v865, %v868
      %v870 = vrot.slane %v869, 4
      %v872 = vshll.u32 %v541, 16
      %v874 = vrot.slane %v872, 5
      %v875 = vsel %vm621, %v870, %v874
      %v876 = vshrl.u32 %v541, 16
      %v878 = vrot.slane %v876, 4
      %v879 = vor.u32 %v878, %v874
      %v880 = vrot.slane %v879, 4
      %v882 = vshll.u32 %v542, 16
      %v884 = vrot.slane %v882, 5
      %v885 = vsel %vm621, %v880, %v884
      %v887 = vshrl.u32 %v543, 16
      %v889 = vrot.slane %v887, 4
      %v890 = vshll.u32 %v543, 16
      %v892 = vrot.slane %v890, 5
      %v893 = vor.u32 %v889, %v892
      %v894 = vrot.slane %v893, 4
      %v896 = vshll.u32 %v544, 16
      %v898 = vrot.slane %v896, 5
      %v899 = vsel %vm621, %v894, %v898
      %v900 = vshrl.u32 %v544, 16
      %v902 = vrot.slane %v900, 4
      %v903 = vor.u32 %v902, %v898
      %v904 = vrot.slane %v903, 4
      %v906 = vshll.u32 %v545, 16
      %v908 = vrot.slane %v906, 5
      %v909 = vsel %vm621, %v904, %v908
      %v911 = vshrl.u32 %v546, 16
      %v913 = vrot.slane %v911, 4
      %v914 = vshll.u32 %v546, 16
      %v916 = vrot.slane %v914, 5
      %v917 = vor.u32 %v913, %v916
      %v918 = vrot.slane %v917, 4
      %v920 = vshll.u32 %v547, 16
      %v922 = vrot.slane %v920, 5
      %v923 = vsel %vm621, %v918, %v922
      %v924 = vshrl.u32 %v547, 16
      %v926 = vrot.slane %v924, 4
      %v927 = vor.u32 %v926, %v922
      %v928 = vrot.slane %v927, 4
      %v930 = vshll.u32 %v548, 16
      %v932 = vrot.slane %v930, 5
      %v933 = vsel %vm621, %v928, %v932
      %v935 = vshrl.u32 %v549, 16
      %v937 = vrot.slane %v935, 4
      %v938 = vshll.u32 %v549, 16
      %v940 = vrot.slane %v938, 5
      %v941 = vor.u32 %v937, %v940
      %v942 = vrot.slane %v941, 4
      %v944 = vshll.u32 %v550, 16
      %v946 = vrot.slane %v944, 5
      %v947 = vsel %vm621, %v942, %v946
      %v948 = vshrl.u32 %v550, 16
      %v950 = vrot.slane %v948, 4
      %v951 = vor.u32 %v950, %v946
      %v952 = vrot.slane %v951, 4
      %v954 = vshll.u32 %v551, 16
      %v956 = vrot.slane %v954, 5
      %v957 = vsel %vm621, %v952, %v956
      %v959 = vshrl.u32 %v552, 16
      %v961 = vrot.slane %v959, 4
      %v962 = vshll.u32 %v552, 16
      %v964 = vrot.slane %v962, 5
      %v965 = vor.u32 %v961, %v964
      %v966 = vrot.slane %v965, 4
      %v968 = vshll.u32 %v553, 16
      %v970 = vrot.slane %v968, 5
      %v971 = vsel %vm621, %v966, %v970
      %v972 = vshrl.u32 %v553, 16
      %v974 = vrot.slane %v972, 4
      %v975 = vor.u32 %v974, %v970
      %v976 = vrot.slane %v975, 4
      %v978 = vshll.u32 %v554, 16
      %v980 = vrot.slane %v978, 5
      %v981 = vsel %vm621, %v976, %v980
      %v983 = vshrl.u32 %v555, 16
      %v985 = vrot.slane %v983, 4
      %v986 = vshll.u32 %v555, 16
      %v988 = vrot.slane %v986, 5
      %v989 = vor.u32 %v985, %v988
      %v990 = vrot.slane %v989, 4
      %v992 = vshll.u32 %v556, 16
      %v994 = vrot.slane %v992, 5
      %v995 = vsel %vm621, %v990, %v994
      %v996 = vshrl.u32 %v556, 16
      %v998 = vrot.slane %v996, 4
      %v999 = vor.u32 %v998, %v994
      %v1000 = vrot.slane %v999, 4
      %v1002 = vshll.u32 %v557, 16
      %v1004 = vrot.slane %v1002, 5
      %v1005 = vsel %vm621, %v1000, %v1004
      %v1007 = vshrl.u32 %v564, 16
      %v1009 = vrot.slane %v1007, 4
      %v1010 = vshll.u32 %v564, 16
      %v1012 = vrot.slane %v1010, 5
      %v1013 = vor.u32 %v1009, %v1012
      %v1014 = vrot.slane %v1013, 4
      %v1016 = vshll.u32 %v565, 16
      %v1018 = vrot.slane %v1016, 5
      %v1019 = vsel %vm621, %v1014, %v1018
      %v1020 = vshrl.u32 %v565, 16
      %v1022 = vrot.slane %v1020, 4
      %v1023 = vor.u32 %v1022, %v1018
      %v1024 = vrot.slane %v1023, 4
      %v1026 = vshll.u32 %v566, 16
      %v1028 = vrot.slane %v1026, 5
      %v1029 = vsel %vm621, %v1024, %v1028
      %v1031 = vshrl.u32 %v567, 16
      %v1033 = vrot.slane %v1031, 4
      %v1034 = vshll.u32 %v567, 16
      %v1036 = vrot.slane %v1034, 5
      %v1037 = vor.u32 %v1033, %v1036
      %v1038 = vrot.slane %v1037, 4
      %v1040 = vshll.u32 %v568, 16
      %v1042 = vrot.slane %v1040, 5
      %v1043 = vsel %vm621, %v1038, %v1042
      %v1044 = vshrl.u32 %v568, 16
      %v1046 = vrot.slane %v1044, 4
      %v1047 = vor.u32 %v1046, %v1042
      %v1048 = vrot.slane %v1047, 4
      %v1050 = vshll.u32 %v569, 16
      %v1052 = vrot.slane %v1050, 5
      %v1053 = vsel %vm621, %v1048, %v1052
      %v1055 = vshrl.u32 %v570, 16
      %v1057 = vrot.slane %v1055, 4
      %v1058 = vshll.u32 %v570, 16
      %v1060 = vrot.slane %v1058, 5
      %v1061 = vor.u32 %v1057, %v1060
      %v1062 = vrot.slane %v1061, 4
      %v1064 = vshll.u32 %v571, 16
      %v1066 = vrot.slane %v1064, 5
      %v1067 = vsel %vm621, %v1062, %v1066
      %v1068 = vshrl.u32 %v571, 16
      %v1070 = vrot.slane %v1068, 4
      %v1071 = vor.u32 %v1070, %v1066
      %v1072 = vrot.slane %v1071, 4
      %v1074 = vshll.u32 %v572, 16
      %v1076 = vrot.slane %v1074, 5
      %v1077 = vsel %vm621, %v1072, %v1076
      %v1079 = vshrl.u32 %v573, 16
      %v1081 = vrot.slane %v1079, 4
      %v1082 = vshll.u32 %v573, 16
      %v1084 = vrot.slane %v1082, 5
      %v1085 = vor.u32 %v1081, %v1084
      %v1086 = vrot.slane %v1085, 4
      %v1088 = vshll.u32 %v574, 16
      %v1090 = vrot.slane %v1088, 5
      %v1091 = vsel %vm621, %v1086, %v1090
      %v1092 = vshrl.u32 %v574, 16
      %v1094 = vrot.slane %v1092, 4
      %v1095 = vor.u32 %v1094, %v1090
      %v1096 = vrot.slane %v1095, 4
      %v1098 = vshll.u32 %v575, 16
      %v1100 = vrot.slane %v1098, 5
      %v1101 = vsel %vm621, %v1096, %v1100
      %v1103 = vshrl.u32 %v576, 16
      %v1105 = vrot.slane %v1103, 4
      %v1106 = vshll.u32 %v576, 16
      %v1108 = vrot.slane %v1106, 5
      %v1109 = vor.u32 %v1105, %v1108
      %v1110 = vrot.slane %v1109, 4
      %v1112 = vshll.u32 %v577, 16
      %v1114 = vrot.slane %v1112, 5
      %v1115 = vsel %vm621, %v1110, %v1114
      %v1116 = vshrl.u32 %v577, 16
      %v1118 = vrot.slane %v1116, 4
      %v1119 = vor.u32 %v1118, %v1114
      %v1120 = vrot.slane %v1119, 4
      %v1122 = vshll.u32 %v578, 16
      %v1124 = vrot.slane %v1122, 5
      %v1125 = vsel %vm621, %v1120, %v1124
      %v1127 = vshrl.u32 %v579, 16
      %v1129 = vrot.slane %v1127, 4
      %v1130 = vshll.u32 %v579, 16
      %v1132 = vrot.slane %v1130, 5
      %v1133 = vor.u32 %v1129, %v1132
      %v1134 = vrot.slane %v1133, 4
      %v1136 = vshll.u32 %v580, 16
      %v1138 = vrot.slane %v1136, 5
      %v1139 = vsel %vm621, %v1134, %v1138
      %v1140 = vshrl.u32 %v580, 16
      %v1142 = vrot.slane %v1140, 4
      %v1143 = vor.u32 %v1142, %v1138
      %v1144 = vrot.slane %v1143, 4
      %v1146 = vshll.u32 %v581, 16
      %v1148 = vrot.slane %v1146, 5
      %v1149 = vsel %vm621, %v1144, %v1148
      %v1151 = vshrl.u32 %v582, 16
      %v1153 = vrot.slane %v1151, 4
      %v1154 = vshll.u32 %v582, 16
      %v1156 = vrot.slane %v1154, 5
      %v1157 = vor.u32 %v1153, %v1156
      %v1158 = vrot.slane %v1157, 4
      %v1160 = vshll.u32 %v583, 16
      %v1162 = vrot.slane %v1160, 5
      %v1163 = vsel %vm621, %v1158, %v1162
      %v1164 = vshrl.u32 %v583, 16
      %v1166 = vrot.slane %v1164, 4
      %v1167 = vor.u32 %v1166, %v1162
      %v1168 = vrot.slane %v1167, 4
      %v1170 = vshll.u32 %v584, 16
      %v1172 = vrot.slane %v1170, 5
      %v1173 = vsel %vm621, %v1168, %v1172
      %v1175 = vshrl.u32 %v585, 16
      %v1177 = vrot.slane %v1175, 4
      %v1178 = vshll.u32 %v585, 16
      %v1180 = vrot.slane %v1178, 5
      %v1181 = vor.u32 %v1177, %v1180
      %v1182 = vrot.slane %v1181, 4
      %v1184 = vshll.u32 %v586, 16
      %v1186 = vrot.slane %v1184, 5
      %v1187 = vsel %vm621, %v1182, %v1186
      %v1188 = vshrl.u32 %v586, 16
      %v1190 = vrot.slane %v1188, 4
      %v1191 = vor.u32 %v1190, %v1186
      %v1192 = vrot.slane %v1191, 4
      %v1194 = vshll.u32 %v587, 16
      %v1196 = vrot.slane %v1194, 5
      %v1197 = vsel %vm621, %v1192, %v1196
      %v1199 = vshrl.u32 %v588, 16
      %v1201 = vrot.slane %v1199, 4
      %v1202 = vshll.u32 %v588, 16
      %v1204 = vrot.slane %v1202, 5
      %v1205 = vor.u32 %v1201, %v1204
      %v1206 = vrot.slane %v1205, 4
      %v1208 = vshll.u32 %v589, 16
      %v1210 = vrot.slane %v1208, 5
      %v1211 = vsel %vm621, %v1206, %v1210
      %v1212 = vshrl.u32 %v589, 16
      %v1214 = vrot.slane %v1212, 4
      %v1215 = vor.u32 %v1214, %v1210
      %v1216 = vrot.slane %v1215, 4
      %v1218 = vshll.u32 %v590, 16
      %v1220 = vrot.slane %v1218, 5
      %v1221 = vsel %vm621, %v1216, %v1220
      %v1223 = vshrl.u32 %v591, 16
      %v1225 = vrot.slane %v1223, 4
      %v1226 = vshll.u32 %v591, 16
      %v1228 = vrot.slane %v1226, 5
      %v1229 = vor.u32 %v1225, %v1228
      %v1230 = vrot.slane %v1229, 4
      %v1232 = vshll.u32 %v592, 16
      %v1234 = vrot.slane %v1232, 5
      %v1235 = vsel %vm621, %v1230, %v1234
      %v1236 = vshrl.u32 %v592, 16
      %v1238 = vrot.slane %v1236, 4
      %v1239 = vor.u32 %v1238, %v1234
      %v1240 = vrot.slane %v1239, 4
      %v1242 = vshll.u32 %v593, 16
      %v1244 = vrot.slane %v1242, 5
      %v1245 = vsel %vm621, %v1240, %v1244
      %v1247 = vshrl.u32 %v594, 16
      %v1249 = vrot.slane %v1247, 4
      %v1250 = vshll.u32 %v594, 16
      %v1252 = vrot.slane %v1250, 5
      %v1253 = vor.u32 %v1249, %v1252
      %v1254 = vrot.slane %v1253, 4
      %v1256 = vshll.u32 %v595, 16
      %v1258 = vrot.slane %v1256, 5
      %v1259 = vsel %vm621, %v1254, %v1258
      %v1260 = vshrl.u32 %v595, 16
      %v1262 = vrot.slane %v1260, 4
      %v1263 = vor.u32 %v1262, %v1258
      %v1264 = vrot.slane %v1263, 4
      %v1266 = vshll.u32 %v596, 16
      %v1268 = vrot.slane %v1266, 5
      %v1269 = vsel %vm621, %v1264, %v1268
      %v1271 = vshrl.u32 %v597, 16
      %v1273 = vrot.slane %v1271, 4
      %v1274 = vshll.u32 %v597, 16
      %v1276 = vrot.slane %v1274, 5
      %v1277 = vor.u32 %v1273, %v1276
      %v1278 = vrot.slane %v1277, 4
      %v1280 = vshll.u32 %v598, 16
      %v1282 = vrot.slane %v1280, 5
      %v1283 = vsel %vm621, %v1278, %v1282
      %v1284 = vshrl.u32 %v598, 16
      %v1286 = vrot.slane %v1284, 4
      %v1287 = vor.u32 %v1286, %v1282
      %v1288 = vrot.slane %v1287, 4
      %v1290 = vshll.u32 %v599, 16
      %v1292 = vrot.slane %v1290, 5
      %v1293 = vsel %vm621, %v1288, %v1292
      %v1295 = vshrl.u32 %v600, 16
      %v1297 = vrot.slane %v1295, 4
      %v1298 = vshll.u32 %v600, 16
      %v1300 = vrot.slane %v1298, 5
      %v1301 = vor.u32 %v1297, %v1300
      %v1302 = vrot.slane %v1301, 4
      %v1304 = vshll.u32 %v601, 16
      %v1306 = vrot.slane %v1304, 5
      %v1307 = vsel %vm621, %v1302, %v1306
      %v1308 = vshrl.u32 %v601, 16
      %v1310 = vrot.slane %v1308, 4
      %v1311 = vor.u32 %v1310, %v1306
      %v1312 = vrot.slane %v1311, 4
      %v1314 = vshll.u32 %v602, 16
      %v1316 = vrot.slane %v1314, 5
      %v1317 = vsel %vm621, %v1312, %v1316
      %v1319 = vshrl.u32 %v603, 16
      %v1321 = vrot.slane %v1319, 4
      %v1322 = vshll.u32 %v603, 16
      %v1324 = vrot.slane %v1322, 5
      %v1325 = vor.u32 %v1321, %v1324
      %v1326 = vrot.slane %v1325, 4
      %v1328 = vshll.u32 %v604, 16
      %v1330 = vrot.slane %v1328, 5
      %v1331 = vsel %vm621, %v1326, %v1330
      %v1332 = vshrl.u32 %v604, 16
      %v1334 = vrot.slane %v1332, 4
      %v1335 = vor.u32 %v1334, %v1330
      %v1336 = vrot.slane %v1335, 4
      %v1338 = vshll.u32 %v605, 16
      %v1340 = vrot.slane %v1338, 5
      %v1341 = vsel %vm621, %v1336, %v1340
      %v1343 = vshrl.u32 %v606, 16
      %v1345 = vrot.slane %v1343, 4
      %v1346 = vshll.u32 %v606, 16
      %v1348 = vrot.slane %v1346, 5
      %v1349 = vor.u32 %v1345, %v1348
      %v1350 = vrot.slane %v1349, 4
      %v1352 = vshll.u32 %v607, 16
      %v1354 = vrot.slane %v1352, 5
      %v1355 = vsel %vm621, %v1350, %v1354
      %v1356 = vshrl.u32 %v607, 16
      %v1358 = vrot.slane %v1356, 4
      %v1359 = vor.u32 %v1358, %v1354
      %v1360 = vrot.slane %v1359, 4
      %v1362 = vshll.u32 %v608, 16
      %v1364 = vrot.slane %v1362, 5
      %v1365 = vsel %vm621, %v1360, %v1364
      %v1367 = vshrl.u32 %v609, 16
      %v1369 = vrot.slane %v1367, 4
      %v1370 = vshll.u32 %v609, 16
      %v1372 = vrot.slane %v1370, 5
      %v1373 = vor.u32 %v1369, %v1372
      %v1374 = vrot.slane %v1373, 4
      %v1376 = vshll.u32 %v610, 16
      %v1378 = vrot.slane %v1376, 5
      %v1379 = vsel %vm621, %v1374, %v1378
      %v1380 = vshrl.u32 %v610, 16
      %v1382 = vrot.slane %v1380, 4
      %v1383 = vor.u32 %v1382, %v1378
      %v1384 = vrot.slane %v1383, 4
      %v1386 = vshll.u32 %v611, 16
      %v1388 = vrot.slane %v1386, 5
      %v1389 = vsel %vm621, %v1384, %v1388
      %v1390 = vld [vmem:[%s1] sm:$0xc]
      %v1391 = vunpack.c.l.b16 %v635
      %v1392 = vunpack.c.l.b16 %v645
      %v1393 = vunpack.c.l.b16 %v659
      %v1394 = vunpack.c.l.b16 %v669
      %v1395 = vunpack.c.l.b16 %v683
      %v1396 = vunpack.c.l.b16 %v693
      %v1397 = vunpack.c.l.b16 %v707
      %v1398 = vunpack.c.l.b16 %v717
      %v1399 = vunpack.c.l.b16 %v731
      %v1400 = vunpack.c.l.b16 %v741
      %v1401 = vunpack.c.l.b16 %v755
      %v1402 = vunpack.c.l.b16 %v765
      %v1403 = vunpack.c.l.b16 %v779
      %v1404 = vunpack.c.l.b16 %v789
      %v1405 = vunpack.c.l.b16 %v803
      %v1406 = vunpack.c.l.b16 %v813
      %v1407 = vunpack.c.l.b16 %v827
      %v1408 = vunpack.c.l.b16 %v837
      %v1409 = vunpack.c.l.b16 %v851
      %v1410 = vunpack.c.l.b16 %v861
      %v1411 = vunpack.c.l.b16 %v875
      %v1412 = vunpack.c.l.b16 %v885
      %v1413 = vunpack.c.l.b16 %v899
      %v1414 = vunpack.c.l.b16 %v909
      %v1415 = vunpack.c.l.b16 %v923
      %v1416 = vunpack.c.l.b16 %v933
      %v1417 = vunpack.c.l.b16 %v947
      %v1418 = vunpack.c.l.b16 %v957
      %v1419 = vunpack.c.l.b16 %v971
      %v1420 = vunpack.c.l.b16 %v981
      %v1421 = vunpack.c.l.b16 %v995
      %v1422 = vunpack.c.l.b16 %v1005
      %v1423 = vunpack.c.l.b16 %v1019
      %v1424 = vunpack.c.l.b16 %v1029
      %v1425 = vunpack.c.l.b16 %v1043
      %v1426 = vunpack.c.l.b16 %v1053
      %v1427 = vunpack.c.l.b16 %v1067
      %v1428 = vunpack.c.l.b16 %v1077
      %v1429 = vunpack.c.l.b16 %v1091
      %v1430 = vunpack.c.l.b16 %v1101
      %v1431 = vunpack.c.l.b16 %v1115
      %v1432 = vunpack.c.l.b16 %v1125
      %v1433 = vunpack.c.l.b16 %v1139
      %v1434 = vunpack.c.l.b16 %v1149
      %v1435 = vunpack.c.l.b16 %v1163
      %v1436 = vunpack.c.l.b16 %v1173
      %v1437 = vunpack.c.l.b16 %v1187
      %v1438 = vunpack.c.l.b16 %v1197
      %v1439 = vunpack.c.l.b16 %v1211
      %v1440 = vunpack.c.l.b16 %v1221
      %v1441 = vunpack.c.l.b16 %v1235
      %v1442 = vunpack.c.l.b16 %v1245
      %v1443 = vunpack.c.l.b16 %v1259
      %v1444 = vunpack.c.l.b16 %v1269
      %v1445 = vunpack.c.l.b16 %v1283
      %v1446 = vunpack.c.l.b16 %v1293
      %v1447 = vunpack.c.l.b16 %v1307
      %v1448 = vunpack.c.l.b16 %v1317
      %v1449 = vunpack.c.l.b16 %v1331
      %v1450 = vunpack.c.l.b16 %v1341
      %v1451 = vunpack.c.l.b16 %v1355
      %v1452 = vunpack.c.l.b16 %v1365
      %v1453 = vunpack.c.l.b16 %v1379
      %v1454 = vunpack.c.l.b16 %v1389
      %v1455 = vpack.c.b16 %v1392, %v1391
      %v1456 = vpack.c.b16 %v1394, %v1393
      %v1457 = vpack.c.b16 %v1396, %v1395
      %v1458 = vpack.c.b16 %v1398, %v1397
      %v1459 = vpack.c.b16 %v1400, %v1399
      %v1460 = vpack.c.b16 %v1402, %v1401
      %v1461 = vpack.c.b16 %v1404, %v1403
      %v1462 = vpack.c.b16 %v1406, %v1405
      %v1463 = vpack.c.b16 %v1408, %v1407
      %v1464 = vpack.c.b16 %v1410, %v1409
      %v1465 = vpack.c.b16 %v1412, %v1411
      %v1466 = vpack.c.b16 %v1414, %v1413
      %v1467 = vpack.c.b16 %v1416, %v1415
      %v1468 = vpack.c.b16 %v1418, %v1417
      %v1469 = vpack.c.b16 %v1420, %v1419
      %v1470 = vpack.c.b16 %v1422, %v1421
      %v1471 = vpack.c.b16 %v1424, %v1423
      %v1472 = vpack.c.b16 %v1426, %v1425
      %v1473 = vpack.c.b16 %v1428, %v1427
      %v1474 = vpack.c.b16 %v1430, %v1429
      %v1475 = vpack.c.b16 %v1432, %v1431
      %v1476 = vpack.c.b16 %v1434, %v1433
      %v1477 = vpack.c.b16 %v1436, %v1435
      %v1478 = vpack.c.b16 %v1438, %v1437
      %v1479 = vpack.c.b16 %v1440, %v1439
      %v1480 = vpack.c.b16 %v1442, %v1441
      %v1481 = vpack.c.b16 %v1444, %v1443
      %v1482 = vpack.c.b16 %v1446, %v1445
      %v1483 = vpack.c.b16 %v1448, %v1447
      %v1484 = vpack.c.b16 %v1450, %v1449
      %v1485 = vpack.c.b16 %v1452, %v1451
      %v1486 = vpack.c.b16 %v1454, %v1453
      %v1488 = vunpack.c.l.b16 %v1390
      %v1489 = vpack.c.b16 %v1488, %v1488
      %v1490 = vrot.slane %v1489, 2
      %vm1491 = vcmask 31744
      %v1493 = vsel %vm1491, %v1455, 0
      %v1496 = vsel %vm1491, %v1456, 0
      %v1499 = vsel %vm1491, %v1457, 0
      %v1502 = vsel %vm1491, %v1458, 0
      %v1505 = vsel %vm1491, %v1459, 0
      %v1508 = vsel %vm1491, %v1460, 0
      %v1511 = vsel %vm1491, %v1461, 0
      %v1514 = vsel %vm1491, %v1462, 0
      %v1517 = vsel %vm1491, %v1463, 0
      %v1520 = vsel %vm1491, %v1464, 0
      %v1523 = vsel %vm1491, %v1465, 0
      %v1526 = vsel %vm1491, %v1466, 0
      %v1529 = vsel %vm1491, %v1467, 0
      %v1532 = vsel %vm1491, %v1468, 0
      %v1535 = vsel %vm1491, %v1469, 0
      %v1538 = vsel %vm1491, %v1470, 0
      %v1541 = vsel %vm1491, %v1471, 0
      %v1544 = vsel %vm1491, %v1472, 0
      %v1547 = vsel %vm1491, %v1473, 0
      %v1550 = vsel %vm1491, %v1474, 0
      %v1553 = vsel %vm1491, %v1475, 0
      %v1556 = vsel %vm1491, %v1476, 0
      %v1559 = vsel %vm1491, %v1477, 0
      %v1562 = vsel %vm1491, %v1478, 0
      %v1565 = vsel %vm1491, %v1479, 0
      %v1568 = vsel %vm1491, %v1480, 0
      %v1571 = vsel %vm1491, %v1481, 0
      %v1574 = vsel %vm1491, %v1482, 0
      %v1577 = vsel %vm1491, %v1483, 0
      %v1580 = vsel %vm1491, %v1484, 0
      %v1583 = vsel %vm1491, %v1485, 0
      %v1586 = vsel %vm1491, %v1486, 0
      %vm1588 = vcmask 1041408
      %v1590 = vsel %vm1588, %v1490, 0
      %1592 = vmatpush.bf16.msra.mxu0 0
      %1593 = vmatpush.bf16.msra.mxu0 0
      %1594 = vmatpush.bf16.msra.mxu0 0
      %1595 = vmatpush.bf16.msra.mxu0 0
      %1596 = vmatpush.bf16.msra.mxu0 0
      %1597 = vmatpush.bf16.msra.mxu0 0
      %1598 = vmatpush.bf16.msra.mxu0 0
      %1599 = vmatpush.bf16.msra.mxu0 %v1590
      %1600 = vmatmul.bf16.gmra.mxu0 %v1493
      %v1601 = vpop.f32.mrf.mxu0
      %v1602 = vadd.f32 0.0, %v1601
      %v1603 = vpop.f32.mrf.mxu0
      %v1604 = vadd.f32 0.0, %v1603
      %1605 = vmatmul.bf16.gmra.mxu0 %v1496
      %v1606 = vpop.f32.mrf.mxu0
      %v1607 = vadd.f32 0.0, %v1606
      %v1608 = vpop.f32.mrf.mxu0
      %v1609 = vadd.f32 0.0, %v1608
      %1610 = vmatmul.bf16.gmra.mxu0 %v1499
      %v1611 = vpop.f32.mrf.mxu0
      %v1612 = vadd.f32 0.0, %v1611
      %v1613 = vpop.f32.mrf.mxu0
      %v1614 = vadd.f32 0.0, %v1613
      %1615 = vmatmul.bf16.gmra.mxu0 %v1502
      %v1616 = vpop.f32.mrf.mxu0
      %v1617 = vadd.f32 0.0, %v1616
      %v1618 = vpop.f32.mrf.mxu0
      %v1619 = vadd.f32 0.0, %v1618
      %1620 = vmatmul.bf16.gmra.mxu0 %v1505
      %v1621 = vpop.f32.mrf.mxu0
      %v1622 = vadd.f32 0.0, %v1621
      %v1623 = vpop.f32.mrf.mxu0
      %v1624 = vadd.f32 0.0, %v1623
      %1625 = vmatmul.bf16.gmra.mxu0 %v1508
      %v1626 = vpop.f32.mrf.mxu0
      %v1627 = vadd.f32 0.0, %v1626
      %v1628 = vpop.f32.mrf.mxu0
      %v1629 = vadd.f32 0.0, %v1628
      %1630 = vmatmul.bf16.gmra.mxu0 %v1511
      %v1631 = vpop.f32.mrf.mxu0
      %v1632 = vadd.f32 0.0, %v1631
      %v1633 = vpop.f32.mrf.mxu0
      %v1634 = vadd.f32 0.0, %v1633
      %1635 = vmatmul.bf16.gmra.mxu0 %v1514
      %v1636 = vpop.f32.mrf.mxu0
      %v1637 = vadd.f32 0.0, %v1636
      %v1638 = vpop.f32.mrf.mxu0
      %v1639 = vadd.f32 0.0, %v1638
      %1640 = vmatmul.bf16.gmra.mxu0 %v1517
      %v1641 = vpop.f32.mrf.mxu0
      %v1642 = vadd.f32 0.0, %v1641
      %v1643 = vpop.f32.mrf.mxu0
      %v1644 = vadd.f32 0.0, %v1643
      %1645 = vmatmul.bf16.gmra.mxu0 %v1520
      %v1646 = vpop.f32.mrf.mxu0
      %v1647 = vadd.f32 0.0, %v1646
      %v1648 = vpop.f32.mrf.mxu0
      %v1649 = vadd.f32 0.0, %v1648
      %1650 = vmatmul.bf16.gmra.mxu0 %v1523
      %v1651 = vpop.f32.mrf.mxu0
      %v1652 = vadd.f32 0.0, %v1651
      %v1653 = vpop.f32.mrf.mxu0
      %v1654 = vadd.f32 0.0, %v1653
      %1655 = vmatmul.bf16.gmra.mxu0 %v1526
      %v1656 = vpop.f32.mrf.mxu0
      %v1657 = vadd.f32 0.0, %v1656
      %v1658 = vpop.f32.mrf.mxu0
      %v1659 = vadd.f32 0.0, %v1658
      %1660 = vmatmul.bf16.gmra.mxu0 %v1529
      %v1661 = vpop.f32.mrf.mxu0
      %v1662 = vadd.f32 0.0, %v1661
      %v1663 = vpop.f32.mrf.mxu0
      %v1664 = vadd.f32 0.0, %v1663
      %1665 = vmatmul.bf16.gmra.mxu0 %v1532
      %v1666 = vpop.f32.mrf.mxu0
      %v1667 = vadd.f32 0.0, %v1666
      %v1668 = vpop.f32.mrf.mxu0
      %v1669 = vadd.f32 0.0, %v1668
      %1670 = vmatmul.bf16.gmra.mxu0 %v1535
      %v1671 = vpop.f32.mrf.mxu0
      %v1672 = vadd.f32 0.0, %v1671
      %v1673 = vpop.f32.mrf.mxu0
      %v1674 = vadd.f32 0.0, %v1673
      %1675 = vmatmul.bf16.gmra.mxu0 %v1538
      %v1676 = vpop.f32.mrf.mxu0
      %v1677 = vadd.f32 0.0, %v1676
      %v1678 = vpop.f32.mrf.mxu0
      %v1679 = vadd.f32 0.0, %v1678
      %1680 = vmatmul.bf16.gmra.mxu0 %v1541
      %v1681 = vpop.f32.mrf.mxu0
      %v1682 = vadd.f32 0.0, %v1681
      %v1683 = vpop.f32.mrf.mxu0
      %v1684 = vadd.f32 0.0, %v1683
      %1685 = vmatmul.bf16.gmra.mxu0 %v1544
      %v1686 = vpop.f32.mrf.mxu0
      %v1687 = vadd.f32 0.0, %v1686
      %v1688 = vpop.f32.mrf.mxu0
      %v1689 = vadd.f32 0.0, %v1688
      %1690 = vmatmul.bf16.gmra.mxu0 %v1547
      %v1691 = vpop.f32.mrf.mxu0
      %v1692 = vadd.f32 0.0, %v1691
      %v1693 = vpop.f32.mrf.mxu0
      %v1694 = vadd.f32 0.0, %v1693
      %1695 = vmatmul.bf16.gmra.mxu0 %v1550
      %v1696 = vpop.f32.mrf.mxu0
      %v1697 = vadd.f32 0.0, %v1696
      %v1698 = vpop.f32.mrf.mxu0
      %v1699 = vadd.f32 0.0, %v1698
      %1700 = vmatmul.bf16.gmra.mxu0 %v1553
      %v1701 = vpop.f32.mrf.mxu0
      %v1702 = vadd.f32 0.0, %v1701
      %v1703 = vpop.f32.mrf.mxu0
      %v1704 = vadd.f32 0.0, %v1703
      %1705 = vmatmul.bf16.gmra.mxu0 %v1556
      %v1706 = vpop.f32.mrf.mxu0
      %v1707 = vadd.f32 0.0, %v1706
      %v1708 = vpop.f32.mrf.mxu0
      %v1709 = vadd.f32 0.0, %v1708
      %1710 = vmatmul.bf16.gmra.mxu0 %v1559
      %v1711 = vpop.f32.mrf.mxu0
      %v1712 = vadd.f32 0.0, %v1711
      %v1713 = vpop.f32.mrf.mxu0
      %v1714 = vadd.f32 0.0, %v1713
      %1715 = vmatmul.bf16.gmra.mxu0 %v1562
      %v1716 = vpop.f32.mrf.mxu0
      %v1717 = vadd.f32 0.0, %v1716
      %v1718 = vpop.f32.mrf.mxu0
      %v1719 = vadd.f32 0.0, %v1718
      %1720 = vmatmul.bf16.gmra.mxu0 %v1565
      %v1721 = vpop.f32.mrf.mxu0
      %v1722 = vadd.f32 0.0, %v1721
      %v1723 = vpop.f32.mrf.mxu0
      %v1724 = vadd.f32 0.0, %v1723
      %1725 = vmatmul.bf16.gmra.mxu0 %v1568
      %v1726 = vpop.f32.mrf.mxu0
      %v1727 = vadd.f32 0.0, %v1726
      %v1728 = vpop.f32.mrf.mxu0
      %v1729 = vadd.f32 0.0, %v1728
      %1730 = vmatmul.bf16.gmra.mxu0 %v1571
      %v1731 = vpop.f32.mrf.mxu0
      %v1732 = vadd.f32 0.0, %v1731
      %v1733 = vpop.f32.mrf.mxu0
      %v1734 = vadd.f32 0.0, %v1733
      %1735 = vmatmul.bf16.gmra.mxu0 %v1574
      %v1736 = vpop.f32.mrf.mxu0
      %v1737 = vadd.f32 0.0, %v1736
      %v1738 = vpop.f32.mrf.mxu0
      %v1739 = vadd.f32 0.0, %v1738
      %1740 = vmatmul.bf16.gmra.mxu0 %v1577
      %v1741 = vpop.f32.mrf.mxu0
      %v1742 = vadd.f32 0.0, %v1741
      %v1743 = vpop.f32.mrf.mxu0
      %v1744 = vadd.f32 0.0, %v1743
      %1745 = vmatmul.bf16.gmra.mxu0 %v1580
      %v1746 = vpop.f32.mrf.mxu0
      %v1747 = vadd.f32 0.0, %v1746
      %v1748 = vpop.f32.mrf.mxu0
      %v1749 = vadd.f32 0.0, %v1748
      %1750 = vmatmul.bf16.gmra.mxu0 %v1583
      %v1751 = vpop.f32.mrf.mxu0
      %v1752 = vadd.f32 0.0, %v1751
      %v1753 = vpop.f32.mrf.mxu0
      %v1754 = vadd.f32 0.0, %v1753
      %1755 = vmatmul.bf16.gmra.mxu0 %v1586
      %v1756 = vpop.f32.mrf.mxu0
      %v1757 = vadd.f32 0.0, %v1756
      %v1758 = vpop.f32.mrf.mxu0
      %v1759 = vadd.f32 0.0, %v1758
      %1760 = vdwg.mxu0
      %v1825 = vunpack.c.l.b16 %v510
      %v1826 = vunpack.c.l.b16 %v511
      %v1827 = vunpack.c.l.b16 %v513
      %v1828 = vunpack.c.l.b16 %v514
      %v1829 = vunpack.c.l.b16 %v516
      %v1830 = vunpack.c.l.b16 %v517
      %v1831 = vunpack.c.l.b16 %v519
      %v1832 = vunpack.c.l.b16 %v520
      %v1833 = vunpack.c.l.b16 %v522
      %v1834 = vunpack.c.l.b16 %v523
      %v1835 = vunpack.c.l.b16 %v525
      %v1836 = vunpack.c.l.b16 %v526
      %v1837 = vunpack.c.l.b16 %v528
      %v1838 = vunpack.c.l.b16 %v529
      %v1839 = vunpack.c.l.b16 %v531
      %v1840 = vunpack.c.l.b16 %v532
      %v1841 = vunpack.c.l.b16 %v534
      %v1842 = vunpack.c.l.b16 %v535
      %v1843 = vunpack.c.l.b16 %v537
      %v1844 = vunpack.c.l.b16 %v538
      %v1845 = vunpack.c.l.b16 %v540
      %v1846 = vunpack.c.l.b16 %v541
      %v1847 = vunpack.c.l.b16 %v543
      %v1848 = vunpack.c.l.b16 %v544
      %v1849 = vunpack.c.l.b16 %v546
      %v1850 = vunpack.c.l.b16 %v547
      %v1851 = vunpack.c.l.b16 %v549
      %v1852 = vunpack.c.l.b16 %v550
      %v1853 = vunpack.c.l.b16 %v552
      %v1854 = vunpack.c.l.b16 %v553
      %v1855 = vunpack.c.l.b16 %v555
      %v1856 = vunpack.c.l.b16 %v556
      %v1857 = vunpack.c.l.b16 %v564
      %v1858 = vunpack.c.l.b16 %v565
      %v1859 = vunpack.c.l.b16 %v567
      %v1860 = vunpack.c.l.b16 %v568
      %v1861 = vunpack.c.l.b16 %v570
      %v1862 = vunpack.c.l.b16 %v571
      %v1863 = vunpack.c.l.b16 %v573
      %v1864 = vunpack.c.l.b16 %v574
      %v1865 = vunpack.c.l.b16 %v576
      %v1866 = vunpack.c.l.b16 %v577
      %v1867 = vunpack.c.l.b16 %v579
      %v1868 = vunpack.c.l.b16 %v580
      %v1869 = vunpack.c.l.b16 %v582
      %v1870 = vunpack.c.l.b16 %v583
      %v1871 = vunpack.c.l.b16 %v585
      %v1872 = vunpack.c.l.b16 %v586
      %v1873 = vunpack.c.l.b16 %v588
      %v1874 = vunpack.c.l.b16 %v589
      %v1875 = vunpack.c.l.b16 %v591
      %v1876 = vunpack.c.l.b16 %v592
      %v1877 = vunpack.c.l.b16 %v594
      %v1878 = vunpack.c.l.b16 %v595
      %v1879 = vunpack.c.l.b16 %v597
      %v1880 = vunpack.c.l.b16 %v598
      %v1881 = vunpack.c.l.b16 %v600
      %v1882 = vunpack.c.l.b16 %v601
      %v1883 = vunpack.c.l.b16 %v603
      %v1884 = vunpack.c.l.b16 %v604
      %v1885 = vunpack.c.l.b16 %v606
      %v1886 = vunpack.c.l.b16 %v607
      %v1887 = vunpack.c.l.b16 %v609
      %v1888 = vunpack.c.l.b16 %v610
      %v1889 = vpack.c.b16 %v1826, %v1825
      %v1890 = vpack.c.b16 %v1828, %v1827
      %v1891 = vpack.c.b16 %v1830, %v1829
      %v1892 = vpack.c.b16 %v1832, %v1831
      %v1893 = vpack.c.b16 %v1834, %v1833
      %v1894 = vpack.c.b16 %v1836, %v1835
      %v1895 = vpack.c.b16 %v1838, %v1837
      %v1896 = vpack.c.b16 %v1840, %v1839
      %v1897 = vpack.c.b16 %v1842, %v1841
      %v1898 = vpack.c.b16 %v1844, %v1843
      %v1899 = vpack.c.b16 %v1846, %v1845
      %v1900 = vpack.c.b16 %v1848, %v1847
      %v1901 = vpack.c.b16 %v1850, %v1849
      %v1902 = vpack.c.b16 %v1852, %v1851
      %v1903 = vpack.c.b16 %v1854, %v1853
      %v1904 = vpack.c.b16 %v1856, %v1855
      %v1905 = vpack.c.b16 %v1858, %v1857
      %v1906 = vpack.c.b16 %v1860, %v1859
      %v1907 = vpack.c.b16 %v1862, %v1861
      %v1908 = vpack.c.b16 %v1864, %v1863
      %v1909 = vpack.c.b16 %v1866, %v1865
      %v1910 = vpack.c.b16 %v1868, %v1867
      %v1911 = vpack.c.b16 %v1870, %v1869
      %v1912 = vpack.c.b16 %v1872, %v1871
      %v1913 = vpack.c.b16 %v1874, %v1873
      %v1914 = vpack.c.b16 %v1876, %v1875
      %v1915 = vpack.c.b16 %v1878, %v1877
      %v1916 = vpack.c.b16 %v1880, %v1879
      %v1917 = vpack.c.b16 %v1882, %v1881
      %v1918 = vpack.c.b16 %v1884, %v1883
      %v1919 = vpack.c.b16 %v1886, %v1885
      %v1920 = vpack.c.b16 %v1888, %v1887
      %v1922 = vsel %vm1491, %v1889, 0
      %v1925 = vsel %vm1491, %v1890, 0
      %v1928 = vsel %vm1491, %v1891, 0
      %v1931 = vsel %vm1491, %v1892, 0
      %v1934 = vsel %vm1491, %v1893, 0
      %v1937 = vsel %vm1491, %v1894, 0
      %v1940 = vsel %vm1491, %v1895, 0
      %v1943 = vsel %vm1491, %v1896, 0
      %v1946 = vsel %vm1491, %v1897, 0
      %v1949 = vsel %vm1491, %v1898, 0
      %v1952 = vsel %vm1491, %v1899, 0
      %v1955 = vsel %vm1491, %v1900, 0
      %v1958 = vsel %vm1491, %v1901, 0
      %v1961 = vsel %vm1491, %v1902, 0
      %v1964 = vsel %vm1491, %v1903, 0
      %v1967 = vsel %vm1491, %v1904, 0
      %v1970 = vsel %vm1491, %v1905, 0
      %v1973 = vsel %vm1491, %v1906, 0
      %v1976 = vsel %vm1491, %v1907, 0
      %v1979 = vsel %vm1491, %v1908, 0
      %v1982 = vsel %vm1491, %v1909, 0
      %v1985 = vsel %vm1491, %v1910, 0
      %v1988 = vsel %vm1491, %v1911, 0
      %v1991 = vsel %vm1491, %v1912, 0
      %v1994 = vsel %vm1491, %v1913, 0
      %v1997 = vsel %vm1491, %v1914, 0
      %v2000 = vsel %vm1491, %v1915, 0
      %v2003 = vsel %vm1491, %v1916, 0
      %v2006 = vsel %vm1491, %v1917, 0
      %v2009 = vsel %vm1491, %v1918, 0
      %v2012 = vsel %vm1491, %v1919, 0
      %v2015 = vsel %vm1491, %v1920, 0
      %v2018 = vsel %vm1588, %v618, 0
      %2020 = vmatpush.bf16.msra.mxu0 0
      %2021 = vmatpush.bf16.msra.mxu0 0
      %2022 = vmatpush.bf16.msra.mxu0 0
      %2023 = vmatpush.bf16.msra.mxu0 0
      %2024 = vmatpush.bf16.msra.mxu0 0
      %2025 = vmatpush.bf16.msra.mxu0 0
      %2026 = vmatpush.bf16.msra.mxu0 0
      %2027 = vmatpush.bf16.msra.mxu0 %v2018
      %2028 = vmatmul.bf16.gmra.mxu0 %v1922
      %v2029 = vpop.f32.mrf.mxu0
      %v2030 = vadd.f32 %v1602, %v2029
      %v2031 = vpop.f32.mrf.mxu0
      %v2032 = vadd.f32 %v1604, %v2031
      %2033 = vmatmul.bf16.gmra.mxu0 %v1925
      %v2034 = vpop.f32.mrf.mxu0
      %v2035 = vadd.f32 %v1607, %v2034
      %v2036 = vpop.f32.mrf.mxu0
      %v2037 = vadd.f32 %v1609, %v2036
      %2038 = vmatmul.bf16.gmra.mxu0 %v1928
      %v2039 = vpop.f32.mrf.mxu0
      %v2040 = vadd.f32 %v1612, %v2039
      %v2041 = vpop.f32.mrf.mxu0
      %v2042 = vadd.f32 %v1614, %v2041
      %2043 = vmatmul.bf16.gmra.mxu0 %v1931
      %v2044 = vpop.f32.mrf.mxu0
      %v2045 = vadd.f32 %v1617, %v2044
      %v2046 = vpop.f32.mrf.mxu0
      %v2047 = vadd.f32 %v1619, %v2046
      %2048 = vmatmul.bf16.gmra.mxu0 %v1934
      %v2049 = vpop.f32.mrf.mxu0
      %v2050 = vadd.f32 %v1622, %v2049
      %v2051 = vpop.f32.mrf.mxu0
      %v2052 = vadd.f32 %v1624, %v2051
      %2053 = vmatmul.bf16.gmra.mxu0 %v1937
      %v2054 = vpop.f32.mrf.mxu0
      %v2055 = vadd.f32 %v1627, %v2054
      %v2056 = vpop.f32.mrf.mxu0
      %v2057 = vadd.f32 %v1629, %v2056
      %2058 = vmatmul.bf16.gmra.mxu0 %v1940
      %v2059 = vpop.f32.mrf.mxu0
      %v2060 = vadd.f32 %v1632, %v2059
      %v2061 = vpop.f32.mrf.mxu0
      %v2062 = vadd.f32 %v1634, %v2061
      %2063 = vmatmul.bf16.gmra.mxu0 %v1943
      %v2064 = vpop.f32.mrf.mxu0
      %v2065 = vadd.f32 %v1637, %v2064
      %v2066 = vpop.f32.mrf.mxu0
      %v2067 = vadd.f32 %v1639, %v2066
      %2068 = vmatmul.bf16.gmra.mxu0 %v1946
      %v2069 = vpop.f32.mrf.mxu0
      %v2070 = vadd.f32 %v1642, %v2069
      %v2071 = vpop.f32.mrf.mxu0
      %v2072 = vadd.f32 %v1644, %v2071
      %2073 = vmatmul.bf16.gmra.mxu0 %v1949
      %v2074 = vpop.f32.mrf.mxu0
      %v2075 = vadd.f32 %v1647, %v2074
      %v2076 = vpop.f32.mrf.mxu0
      %v2077 = vadd.f32 %v1649, %v2076
      %2078 = vmatmul.bf16.gmra.mxu0 %v1952
      %v2079 = vpop.f32.mrf.mxu0
      %v2080 = vadd.f32 %v1652, %v2079
      %v2081 = vpop.f32.mrf.mxu0
      %v2082 = vadd.f32 %v1654, %v2081
      %2083 = vmatmul.bf16.gmra.mxu0 %v1955
      %v2084 = vpop.f32.mrf.mxu0
      %v2085 = vadd.f32 %v1657, %v2084
      %v2086 = vpop.f32.mrf.mxu0
      %v2087 = vadd.f32 %v1659, %v2086
      %2088 = vmatmul.bf16.gmra.mxu0 %v1958
      %v2089 = vpop.f32.mrf.mxu0
      %v2090 = vadd.f32 %v1662, %v2089
      %v2091 = vpop.f32.mrf.mxu0
      %v2092 = vadd.f32 %v1664, %v2091
      %2093 = vmatmul.bf16.gmra.mxu0 %v1961
      %v2094 = vpop.f32.mrf.mxu0
      %v2095 = vadd.f32 %v1667, %v2094
      %v2096 = vpop.f32.mrf.mxu0
      %v2097 = vadd.f32 %v1669, %v2096
      %2098 = vmatmul.bf16.gmra.mxu0 %v1964
      %v2099 = vpop.f32.mrf.mxu0
      %v2100 = vadd.f32 %v1672, %v2099
      %v2101 = vpop.f32.mrf.mxu0
      %v2102 = vadd.f32 %v1674, %v2101
      %2103 = vmatmul.bf16.gmra.mxu0 %v1967
      %v2104 = vpop.f32.mrf.mxu0
      %v2105 = vadd.f32 %v1677, %v2104
      %v2106 = vpop.f32.mrf.mxu0
      %v2107 = vadd.f32 %v1679, %v2106
      %2108 = vmatmul.bf16.gmra.mxu0 %v1970
      %v2109 = vpop.f32.mrf.mxu0
      %v2110 = vadd.f32 %v1682, %v2109
      %v2111 = vpop.f32.mrf.mxu0
      %v2112 = vadd.f32 %v1684, %v2111
      %2113 = vmatmul.bf16.gmra.mxu0 %v1973
      %v2114 = vpop.f32.mrf.mxu0
      %v2115 = vadd.f32 %v1687, %v2114
      %v2116 = vpop.f32.mrf.mxu0
      %v2117 = vadd.f32 %v1689, %v2116
      %2118 = vmatmul.bf16.gmra.mxu0 %v1976
      %v2119 = vpop.f32.mrf.mxu0
      %v2120 = vadd.f32 %v1692, %v2119
      %v2121 = vpop.f32.mrf.mxu0
      %v2122 = vadd.f32 %v1694, %v2121
      %2123 = vmatmul.bf16.gmra.mxu0 %v1979
      %v2124 = vpop.f32.mrf.mxu0
      %v2125 = vadd.f32 %v1697, %v2124
      %v2126 = vpop.f32.mrf.mxu0
      %v2127 = vadd.f32 %v1699, %v2126
      %2128 = vmatmul.bf16.gmra.mxu0 %v1982
      %v2129 = vpop.f32.mrf.mxu0
      %v2130 = vadd.f32 %v1702, %v2129
      %v2131 = vpop.f32.mrf.mxu0
      %v2132 = vadd.f32 %v1704, %v2131
      %2133 = vmatmul.bf16.gmra.mxu0 %v1985
      %v2134 = vpop.f32.mrf.mxu0
      %v2135 = vadd.f32 %v1707, %v2134
      %v2136 = vpop.f32.mrf.mxu0
      %v2137 = vadd.f32 %v1709, %v2136
      %2138 = vmatmul.bf16.gmra.mxu0 %v1988
      %v2139 = vpop.f32.mrf.mxu0
      %v2140 = vadd.f32 %v1712, %v2139
      %v2141 = vpop.f32.mrf.mxu0
      %v2142 = vadd.f32 %v1714, %v2141
      %2143 = vmatmul.bf16.gmra.mxu0 %v1991
      %v2144 = vpop.f32.mrf.mxu0
      %v2145 = vadd.f32 %v1717, %v2144
      %v2146 = vpop.f32.mrf.mxu0
      %v2147 = vadd.f32 %v1719, %v2146
      %2148 = vmatmul.bf16.gmra.mxu0 %v1994
      %v2149 = vpop.f32.mrf.mxu0
      %v2150 = vadd.f32 %v1722, %v2149
      %v2151 = vpop.f32.mrf.mxu0
      %v2152 = vadd.f32 %v1724, %v2151
      %2153 = vmatmul.bf16.gmra.mxu0 %v1997
      %v2154 = vpop.f32.mrf.mxu0
      %v2155 = vadd.f32 %v1727, %v2154
      %v2156 = vpop.f32.mrf.mxu0
      %v2157 = vadd.f32 %v1729, %v2156
      %2158 = vmatmul.bf16.gmra.mxu0 %v2000
      %v2159 = vpop.f32.mrf.mxu0
      %v2160 = vadd.f32 %v1732, %v2159
      %v2161 = vpop.f32.mrf.mxu0
      %v2162 = vadd.f32 %v1734, %v2161
      %2163 = vmatmul.bf16.gmra.mxu0 %v2003
      %v2164 = vpop.f32.mrf.mxu0
      %v2165 = vadd.f32 %v1737, %v2164
      %v2166 = vpop.f32.mrf.mxu0
      %v2167 = vadd.f32 %v1739, %v2166
      %2168 = vmatmul.bf16.gmra.mxu0 %v2006
      %v2169 = vpop.f32.mrf.mxu0
      %v2170 = vadd.f32 %v1742, %v2169
      %v2171 = vpop.f32.mrf.mxu0
      %v2172 = vadd.f32 %v1744, %v2171
      %2173 = vmatmul.bf16.gmra.mxu0 %v2009
      %v2174 = vpop.f32.mrf.mxu0
      %v2175 = vadd.f32 %v1747, %v2174
      %v2176 = vpop.f32.mrf.mxu0
      %v2177 = vadd.f32 %v1749, %v2176
      %2178 = vmatmul.bf16.gmra.mxu0 %v2012
      %v2179 = vpop.f32.mrf.mxu0
      %v2180 = vadd.f32 %v1752, %v2179
      %v2181 = vpop.f32.mrf.mxu0
      %v2182 = vadd.f32 %v1754, %v2181
      %2183 = vmatmul.bf16.gmra.mxu0 %v2015
      %v2184 = vpop.f32.mrf.mxu0
      %v2185 = vadd.f32 %v1757, %v2184
      %v2186 = vpop.f32.mrf.mxu0
      %v2187 = vadd.f32 %v1759, %v2186
      %2188 = vdwg.mxu0
      %vm2221 = vcmask 1042432
      %vm2222 = vcmask 1046532
      %vm2223 = vmor %vm2221, %vm2222
      %v2224 = vrot.slane %v510, 5
      %v2225 = vrot.slane %v2224, 4
      %v2226 = vrot.slane %v511, 5
      %v2227 = vsel %vm2223, %v2225, %v2226
      %v2228 = vrot.slane %v2226, 4
      %v2229 = vrot.slane %v512, 5
      %v2230 = vsel %vm2223, %v2228, %v2229
      %v2231 = vrot.slane %v513, 5
      %v2232 = vrot.slane %v2231, 4
      %v2233 = vrot.slane %v514, 5
      %v2234 = vsel %vm2223, %v2232, %v2233
      %v2235 = vrot.slane %v2233, 4
      %v2236 = vrot.slane %v515, 5
      %v2237 = vsel %vm2223, %v2235, %v2236
      %v2238 = vrot.slane %v516, 5
      %v2239 = vrot.slane %v2238, 4
      %v2240 = vrot.slane %v517, 5
      %v2241 = vsel %vm2223, %v2239, %v2240
      %v2242 = vrot.slane %v2240, 4
      %v2243 = vrot.slane %v518, 5
      %v2244 = vsel %vm2223, %v2242, %v2243
      %v2245 = vrot.slane %v519, 5
      %v2246 = vrot.slane %v2245, 4
      %v2247 = vrot.slane %v520, 5
      %v2248 = vsel %vm2223, %v2246, %v2247
      %v2249 = vrot.slane %v2247, 4
      %v2250 = vrot.slane %v521, 5
      %v2251 = vsel %vm2223, %v2249, %v2250
      %v2252 = vrot.slane %v522, 5
      %v2253 = vrot.slane %v2252, 4
      %v2254 = vrot.slane %v523, 5
      %v2255 = vsel %vm2223, %v2253, %v2254
      %v2256 = vrot.slane %v2254, 4
      %v2257 = vrot.slane %v524, 5
      %v2258 = vsel %vm2223, %v2256, %v2257
      %v2259 = vrot.slane %v525, 5
      %v2260 = vrot.slane %v2259, 4
      %v2261 = vrot.slane %v526, 5
      %v2262 = vsel %vm2223, %v2260, %v2261
      %v2263 = vrot.slane %v2261, 4
      %v2264 = vrot.slane %v527, 5
      %v2265 = vsel %vm2223, %v2263, %v2264
      %v2266 = vrot.slane %v528, 5
      %v2267 = vrot.slane %v2266, 4
      %v2268 = vrot.slane %v529, 5
      %v2269 = vsel %vm2223, %v2267, %v2268
      %v2270 = vrot.slane %v2268, 4
      %v2271 = vrot.slane %v530, 5
      %v2272 = vsel %vm2223, %v2270, %v2271
      %v2273 = vrot.slane %v531, 5
      %v2274 = vrot.slane %v2273, 4
      %v2275 = vrot.slane %v532, 5
      %v2276 = vsel %vm2223, %v2274, %v2275
      %v2277 = vrot.slane %v2275, 4
      %v2278 = vrot.slane %v533, 5
      %v2279 = vsel %vm2223, %v2277, %v2278
      %v2280 = vrot.slane %v534, 5
      %v2281 = vrot.slane %v2280, 4
      %v2282 = vrot.slane %v535, 5
      %v2283 = vsel %vm2223, %v2281, %v2282
      %v2284 = vrot.slane %v2282, 4
      %v2285 = vrot.slane %v536, 5
      %v2286 = vsel %vm2223, %v2284, %v2285
      %v2287 = vrot.slane %v537, 5
      %v2288 = vrot.slane %v2287, 4
      %v2289 = vrot.slane %v538, 5
      %v2290 = vsel %vm2223, %v2288, %v2289
      %v2291 = vrot.slane %v2289, 4
      %v2292 = vrot.slane %v539, 5
      %v2293 = vsel %vm2223, %v2291, %v2292
      %v2294 = vrot.slane %v540, 5
      %v2295 = vrot.slane %v2294, 4
      %v2296 = vrot.slane %v541, 5
      %v2297 = vsel %vm2223, %v2295, %v2296
      %v2298 = vrot.slane %v2296, 4
      %v2299 = vrot.slane %v542, 5
      %v2300 = vsel %vm2223, %v2298, %v2299
      %v2301 = vrot.slane %v543, 5
      %v2302 = vrot.slane %v2301, 4
      %v2303 = vrot.slane %v544, 5
      %v2304 = vsel %vm2223, %v2302, %v2303
      %v2305 = vrot.slane %v2303, 4
      %v2306 = vrot.slane %v545, 5
      %v2307 = vsel %vm2223, %v2305, %v2306
      %v2308 = vrot.slane %v546, 5
      %v2309 = vrot.slane %v2308, 4
      %v2310 = vrot.slane %v547, 5
      %v2311 = vsel %vm2223, %v2309, %v2310
      %v2312 = vrot.slane %v2310, 4
      %v2313 = vrot.slane %v548, 5
      %v2314 = vsel %vm2223, %v2312, %v2313
      %v2315 = vrot.slane %v549, 5
      %v2316 = vrot.slane %v2315, 4
      %v2317 = vrot.slane %v550, 5
      %v2318 = vsel %vm2223, %v2316, %v2317
      %v2319 = vrot.slane %v2317, 4
      %v2320 = vrot.slane %v551, 5
      %v2321 = vsel %vm2223, %v2319, %v2320
      %v2322 = vrot.slane %v552, 5
      %v2323 = vrot.slane %v2322, 4
      %v2324 = vrot.slane %v553, 5
      %v2325 = vsel %vm2223, %v2323, %v2324
      %v2326 = vrot.slane %v2324, 4
      %v2327 = vrot.slane %v554, 5
      %v2328 = vsel %vm2223, %v2326, %v2327
      %v2329 = vrot.slane %v555, 5
      %v2330 = vrot.slane %v2329, 4
      %v2331 = vrot.slane %v556, 5
      %v2332 = vsel %vm2223, %v2330, %v2331
      %v2333 = vrot.slane %v2331, 4
      %v2334 = vrot.slane %v557, 5
      %v2335 = vsel %vm2223, %v2333, %v2334
      %v2336 = vrot.slane %v564, 5
      %v2337 = vrot.slane %v2336, 4
      %v2338 = vrot.slane %v565, 5
      %v2339 = vsel %vm2223, %v2337, %v2338
      %v2340 = vrot.slane %v2338, 4
      %v2341 = vrot.slane %v566, 5
      %v2342 = vsel %vm2223, %v2340, %v2341
      %v2343 = vrot.slane %v567, 5
      %v2344 = vrot.slane %v2343, 4
      %v2345 = vrot.slane %v568, 5
      %v2346 = vsel %vm2223, %v2344, %v2345
      %v2347 = vrot.slane %v2345, 4
      %v2348 = vrot.slane %v569, 5
      %v2349 = vsel %vm2223, %v2347, %v2348
      %v2350 = vrot.slane %v570, 5
      %v2351 = vrot.slane %v2350, 4
      %v2352 = vrot.slane %v571, 5
      %v2353 = vsel %vm2223, %v2351, %v2352
      %v2354 = vrot.slane %v2352, 4
      %v2355 = vrot.slane %v572, 5
      %v2356 = vsel %vm2223, %v2354, %v2355
      %v2357 = vrot.slane %v573, 5
      %v2358 = vrot.slane %v2357, 4
      %v2359 = vrot.slane %v574, 5
      %v2360 = vsel %vm2223, %v2358, %v2359
      %v2361 = vrot.slane %v2359, 4
      %v2362 = vrot.slane %v575, 5
      %v2363 = vsel %vm2223, %v2361, %v2362
      %v2364 = vrot.slane %v576, 5
      %v2365 = vrot.slane %v2364, 4
      %v2366 = vrot.slane %v577, 5
      %v2367 = vsel %vm2223, %v2365, %v2366
      %v2368 = vrot.slane %v2366, 4
      %v2369 = vrot.slane %v578, 5
      %v2370 = vsel %vm2223, %v2368, %v2369
      %v2371 = vrot.slane %v579, 5
      %v2372 = vrot.slane %v2371, 4
      %v2373 = vrot.slane %v580, 5
      %v2374 = vsel %vm2223, %v2372, %v2373
      %v2375 = vrot.slane %v2373, 4
      %v2376 = vrot.slane %v581, 5
      %v2377 = vsel %vm2223, %v2375, %v2376
      %v2378 = vrot.slane %v582, 5
      %v2379 = vrot.slane %v2378, 4
      %v2380 = vrot.slane %v583, 5
      %v2381 = vsel %vm2223, %v2379, %v2380
      %v2382 = vrot.slane %v2380, 4
      %v2383 = vrot.slane %v584, 5
      %v2384 = vsel %vm2223, %v2382, %v2383
      %v2385 = vrot.slane %v585, 5
      %v2386 = vrot.slane %v2385, 4
      %v2387 = vrot.slane %v586, 5
      %v2388 = vsel %vm2223, %v2386, %v2387
      %v2389 = vrot.slane %v2387, 4
      %v2390 = vrot.slane %v587, 5
      %v2391 = vsel %vm2223, %v2389, %v2390
      %v2392 = vrot.slane %v588, 5
      %v2393 = vrot.slane %v2392, 4
      %v2394 = vrot.slane %v589, 5
      %v2395 = vsel %vm2223, %v2393, %v2394
      %v2396 = vrot.slane %v2394, 4
      %v2397 = vrot.slane %v590, 5
      %v2398 = vsel %vm2223, %v2396, %v2397
      %v2399 = vrot.slane %v591, 5
      %v2400 = vrot.slane %v2399, 4
      %v2401 = vrot.slane %v592, 5
      %v2402 = vsel %vm2223, %v2400, %v2401
      %v2403 = vrot.slane %v2401, 4
      %v2404 = vrot.slane %v593, 5
      %v2405 = vsel %vm2223, %v2403, %v2404
      %v2406 = vrot.slane %v594, 5
      %v2407 = vrot.slane %v2406, 4
      %v2408 = vrot.slane %v595, 5
      %v2409 = vsel %vm2223, %v2407, %v2408
      %v2410 = vrot.slane %v2408, 4
      %v2411 = vrot.slane %v596, 5
      %v2412 = vsel %vm2223, %v2410, %v2411
      %v2413 = vrot.slane %v597, 5
      %v2414 = vrot.slane %v2413, 4
      %v2415 = vrot.slane %v598, 5
      %v2416 = vsel %vm2223, %v2414, %v2415
      %v2417 = vrot.slane %v2415, 4
      %v2418 = vrot.slane %v599, 5
      %v2419 = vsel %vm2223, %v2417, %v2418
      %v2420 = vrot.slane %v600, 5
      %v2421 = vrot.slane %v2420, 4
      %v2422 = vrot.slane %v601, 5
      %v2423 = vsel %vm2223, %v2421, %v2422
      %v2424 = vrot.slane %v2422, 4
      %v2425 = vrot.slane %v602, 5
      %v2426 = vsel %vm2223, %v2424, %v2425
      %v2427 = vrot.slane %v603, 5
      %v2428 = vrot.slane %v2427, 4
      %v2429 = vrot.slane %v604, 5
      %v2430 = vsel %vm2223, %v2428, %v2429
      %v2431 = vrot.slane %v2429, 4
      %v2432 = vrot.slane %v605, 5
      %v2433 = vsel %vm2223, %v2431, %v2432
      %v2434 = vrot.slane %v606, 5
      %v2435 = vrot.slane %v2434, 4
      %v2436 = vrot.slane %v607, 5
      %v2437 = vsel %vm2223, %v2435, %v2436
      %v2438 = vrot.slane %v2436, 4
      %v2439 = vrot.slane %v608, 5
      %v2440 = vsel %vm2223, %v2438, %v2439
      %v2441 = vrot.slane %v609, 5
      %v2442 = vrot.slane %v2441, 4
      %v2443 = vrot.slane %v610, 5
      %v2444 = vsel %vm2223, %v2442, %v2443
      %v2445 = vrot.slane %v2443, 4
      %v2446 = vrot.slane %v611, 5
      %v2447 = vsel %vm2223, %v2445, %v2446
      %v2448 = vld [vmem:[%s1 + $0x4] sm:$0x3]
      %v2449 = vunpack.c.l.b16 %v2227
      %v2450 = vunpack.c.l.b16 %v2230
      %v2451 = vunpack.c.l.b16 %v2234
      %v2452 = vunpack.c.l.b16 %v2237
      %v2453 = vunpack.c.l.b16 %v2241
      %v2454 = vunpack.c.l.b16 %v2244
      %v2455 = vunpack.c.l.b16 %v2248
      %v2456 = vunpack.c.l.b16 %v2251
      %v2457 = vunpack.c.l.b16 %v2255
      %v2458 = vunpack.c.l.b16 %v2258
      %v2459 = vunpack.c.l.b16 %v2262
      %v2460 = vunpack.c.l.b16 %v2265
      %v2461 = vunpack.c.l.b16 %v2269
      %v2462 = vunpack.c.l.b16 %v2272
      %v2463 = vunpack.c.l.b16 %v2276
      %v2464 = vunpack.c.l.b16 %v2279
      %v2465 = vunpack.c.l.b16 %v2283
      %v2466 = vunpack.c.l.b16 %v2286
      %v2467 = vunpack.c.l.b16 %v2290
      %v2468 = vunpack.c.l.b16 %v2293
      %v2469 = vunpack.c.l.b16 %v2297
      %v2470 = vunpack.c.l.b16 %v2300
      %v2471 = vunpack.c.l.b16 %v2304
      %v2472 = vunpack.c.l.b16 %v2307
      %v2473 = vunpack.c.l.b16 %v2311
      %v2474 = vunpack.c.l.b16 %v2314
      %v2475 = vunpack.c.l.b16 %v2318
      %v2476 = vunpack.c.l.b16 %v2321
      %v2477 = vunpack.c.l.b16 %v2325
      %v2478 = vunpack.c.l.b16 %v2328
      %v2479 = vunpack.c.l.b16 %v2332
      %v2480 = vunpack.c.l.b16 %v2335
      %v2481 = vunpack.c.l.b16 %v2339
      %v2482 = vunpack.c.l.b16 %v2342
      %v2483 = vunpack.c.l.b16 %v2346
      %v2484 = vunpack.c.l.b16 %v2349
      %v2485 = vunpack.c.l.b16 %v2353
      %v2486 = vunpack.c.l.b16 %v2356
      %v2487 = vunpack.c.l.b16 %v2360
      %v2488 = vunpack.c.l.b16 %v2363
      %v2489 = vunpack.c.l.b16 %v2367
      %v2490 = vunpack.c.l.b16 %v2370
      %v2491 = vunpack.c.l.b16 %v2374
      %v2492 = vunpack.c.l.b16 %v2377
      %v2493 = vunpack.c.l.b16 %v2381
      %v2494 = vunpack.c.l.b16 %v2384
      %v2495 = vunpack.c.l.b16 %v2388
      %v2496 = vunpack.c.l.b16 %v2391
      %v2497 = vunpack.c.l.b16 %v2395
      %v2498 = vunpack.c.l.b16 %v2398
      %v2499 = vunpack.c.l.b16 %v2402
      %v2500 = vunpack.c.l.b16 %v2405
      %v2501 = vunpack.c.l.b16 %v2409
      %v2502 = vunpack.c.l.b16 %v2412
      %v2503 = vunpack.c.l.b16 %v2416
      %v2504 = vunpack.c.l.b16 %v2419
      %v2505 = vunpack.c.l.b16 %v2423
      %v2506 = vunpack.c.l.b16 %v2426
      %v2507 = vunpack.c.l.b16 %v2430
      %v2508 = vunpack.c.l.b16 %v2433
      %v2509 = vunpack.c.l.b16 %v2437
      %v2510 = vunpack.c.l.b16 %v2440
      %v2511 = vunpack.c.l.b16 %v2444
      %v2512 = vunpack.c.l.b16 %v2447
      %v2513 = vpack.c.b16 %v2450, %v2449
      %v2514 = vpack.c.b16 %v2452, %v2451
      %v2515 = vpack.c.b16 %v2454, %v2453
      %v2516 = vpack.c.b16 %v2456, %v2455
      %v2517 = vpack.c.b16 %v2458, %v2457
      %v2518 = vpack.c.b16 %v2460, %v2459
      %v2519 = vpack.c.b16 %v2462, %v2461
      %v2520 = vpack.c.b16 %v2464, %v2463
      %v2521 = vpack.c.b16 %v2466, %v2465
      %v2522 = vpack.c.b16 %v2468, %v2467
      %v2523 = vpack.c.b16 %v2470, %v2469
      %v2524 = vpack.c.b16 %v2472, %v2471
      %v2525 = vpack.c.b16 %v2474, %v2473
      %v2526 = vpack.c.b16 %v2476, %v2475
      %v2527 = vpack.c.b16 %v2478, %v2477
      %v2528 = vpack.c.b16 %v2480, %v2479
      %v2529 = vpack.c.b16 %v2482, %v2481
      %v2530 = vpack.c.b16 %v2484, %v2483
      %v2531 = vpack.c.b16 %v2486, %v2485
      %v2532 = vpack.c.b16 %v2488, %v2487
      %v2533 = vpack.c.b16 %v2490, %v2489
      %v2534 = vpack.c.b16 %v2492, %v2491
      %v2535 = vpack.c.b16 %v2494, %v2493
      %v2536 = vpack.c.b16 %v2496, %v2495
      %v2537 = vpack.c.b16 %v2498, %v2497
      %v2538 = vpack.c.b16 %v2500, %v2499
      %v2539 = vpack.c.b16 %v2502, %v2501
      %v2540 = vpack.c.b16 %v2504, %v2503
      %v2541 = vpack.c.b16 %v2506, %v2505
      %v2542 = vpack.c.b16 %v2508, %v2507
      %v2543 = vpack.c.b16 %v2510, %v2509
      %v2544 = vpack.c.b16 %v2512, %v2511
      %v2546 = vsel %vm1491, %v2513, 0
      %v2549 = vsel %vm1491, %v2514, 0
      %v2552 = vsel %vm1491, %v2515, 0
      %v2555 = vsel %vm1491, %v2516, 0
      %v2558 = vsel %vm1491, %v2517, 0
      %v2561 = vsel %vm1491, %v2518, 0
      %v2564 = vsel %vm1491, %v2519, 0
      %v2567 = vsel %vm1491, %v2520, 0
      %v2570 = vsel %vm1491, %v2521, 0
      %v2573 = vsel %vm1491, %v2522, 0
      %v2576 = vsel %vm1491, %v2523, 0
      %v2579 = vsel %vm1491, %v2524, 0
      %v2582 = vsel %vm1491, %v2525, 0
      %v2585 = vsel %vm1491, %v2526, 0
      %v2588 = vsel %vm1491, %v2527, 0
      %v2591 = vsel %vm1491, %v2528, 0
      %v2594 = vsel %vm1491, %v2529, 0
      %v2597 = vsel %vm1491, %v2530, 0
      %v2600 = vsel %vm1491, %v2531, 0
      %v2603 = vsel %vm1491, %v2532, 0
      %v2606 = vsel %vm1491, %v2533, 0
      %v2609 = vsel %vm1491, %v2534, 0
      %v2612 = vsel %vm1491, %v2535, 0
      %v2615 = vsel %vm1491, %v2536, 0
      %v2618 = vsel %vm1491, %v2537, 0
      %v2621 = vsel %vm1491, %v2538, 0
      %v2624 = vsel %vm1491, %v2539, 0
      %v2627 = vsel %vm1491, %v2540, 0
      %v2630 = vsel %vm1491, %v2541, 0
      %v2633 = vsel %vm1491, %v2542, 0
      %v2636 = vsel %vm1491, %v2543, 0
      %v2639 = vsel %vm1491, %v2544, 0
      %v2642 = vsel %vm1588, %v2448, 0
      %2644 = vmatpush.bf16.msra.mxu0 0
      %2645 = vmatpush.bf16.msra.mxu0 0
      %2646 = vmatpush.bf16.msra.mxu0 0
      %2647 = vmatpush.bf16.msra.mxu0 0
      %2648 = vmatpush.bf16.msra.mxu0 0
      %2649 = vmatpush.bf16.msra.mxu0 0
      %2650 = vmatpush.bf16.msra.mxu0 0
      %2651 = vmatpush.bf16.msra.mxu0 %v2642
      %2652 = vmatmul.bf16.gmra.mxu0 %v2546
      %v2653 = vpop.f32.mrf.mxu0
      %v2654 = vadd.f32 0.0, %v2653
      %v2655 = vpop.f32.mrf.mxu0
      %v2656 = vadd.f32 0.0, %v2655
      %2657 = vmatmul.bf16.gmra.mxu0 %v2549
      %v2658 = vpop.f32.mrf.mxu0
      %v2659 = vadd.f32 0.0, %v2658
      %v2660 = vpop.f32.mrf.mxu0
      %v2661 = vadd.f32 0.0, %v2660
      %2662 = vmatmul.bf16.gmra.mxu0 %v2552
      %v2663 = vpop.f32.mrf.mxu0
      %v2664 = vadd.f32 0.0, %v2663
      %v2665 = vpop.f32.mrf.mxu0
      %v2666 = vadd.f32 0.0, %v2665
      %2667 = vmatmul.bf16.gmra.mxu0 %v2555
      %v2668 = vpop.f32.mrf.mxu0
      %v2669 = vadd.f32 0.0, %v2668
      %v2670 = vpop.f32.mrf.mxu0
      %v2671 = vadd.f32 0.0, %v2670
      %2672 = vmatmul.bf16.gmra.mxu0 %v2558
      %v2673 = vpop.f32.mrf.mxu0
      %v2674 = vadd.f32 0.0, %v2673
      %v2675 = vpop.f32.mrf.mxu0
      %v2676 = vadd.f32 0.0, %v2675
      %2677 = vmatmul.bf16.gmra.mxu0 %v2561
      %v2678 = vpop.f32.mrf.mxu0
      %v2679 = vadd.f32 0.0, %v2678
      %v2680 = vpop.f32.mrf.mxu0
      %v2681 = vadd.f32 0.0, %v2680
      %2682 = vmatmul.bf16.gmra.mxu0 %v2564
      %v2683 = vpop.f32.mrf.mxu0
      %v2684 = vadd.f32 0.0, %v2683
      %v2685 = vpop.f32.mrf.mxu0
      %v2686 = vadd.f32 0.0, %v2685
      %2687 = vmatmul.bf16.gmra.mxu0 %v2567
      %v2688 = vpop.f32.mrf.mxu0
      %v2689 = vadd.f32 0.0, %v2688
      %v2690 = vpop.f32.mrf.mxu0
      %v2691 = vadd.f32 0.0, %v2690
      %2692 = vmatmul.bf16.gmra.mxu0 %v2570
      %v2693 = vpop.f32.mrf.mxu0
      %v2694 = vadd.f32 0.0, %v2693
      %v2695 = vpop.f32.mrf.mxu0
      %v2696 = vadd.f32 0.0, %v2695
      %2697 = vmatmul.bf16.gmra.mxu0 %v2573
      %v2698 = vpop.f32.mrf.mxu0
      %v2699 = vadd.f32 0.0, %v2698
      %v2700 = vpop.f32.mrf.mxu0
      %v2701 = vadd.f32 0.0, %v2700
      %2702 = vmatmul.bf16.gmra.mxu0 %v2576
      %v2703 = vpop.f32.mrf.mxu0
      %v2704 = vadd.f32 0.0, %v2703
      %v2705 = vpop.f32.mrf.mxu0
      %v2706 = vadd.f32 0.0, %v2705
      %2707 = vmatmul.bf16.gmra.mxu0 %v2579
      %v2708 = vpop.f32.mrf.mxu0
      %v2709 = vadd.f32 0.0, %v2708
      %v2710 = vpop.f32.mrf.mxu0
      %v2711 = vadd.f32 0.0, %v2710
      %2712 = vmatmul.bf16.gmra.mxu0 %v2582
      %v2713 = vpop.f32.mrf.mxu0
      %v2714 = vadd.f32 0.0, %v2713
      %v2715 = vpop.f32.mrf.mxu0
      %v2716 = vadd.f32 0.0, %v2715
      %2717 = vmatmul.bf16.gmra.mxu0 %v2585
      %v2718 = vpop.f32.mrf.mxu0
      %v2719 = vadd.f32 0.0, %v2718
      %v2720 = vpop.f32.mrf.mxu0
      %v2721 = vadd.f32 0.0, %v2720
      %2722 = vmatmul.bf16.gmra.mxu0 %v2588
      %v2723 = vpop.f32.mrf.mxu0
      %v2724 = vadd.f32 0.0, %v2723
      %v2725 = vpop.f32.mrf.mxu0
      %v2726 = vadd.f32 0.0, %v2725
      %2727 = vmatmul.bf16.gmra.mxu0 %v2591
      %v2728 = vpop.f32.mrf.mxu0
      %v2729 = vadd.f32 0.0, %v2728
      %v2730 = vpop.f32.mrf.mxu0
      %v2731 = vadd.f32 0.0, %v2730
      %2732 = vmatmul.bf16.gmra.mxu0 %v2594
      %v2733 = vpop.f32.mrf.mxu0
      %v2734 = vadd.f32 0.0, %v2733
      %v2735 = vpop.f32.mrf.mxu0
      %v2736 = vadd.f32 0.0, %v2735
      %2737 = vmatmul.bf16.gmra.mxu0 %v2597
      %v2738 = vpop.f32.mrf.mxu0
      %v2739 = vadd.f32 0.0, %v2738
      %v2740 = vpop.f32.mrf.mxu0
      %v2741 = vadd.f32 0.0, %v2740
      %2742 = vmatmul.bf16.gmra.mxu0 %v2600
      %v2743 = vpop.f32.mrf.mxu0
      %v2744 = vadd.f32 0.0, %v2743
      %v2745 = vpop.f32.mrf.mxu0
      %v2746 = vadd.f32 0.0, %v2745
      %2747 = vmatmul.bf16.gmra.mxu0 %v2603
      %v2748 = vpop.f32.mrf.mxu0
      %v2749 = vadd.f32 0.0, %v2748
      %v2750 = vpop.f32.mrf.mxu0
      %v2751 = vadd.f32 0.0, %v2750
      %2752 = vmatmul.bf16.gmra.mxu0 %v2606
      %v2753 = vpop.f32.mrf.mxu0
      %v2754 = vadd.f32 0.0, %v2753
      %v2755 = vpop.f32.mrf.mxu0
      %v2756 = vadd.f32 0.0, %v2755
      %2757 = vmatmul.bf16.gmra.mxu0 %v2609
      %v2758 = vpop.f32.mrf.mxu0
      %v2759 = vadd.f32 0.0, %v2758
      %v2760 = vpop.f32.mrf.mxu0
      %v2761 = vadd.f32 0.0, %v2760
      %2762 = vmatmul.bf16.gmra.mxu0 %v2612
      %v2763 = vpop.f32.mrf.mxu0
      %v2764 = vadd.f32 0.0, %v2763
      %v2765 = vpop.f32.mrf.mxu0
      %v2766 = vadd.f32 0.0, %v2765
      %2767 = vmatmul.bf16.gmra.mxu0 %v2615
      %v2768 = vpop.f32.mrf.mxu0
      %v2769 = vadd.f32 0.0, %v2768
      %v2770 = vpop.f32.mrf.mxu0
      %v2771 = vadd.f32 0.0, %v2770
      %2772 = vmatmul.bf16.gmra.mxu0 %v2618
      %v2773 = vpop.f32.mrf.mxu0
      %v2774 = vadd.f32 0.0, %v2773
      %v2775 = vpop.f32.mrf.mxu0
      %v2776 = vadd.f32 0.0, %v2775
      %2777 = vmatmul.bf16.gmra.mxu0 %v2621
      %v2778 = vpop.f32.mrf.mxu0
      %v2779 = vadd.f32 0.0, %v2778
      %v2780 = vpop.f32.mrf.mxu0
      %v2781 = vadd.f32 0.0, %v2780
      %2782 = vmatmul.bf16.gmra.mxu0 %v2624
      %v2783 = vpop.f32.mrf.mxu0
      %v2784 = vadd.f32 0.0, %v2783
      %v2785 = vpop.f32.mrf.mxu0
      %v2786 = vadd.f32 0.0, %v2785
      %2787 = vmatmul.bf16.gmra.mxu0 %v2627
      %v2788 = vpop.f32.mrf.mxu0
      %v2789 = vadd.f32 0.0, %v2788
      %v2790 = vpop.f32.mrf.mxu0
      %v2791 = vadd.f32 0.0, %v2790
      %2792 = vmatmul.bf16.gmra.mxu0 %v2630
      %v2793 = vpop.f32.mrf.mxu0
      %v2794 = vadd.f32 0.0, %v2793
      %v2795 = vpop.f32.mrf.mxu0
      %v2796 = vadd.f32 0.0, %v2795
      %2797 = vmatmul.bf16.gmra.mxu0 %v2633
      %v2798 = vpop.f32.mrf.mxu0
      %v2799 = vadd.f32 0.0, %v2798
      %v2800 = vpop.f32.mrf.mxu0
      %v2801 = vadd.f32 0.0, %v2800
      %2802 = vmatmul.bf16.gmra.mxu0 %v2636
      %v2803 = vpop.f32.mrf.mxu0
      %v2804 = vadd.f32 0.0, %v2803
      %v2805 = vpop.f32.mrf.mxu0
      %v2806 = vadd.f32 0.0, %v2805
      %2807 = vmatmul.bf16.gmra.mxu0 %v2639
      %v2808 = vpop.f32.mrf.mxu0
      %v2809 = vadd.f32 0.0, %v2808
      %v2810 = vpop.f32.mrf.mxu0
      %v2811 = vadd.f32 0.0, %v2810
      %2812 = vdwg.mxu0
      %v2813 = vadd.f32 %v2030, %v2654
      %v2814 = vadd.f32 %v2032, %v2656
      %v2815 = vadd.f32 %v2035, %v2659
      %v2816 = vadd.f32 %v2037, %v2661
      %v2817 = vadd.f32 %v2040, %v2664
      %v2818 = vadd.f32 %v2042, %v2666
      %v2819 = vadd.f32 %v2045, %v2669
      %v2820 = vadd.f32 %v2047, %v2671
      %v2821 = vadd.f32 %v2050, %v2674
      %v2822 = vadd.f32 %v2052, %v2676
      %v2823 = vadd.f32 %v2055, %v2679
      %v2824 = vadd.f32 %v2057, %v2681
      %v2825 = vadd.f32 %v2060, %v2684
      %v2826 = vadd.f32 %v2062, %v2686
      %v2827 = vadd.f32 %v2065, %v2689
      %v2828 = vadd.f32 %v2067, %v2691
      %v2829 = vadd.f32 %v2070, %v2694
      %v2830 = vadd.f32 %v2072, %v2696
      %v2831 = vadd.f32 %v2075, %v2699
      %v2832 = vadd.f32 %v2077, %v2701
      %v2833 = vadd.f32 %v2080, %v2704
      %v2834 = vadd.f32 %v2082, %v2706
      %v2835 = vadd.f32 %v2085, %v2709
      %v2836 = vadd.f32 %v2087, %v2711
      %v2837 = vadd.f32 %v2090, %v2714
      %v2838 = vadd.f32 %v2092, %v2716
      %v2839 = vadd.f32 %v2095, %v2719
      %v2840 = vadd.f32 %v2097, %v2721
      %v2841 = vadd.f32 %v2100, %v2724
      %v2842 = vadd.f32 %v2102, %v2726
      %v2843 = vadd.f32 %v2105, %v2729
      %v2844 = vadd.f32 %v2107, %v2731
      %v2845 = vadd.f32 %v2110, %v2734
      %v2846 = vadd.f32 %v2112, %v2736
      %v2847 = vadd.f32 %v2115, %v2739
      %v2848 = vadd.f32 %v2117, %v2741
      %v2849 = vadd.f32 %v2120, %v2744
      %v2850 = vadd.f32 %v2122, %v2746
      %v2851 = vadd.f32 %v2125, %v2749
      %v2852 = vadd.f32 %v2127, %v2751
      %v2853 = vadd.f32 %v2130, %v2754
      %v2854 = vadd.f32 %v2132, %v2756
      %v2855 = vadd.f32 %v2135, %v2759
      %v2856 = vadd.f32 %v2137, %v2761
      %v2857 = vadd.f32 %v2140, %v2764
      %v2858 = vadd.f32 %v2142, %v2766
      %v2859 = vadd.f32 %v2145, %v2769
      %v2860 = vadd.f32 %v2147, %v2771
      %v2861 = vadd.f32 %v2150, %v2774
      %v2862 = vadd.f32 %v2152, %v2776
      %v2863 = vadd.f32 %v2155, %v2779
      %v2864 = vadd.f32 %v2157, %v2781
      %v2865 = vadd.f32 %v2160, %v2784
      %v2866 = vadd.f32 %v2162, %v2786
      %v2867 = vadd.f32 %v2165, %v2789
      %v2868 = vadd.f32 %v2167, %v2791
      %v2869 = vadd.f32 %v2170, %v2794
      %v2870 = vadd.f32 %v2172, %v2796
      %v2871 = vadd.f32 %v2175, %v2799
      %v2872 = vadd.f32 %v2177, %v2801
      %v2873 = vadd.f32 %v2180, %v2804
      %v2874 = vadd.f32 %v2182, %v2806
      %v2875 = vadd.f32 %v2185, %v2809
      %v2876 = vadd.f32 %v2187, %v2811
      %v2877 = vld [vmem:[%s1 + $0x4] sm:$0xc]
      %v2882 = vunpack.c.l.b16 %v558
      %v2883 = vunpack.c.l.b16 %v559
      %v2884 = vunpack.c.l.b16 %v612
      %v2885 = vunpack.c.l.b16 %v613
      %v2886 = vpack.c.b16 %v2883, %v2882
      %v2887 = vpack.c.b16 %v2885, %v2884
      %v2889 = vunpack.c.l.b16 %v2877
      %v2890 = vpack.c.b16 %v2889, %v2889
      %v2891 = vrot.slane %v2890, 2
      %v2893 = vsel %vm1491, %v2886, 0
      %v2896 = vsel %vm1491, %v2887, 0
      %v2899 = vsel %vm1588, %v2891, 0
      %2901 = vmatpush.bf16.msra.mxu0 0
      %2902 = vmatpush.bf16.msra.mxu0 0
      %2903 = vmatpush.bf16.msra.mxu0 0
      %2904 = vmatpush.bf16.msra.mxu0 0
      %2905 = vmatpush.bf16.msra.mxu0 0
      %2906 = vmatpush.bf16.msra.mxu0 0
      %2907 = vmatpush.bf16.msra.mxu0 0
      %2908 = vmatpush.bf16.msra.mxu0 %v2899
      %2909 = vmatmul.bf16.gmra.mxu0 %v1925
      %v2910 = vpop.f32.mrf.mxu0
      %v2911 = vadd.f32 0.0, %v2910
      %v2912 = vpop.f32.mrf.mxu0
      %v2913 = vadd.f32 0.0, %v2912
      %2914 = vmatmul.bf16.gmra.mxu0 %v1928
      %v2915 = vpop.f32.mrf.mxu0
      %v2916 = vadd.f32 0.0, %v2915
      %v2917 = vpop.f32.mrf.mxu0
      %v2918 = vadd.f32 0.0, %v2917
      %2919 = vmatmul.bf16.gmra.mxu0 %v1931
      %v2920 = vpop.f32.mrf.mxu0
      %v2921 = vadd.f32 0.0, %v2920
      %v2922 = vpop.f32.mrf.mxu0
      %v2923 = vadd.f32 0.0, %v2922
      %2924 = vmatmul.bf16.gmra.mxu0 %v1934
      %v2925 = vpop.f32.mrf.mxu0
      %v2926 = vadd.f32 0.0, %v2925
      %v2927 = vpop.f32.mrf.mxu0
      %v2928 = vadd.f32 0.0, %v2927
      %2929 = vmatmul.bf16.gmra.mxu0 %v1937
      %v2930 = vpop.f32.mrf.mxu0
      %v2931 = vadd.f32 0.0, %v2930
      %v2932 = vpop.f32.mrf.mxu0
      %v2933 = vadd.f32 0.0, %v2932
      %2934 = vmatmul.bf16.gmra.mxu0 %v1940
      %v2935 = vpop.f32.mrf.mxu0
      %v2936 = vadd.f32 0.0, %v2935
      %v2937 = vpop.f32.mrf.mxu0
      %v2938 = vadd.f32 0.0, %v2937
      %2939 = vmatmul.bf16.gmra.mxu0 %v1943
      %v2940 = vpop.f32.mrf.mxu0
      %v2941 = vadd.f32 0.0, %v2940
      %v2942 = vpop.f32.mrf.mxu0
      %v2943 = vadd.f32 0.0, %v2942
      %2944 = vmatmul.bf16.gmra.mxu0 %v1946
      %v2945 = vpop.f32.mrf.mxu0
      %v2946 = vadd.f32 0.0, %v2945
      %v2947 = vpop.f32.mrf.mxu0
      %v2948 = vadd.f32 0.0, %v2947
      %2949 = vmatmul.bf16.gmra.mxu0 %v1949
      %v2950 = vpop.f32.mrf.mxu0
      %v2951 = vadd.f32 0.0, %v2950
      %v2952 = vpop.f32.mrf.mxu0
      %v2953 = vadd.f32 0.0, %v2952
      %2954 = vmatmul.bf16.gmra.mxu0 %v1952
      %v2955 = vpop.f32.mrf.mxu0
      %v2956 = vadd.f32 0.0, %v2955
      %v2957 = vpop.f32.mrf.mxu0
      %v2958 = vadd.f32 0.0, %v2957
      %2959 = vmatmul.bf16.gmra.mxu0 %v1955
      %v2960 = vpop.f32.mrf.mxu0
      %v2961 = vadd.f32 0.0, %v2960
      %v2962 = vpop.f32.mrf.mxu0
      %v2963 = vadd.f32 0.0, %v2962
      %2964 = vmatmul.bf16.gmra.mxu0 %v1958
      %v2965 = vpop.f32.mrf.mxu0
      %v2966 = vadd.f32 0.0, %v2965
      %v2967 = vpop.f32.mrf.mxu0
      %v2968 = vadd.f32 0.0, %v2967
      %2969 = vmatmul.bf16.gmra.mxu0 %v1961
      %v2970 = vpop.f32.mrf.mxu0
      %v2971 = vadd.f32 0.0, %v2970
      %v2972 = vpop.f32.mrf.mxu0
      %v2973 = vadd.f32 0.0, %v2972
      %2974 = vmatmul.bf16.gmra.mxu0 %v1964
      %v2975 = vpop.f32.mrf.mxu0
      %v2976 = vadd.f32 0.0, %v2975
      %v2977 = vpop.f32.mrf.mxu0
      %v2978 = vadd.f32 0.0, %v2977
      %2979 = vmatmul.bf16.gmra.mxu0 %v1967
      %v2980 = vpop.f32.mrf.mxu0
      %v2981 = vadd.f32 0.0, %v2980
      %v2982 = vpop.f32.mrf.mxu0
      %v2983 = vadd.f32 0.0, %v2982
      %2984 = vmatmul.bf16.gmra.mxu0 %v2893
      %v2985 = vpop.f32.mrf.mxu0
      %v2986 = vadd.f32 0.0, %v2985
      %v2987 = vpop.f32.mrf.mxu0
      %v2988 = vadd.f32 0.0, %v2987
      %2989 = vmatmul.bf16.gmra.mxu0 %v1973
      %v2990 = vpop.f32.mrf.mxu0
      %v2991 = vadd.f32 0.0, %v2990
      %v2992 = vpop.f32.mrf.mxu0
      %v2993 = vadd.f32 0.0, %v2992
      %2994 = vmatmul.bf16.gmra.mxu0 %v1976
      %v2995 = vpop.f32.mrf.mxu0
      %v2996 = vadd.f32 0.0, %v2995
      %v2997 = vpop.f32.mrf.mxu0
      %v2998 = vadd.f32 0.0, %v2997
      %2999 = vmatmul.bf16.gmra.mxu0 %v1979
      %v3000 = vpop.f32.mrf.mxu0
      %v3001 = vadd.f32 0.0, %v3000
      %v3002 = vpop.f32.mrf.mxu0
      %v3003 = vadd.f32 0.0, %v3002
      %3004 = vmatmul.bf16.gmra.mxu0 %v1982
      %v3005 = vpop.f32.mrf.mxu0
      %v3006 = vadd.f32 0.0, %v3005
      %v3007 = vpop.f32.mrf.mxu0
      %v3008 = vadd.f32 0.0, %v3007
      %3009 = vmatmul.bf16.gmra.mxu0 %v1985
      %v3010 = vpop.f32.mrf.mxu0
      %v3011 = vadd.f32 0.0, %v3010
      %v3012 = vpop.f32.mrf.mxu0
      %v3013 = vadd.f32 0.0, %v3012
      %3014 = vmatmul.bf16.gmra.mxu0 %v1988
      %v3015 = vpop.f32.mrf.mxu0
      %v3016 = vadd.f32 0.0, %v3015
      %v3017 = vpop.f32.mrf.mxu0
      %v3018 = vadd.f32 0.0, %v3017
      %3019 = vmatmul.bf16.gmra.mxu0 %v1991
      %v3020 = vpop.f32.mrf.mxu0
      %v3021 = vadd.f32 0.0, %v3020
      %v3022 = vpop.f32.mrf.mxu0
      %v3023 = vadd.f32 0.0, %v3022
      %3024 = vmatmul.bf16.gmra.mxu0 %v1994
      %v3025 = vpop.f32.mrf.mxu0
      %v3026 = vadd.f32 0.0, %v3025
      %v3027 = vpop.f32.mrf.mxu0
      %v3028 = vadd.f32 0.0, %v3027
      %3029 = vmatmul.bf16.gmra.mxu0 %v1997
      %v3030 = vpop.f32.mrf.mxu0
      %v3031 = vadd.f32 0.0, %v3030
      %v3032 = vpop.f32.mrf.mxu0
      %v3033 = vadd.f32 0.0, %v3032
      %3034 = vmatmul.bf16.gmra.mxu0 %v2000
      %v3035 = vpop.f32.mrf.mxu0
      %v3036 = vadd.f32 0.0, %v3035
      %v3037 = vpop.f32.mrf.mxu0
      %v3038 = vadd.f32 0.0, %v3037
      %3039 = vmatmul.bf16.gmra.mxu0 %v2003
      %v3040 = vpop.f32.mrf.mxu0
      %v3041 = vadd.f32 0.0, %v3040
      %v3042 = vpop.f32.mrf.mxu0
      %v3043 = vadd.f32 0.0, %v3042
      %3044 = vmatmul.bf16.gmra.mxu0 %v2006
      %v3045 = vpop.f32.mrf.mxu0
      %v3046 = vadd.f32 0.0, %v3045
      %v3047 = vpop.f32.mrf.mxu0
      %v3048 = vadd.f32 0.0, %v3047
      %3049 = vmatmul.bf16.gmra.mxu0 %v2009
      %v3050 = vpop.f32.mrf.mxu0
      %v3051 = vadd.f32 0.0, %v3050
      %v3052 = vpop.f32.mrf.mxu0
      %v3053 = vadd.f32 0.0, %v3052
      %3054 = vmatmul.bf16.gmra.mxu0 %v2012
      %v3055 = vpop.f32.mrf.mxu0
      %v3056 = vadd.f32 0.0, %v3055
      %v3057 = vpop.f32.mrf.mxu0
      %v3058 = vadd.f32 0.0, %v3057
      %3059 = vmatmul.bf16.gmra.mxu0 %v2015
      %v3060 = vpop.f32.mrf.mxu0
      %v3061 = vadd.f32 0.0, %v3060
      %v3062 = vpop.f32.mrf.mxu0
      %v3063 = vadd.f32 0.0, %v3062
      %3064 = vmatmul.bf16.gmra.mxu0 %v2896
      %v3065 = vpop.f32.mrf.mxu0
      %v3066 = vadd.f32 0.0, %v3065
      %v3067 = vpop.f32.mrf.mxu0
      %v3068 = vadd.f32 0.0, %v3067
      %3069 = vdwg.mxu0
      %v3070 = vadd.f32 %v2813, %v2911
      %v3071 = vadd.f32 %v2814, %v2913
      %v3072 = vadd.f32 %v2815, %v2916
      %v3073 = vadd.f32 %v2816, %v2918
      %v3074 = vadd.f32 %v2817, %v2921
      %v3075 = vadd.f32 %v2818, %v2923
      %v3076 = vadd.f32 %v2819, %v2926
      %v3077 = vadd.f32 %v2820, %v2928
      %v3078 = vadd.f32 %v2821, %v2931
      %v3079 = vadd.f32 %v2822, %v2933
      %v3080 = vadd.f32 %v2823, %v2936
      %v3081 = vadd.f32 %v2824, %v2938
      %v3082 = vadd.f32 %v2825, %v2941
      %v3083 = vadd.f32 %v2826, %v2943
      %v3084 = vadd.f32 %v2827, %v2946
      %v3085 = vadd.f32 %v2828, %v2948
      %v3086 = vadd.f32 %v2829, %v2951
      %v3087 = vadd.f32 %v2830, %v2953
      %v3088 = vadd.f32 %v2831, %v2956
      %v3089 = vadd.f32 %v2832, %v2958
      %v3090 = vadd.f32 %v2833, %v2961
      %v3091 = vadd.f32 %v2834, %v2963
      %v3092 = vadd.f32 %v2835, %v2966
      %v3093 = vadd.f32 %v2836, %v2968
      %v3094 = vadd.f32 %v2837, %v2971
      %v3095 = vadd.f32 %v2838, %v2973
      %v3096 = vadd.f32 %v2839, %v2976
      %v3097 = vadd.f32 %v2840, %v2978
      %v3098 = vadd.f32 %v2841, %v2981
      %v3099 = vadd.f32 %v2842, %v2983
      %v3100 = vadd.f32 %v2843, %v2986
      %v3101 = vadd.f32 %v2844, %v2988
      %v3102 = vadd.f32 %v2845, %v2991
      %v3103 = vadd.f32 %v2846, %v2993
      %v3104 = vadd.f32 %v2847, %v2996
      %v3105 = vadd.f32 %v2848, %v2998
      %v3106 = vadd.f32 %v2849, %v3001
      %v3107 = vadd.f32 %v2850, %v3003
      %v3108 = vadd.f32 %v2851, %v3006
      %v3109 = vadd.f32 %v2852, %v3008
      %v3110 = vadd.f32 %v2853, %v3011
      %v3111 = vadd.f32 %v2854, %v3013
      %v3112 = vadd.f32 %v2855, %v3016
      %v3113 = vadd.f32 %v2856, %v3018
      %v3114 = vadd.f32 %v2857, %v3021
      %v3115 = vadd.f32 %v2858, %v3023
      %v3116 = vadd.f32 %v2859, %v3026
      %v3117 = vadd.f32 %v2860, %v3028
      %v3118 = vadd.f32 %v2861, %v3031
      %v3119 = vadd.f32 %v2862, %v3033
      %v3120 = vadd.f32 %v2863, %v3036
      %v3121 = vadd.f32 %v2864, %v3038
      %v3122 = vadd.f32 %v2865, %v3041
      %v3123 = vadd.f32 %v2866, %v3043
      %v3124 = vadd.f32 %v2867, %v3046
      %v3125 = vadd.f32 %v2868, %v3048
      %v3126 = vadd.f32 %v2869, %v3051
      %v3127 = vadd.f32 %v2870, %v3053
      %v3128 = vadd.f32 %v2871, %v3056
      %v3129 = vadd.f32 %v2872, %v3058
      %v3130 = vadd.f32 %v2873, %v3061
      %v3131 = vadd.f32 %v2874, %v3063
      %v3132 = vadd.f32 %v2875, %v3066
      %v3133 = vadd.f32 %v2876, %v3068
      %v3135 = vshrl.u32 %v558, 16
      %v3137 = vrot.slane %v3135, 4
      %v3138 = vshll.u32 %v558, 16
      %v3140 = vrot.slane %v3138, 5
      %v3141 = vor.u32 %v3137, %v3140
      %v3142 = vrot.slane %v3141, 4
      %v3144 = vshll.u32 %v559, 16
      %v3146 = vrot.slane %v3144, 5
      %v3147 = vsel %vm621, %v3142, %v3146
      %v3148 = vshrl.u32 %v559, 16
      %v3150 = vrot.slane %v3148, 4
      %v3151 = vor.u32 %v3150, %v3146
      %v3152 = vrot.slane %v3151, 4
      %v3154 = vshll.u32 %v560, 16
      %v3156 = vrot.slane %v3154, 5
      %v3157 = vsel %vm621, %v3152, %v3156
      %v3159 = vshrl.u32 %v612, 16
      %v3161 = vrot.slane %v3159, 4
      %v3162 = vshll.u32 %v612, 16
      %v3164 = vrot.slane %v3162, 5
      %v3165 = vor.u32 %v3161, %v3164
      %v3166 = vrot.slane %v3165, 4
      %v3168 = vshll.u32 %v613, 16
      %v3170 = vrot.slane %v3168, 5
      %v3171 = vsel %vm621, %v3166, %v3170
      %v3172 = vshrl.u32 %v613, 16
      %v3174 = vrot.slane %v3172, 4
      %v3175 = vor.u32 %v3174, %v3170
      %v3176 = vrot.slane %v3175, 4
      %v3178 = vshll.u32 %v614, 16
      %v3180 = vrot.slane %v3178, 5
      %v3181 = vsel %vm621, %v3176, %v3180
      %v3182 = vld [vmem:[%s1 + $0x8] sm:$0x3]
      %v3183 = vunpack.c.l.b16 %v3147
      %v3184 = vunpack.c.l.b16 %v3157
      %v3185 = vunpack.c.l.b16 %v3171
      %v3186 = vunpack.c.l.b16 %v3181
      %v3187 = vpack.c.b16 %v3184, %v3183
      %v3188 = vpack.c.b16 %v3186, %v3185
      %v3190 = vsel %vm1491, %v3187, 0
      %v3193 = vsel %vm1491, %v3188, 0
      %v3196 = vsel %vm1588, %v3182, 0
      %3198 = vmatpush.bf16.msra.mxu0 0
      %3199 = vmatpush.bf16.msra.mxu0 0
      %3200 = vmatpush.bf16.msra.mxu0 0
      %3201 = vmatpush.bf16.msra.mxu0 0
      %3202 = vmatpush.bf16.msra.mxu0 0
      %3203 = vmatpush.bf16.msra.mxu0 0
      %3204 = vmatpush.bf16.msra.mxu0 0
      %3205 = vmatpush.bf16.msra.mxu0 %v3196
      %3206 = vmatmul.bf16.gmra.mxu0 %v1496
      %v3207 = vpop.f32.mrf.mxu0
      %v3208 = vadd.f32 0.0, %v3207
      %v3209 = vpop.f32.mrf.mxu0
      %v3210 = vadd.f32 0.0, %v3209
      %3211 = vmatmul.bf16.gmra.mxu0 %v1499
      %v3212 = vpop.f32.mrf.mxu0
      %v3213 = vadd.f32 0.0, %v3212
      %v3214 = vpop.f32.mrf.mxu0
      %v3215 = vadd.f32 0.0, %v3214
      %3216 = vmatmul.bf16.gmra.mxu0 %v1502
      %v3217 = vpop.f32.mrf.mxu0
      %v3218 = vadd.f32 0.0, %v3217
      %v3219 = vpop.f32.mrf.mxu0
      %v3220 = vadd.f32 0.0, %v3219
      %3221 = vmatmul.bf16.gmra.mxu0 %v1505
      %v3222 = vpop.f32.mrf.mxu0
      %v3223 = vadd.f32 0.0, %v3222
      %v3224 = vpop.f32.mrf.mxu0
      %v3225 = vadd.f32 0.0, %v3224
      %3226 = vmatmul.bf16.gmra.mxu0 %v1508
      %v3227 = vpop.f32.mrf.mxu0
      %v3228 = vadd.f32 0.0, %v3227
      %v3229 = vpop.f32.mrf.mxu0
      %v3230 = vadd.f32 0.0, %v3229
      %3231 = vmatmul.bf16.gmra.mxu0 %v1511
      %v3232 = vpop.f32.mrf.mxu0
      %v3233 = vadd.f32 0.0, %v3232
      %v3234 = vpop.f32.mrf.mxu0
      %v3235 = vadd.f32 0.0, %v3234
      %3236 = vmatmul.bf16.gmra.mxu0 %v1514
      %v3237 = vpop.f32.mrf.mxu0
      %v3238 = vadd.f32 0.0, %v3237
      %v3239 = vpop.f32.mrf.mxu0
      %v3240 = vadd.f32 0.0, %v3239
      %3241 = vmatmul.bf16.gmra.mxu0 %v1517
      %v3242 = vpop.f32.mrf.mxu0
      %v3243 = vadd.f32 0.0, %v3242
      %v3244 = vpop.f32.mrf.mxu0
      %v3245 = vadd.f32 0.0, %v3244
      %3246 = vmatmul.bf16.gmra.mxu0 %v1520
      %v3247 = vpop.f32.mrf.mxu0
      %v3248 = vadd.f32 0.0, %v3247
      %v3249 = vpop.f32.mrf.mxu0
      %v3250 = vadd.f32 0.0, %v3249
      %3251 = vmatmul.bf16.gmra.mxu0 %v1523
      %v3252 = vpop.f32.mrf.mxu0
      %v3253 = vadd.f32 0.0, %v3252
      %v3254 = vpop.f32.mrf.mxu0
      %v3255 = vadd.f32 0.0, %v3254
      %3256 = vmatmul.bf16.gmra.mxu0 %v1526
      %v3257 = vpop.f32.mrf.mxu0
      %v3258 = vadd.f32 0.0, %v3257
      %v3259 = vpop.f32.mrf.mxu0
      %v3260 = vadd.f32 0.0, %v3259
      %3261 = vmatmul.bf16.gmra.mxu0 %v1529
      %v3262 = vpop.f32.mrf.mxu0
      %v3263 = vadd.f32 0.0, %v3262
      %v3264 = vpop.f32.mrf.mxu0
      %v3265 = vadd.f32 0.0, %v3264
      %3266 = vmatmul.bf16.gmra.mxu0 %v1532
      %v3267 = vpop.f32.mrf.mxu0
      %v3268 = vadd.f32 0.0, %v3267
      %v3269 = vpop.f32.mrf.mxu0
      %v3270 = vadd.f32 0.0, %v3269
      %3271 = vmatmul.bf16.gmra.mxu0 %v1535
      %v3272 = vpop.f32.mrf.mxu0
      %v3273 = vadd.f32 0.0, %v3272
      %v3274 = vpop.f32.mrf.mxu0
      %v3275 = vadd.f32 0.0, %v3274
      %3276 = vmatmul.bf16.gmra.mxu0 %v1538
      %v3277 = vpop.f32.mrf.mxu0
      %v3278 = vadd.f32 0.0, %v3277
      %v3279 = vpop.f32.mrf.mxu0
      %v3280 = vadd.f32 0.0, %v3279
      %3281 = vmatmul.bf16.gmra.mxu0 %v3190
      %v3282 = vpop.f32.mrf.mxu0
      %v3283 = vadd.f32 0.0, %v3282
      %v3284 = vpop.f32.mrf.mxu0
      %v3285 = vadd.f32 0.0, %v3284
      %3286 = vmatmul.bf16.gmra.mxu0 %v1544
      %v3287 = vpop.f32.mrf.mxu0
      %v3288 = vadd.f32 0.0, %v3287
      %v3289 = vpop.f32.mrf.mxu0
      %v3290 = vadd.f32 0.0, %v3289
      %3291 = vmatmul.bf16.gmra.mxu0 %v1547
      %v3292 = vpop.f32.mrf.mxu0
      %v3293 = vadd.f32 0.0, %v3292
      %v3294 = vpop.f32.mrf.mxu0
      %v3295 = vadd.f32 0.0, %v3294
      %3296 = vmatmul.bf16.gmra.mxu0 %v1550
      %v3297 = vpop.f32.mrf.mxu0
      %v3298 = vadd.f32 0.0, %v3297
      %v3299 = vpop.f32.mrf.mxu0
      %v3300 = vadd.f32 0.0, %v3299
      %3301 = vmatmul.bf16.gmra.mxu0 %v1553
      %v3302 = vpop.f32.mrf.mxu0
      %v3303 = vadd.f32 0.0, %v3302
      %v3304 = vpop.f32.mrf.mxu0
      %v3305 = vadd.f32 0.0, %v3304
      %3306 = vmatmul.bf16.gmra.mxu0 %v1556
      %v3307 = vpop.f32.mrf.mxu0
      %v3308 = vadd.f32 0.0, %v3307
      %v3309 = vpop.f32.mrf.mxu0
      %v3310 = vadd.f32 0.0, %v3309
      %3311 = vmatmul.bf16.gmra.mxu0 %v1559
      %v3312 = vpop.f32.mrf.mxu0
      %v3313 = vadd.f32 0.0, %v3312
      %v3314 = vpop.f32.mrf.mxu0
      %v3315 = vadd.f32 0.0, %v3314
      %3316 = vmatmul.bf16.gmra.mxu0 %v1562
      %v3317 = vpop.f32.mrf.mxu0
      %v3318 = vadd.f32 0.0, %v3317
      %v3319 = vpop.f32.mrf.mxu0
      %v3320 = vadd.f32 0.0, %v3319
      %3321 = vmatmul.bf16.gmra.mxu0 %v1565
      %v3322 = vpop.f32.mrf.mxu0
      %v3323 = vadd.f32 0.0, %v3322
      %v3324 = vpop.f32.mrf.mxu0
      %v3325 = vadd.f32 0.0, %v3324
      %3326 = vmatmul.bf16.gmra.mxu0 %v1568
      %v3327 = vpop.f32.mrf.mxu0
      %v3328 = vadd.f32 0.0, %v3327
      %v3329 = vpop.f32.mrf.mxu0
      %v3330 = vadd.f32 0.0, %v3329
      %3331 = vmatmul.bf16.gmra.mxu0 %v1571
      %v3332 = vpop.f32.mrf.mxu0
      %v3333 = vadd.f32 0.0, %v3332
      %v3334 = vpop.f32.mrf.mxu0
      %v3335 = vadd.f32 0.0, %v3334
      %3336 = vmatmul.bf16.gmra.mxu0 %v1574
      %v3337 = vpop.f32.mrf.mxu0
      %v3338 = vadd.f32 0.0, %v3337
      %v3339 = vpop.f32.mrf.mxu0
      %v3340 = vadd.f32 0.0, %v3339
      %3341 = vmatmul.bf16.gmra.mxu0 %v1577
      %v3342 = vpop.f32.mrf.mxu0
      %v3343 = vadd.f32 0.0, %v3342
      %v3344 = vpop.f32.mrf.mxu0
      %v3345 = vadd.f32 0.0, %v3344
      %3346 = vmatmul.bf16.gmra.mxu0 %v1580
      %v3347 = vpop.f32.mrf.mxu0
      %v3348 = vadd.f32 0.0, %v3347
      %v3349 = vpop.f32.mrf.mxu0
      %v3350 = vadd.f32 0.0, %v3349
      %3351 = vmatmul.bf16.gmra.mxu0 %v1583
      %v3352 = vpop.f32.mrf.mxu0
      %v3353 = vadd.f32 0.0, %v3352
      %v3354 = vpop.f32.mrf.mxu0
      %v3355 = vadd.f32 0.0, %v3354
      %3356 = vmatmul.bf16.gmra.mxu0 %v1586
      %v3357 = vpop.f32.mrf.mxu0
      %v3358 = vadd.f32 0.0, %v3357
      %v3359 = vpop.f32.mrf.mxu0
      %v3360 = vadd.f32 0.0, %v3359
      %3361 = vmatmul.bf16.gmra.mxu0 %v3193
      %v3362 = vpop.f32.mrf.mxu0
      %v3363 = vadd.f32 0.0, %v3362
      %v3364 = vpop.f32.mrf.mxu0
      %v3365 = vadd.f32 0.0, %v3364
      %3366 = vdwg.mxu0
      %v3367 = vadd.f32 %v3070, %v3208
      %v3368 = vadd.f32 %v3071, %v3210
      %v3369 = vadd.f32 %v3072, %v3213
      %v3370 = vadd.f32 %v3073, %v3215
      %v3371 = vadd.f32 %v3074, %v3218
      %v3372 = vadd.f32 %v3075, %v3220
      %v3373 = vadd.f32 %v3076, %v3223
      %v3374 = vadd.f32 %v3077, %v3225
      %v3375 = vadd.f32 %v3078, %v3228
      %v3376 = vadd.f32 %v3079, %v3230
      %v3377 = vadd.f32 %v3080, %v3233
      %v3378 = vadd.f32 %v3081, %v3235
      %v3379 = vadd.f32 %v3082, %v3238
      %v3380 = vadd.f32 %v3083, %v3240
      %v3381 = vadd.f32 %v3084, %v3243
      %v3382 = vadd.f32 %v3085, %v3245
      %v3383 = vadd.f32 %v3086, %v3248
      %v3384 = vadd.f32 %v3087, %v3250
      %v3385 = vadd.f32 %v3088, %v3253
      %v3386 = vadd.f32 %v3089, %v3255
      %v3387 = vadd.f32 %v3090, %v3258
      %v3388 = vadd.f32 %v3091, %v3260
      %v3389 = vadd.f32 %v3092, %v3263
      %v3390 = vadd.f32 %v3093, %v3265
      %v3391 = vadd.f32 %v3094, %v3268
      %v3392 = vadd.f32 %v3095, %v3270
      %v3393 = vadd.f32 %v3096, %v3273
      %v3394 = vadd.f32 %v3097, %v3275
      %v3395 = vadd.f32 %v3098, %v3278
      %v3396 = vadd.f32 %v3099, %v3280
      %v3397 = vadd.f32 %v3100, %v3283
      %v3398 = vadd.f32 %v3101, %v3285
      %v3399 = vadd.f32 %v3102, %v3288
      %v3400 = vadd.f32 %v3103, %v3290
      %v3401 = vadd.f32 %v3104, %v3293
      %v3402 = vadd.f32 %v3105, %v3295
      %v3403 = vadd.f32 %v3106, %v3298
      %v3404 = vadd.f32 %v3107, %v3300
      %v3405 = vadd.f32 %v3108, %v3303
      %v3406 = vadd.f32 %v3109, %v3305
      %v3407 = vadd.f32 %v3110, %v3308
      %v3408 = vadd.f32 %v3111, %v3310
      %v3409 = vadd.f32 %v3112, %v3313
      %v3410 = vadd.f32 %v3113, %v3315
      %v3411 = vadd.f32 %v3114, %v3318
      %v3412 = vadd.f32 %v3115, %v3320
      %v3413 = vadd.f32 %v3116, %v3323
      %v3414 = vadd.f32 %v3117, %v3325
      %v3415 = vadd.f32 %v3118, %v3328
      %v3416 = vadd.f32 %v3119, %v3330
      %v3417 = vadd.f32 %v3120, %v3333
      %v3418 = vadd.f32 %v3121, %v3335
      %v3419 = vadd.f32 %v3122, %v3338
      %v3420 = vadd.f32 %v3123, %v3340
      %v3421 = vadd.f32 %v3124, %v3343
      %v3422 = vadd.f32 %v3125, %v3345
      %v3423 = vadd.f32 %v3126, %v3348
      %v3424 = vadd.f32 %v3127, %v3350
      %v3425 = vadd.f32 %v3128, %v3353
      %v3426 = vadd.f32 %v3129, %v3355
      %v3427 = vadd.f32 %v3130, %v3358
      %v3428 = vadd.f32 %v3131, %v3360
      %v3429 = vadd.f32 %v3132, %v3363
      %v3430 = vadd.f32 %v3133, %v3365
      %v3433 = vrot.slane %v558, 5
      %v3434 = vrot.slane %v3433, 4
      %v3435 = vrot.slane %v559, 5
      %v3436 = vsel %vm2223, %v3434, %v3435
      %v3437 = vrot.slane %v3435, 4
      %v3438 = vrot.slane %v560, 5
      %v3439 = vsel %vm2223, %v3437, %v3438
      %v3440 = vrot.slane %v612, 5
      %v3441 = vrot.slane %v3440, 4
      %v3442 = vrot.slane %v613, 5
      %v3443 = vsel %vm2223, %v3441, %v3442
      %v3444 = vrot.slane %v3442, 4
      %v3445 = vrot.slane %v614, 5
      %v3446 = vsel %vm2223, %v3444, %v3445
      %v3447 = vld [vmem:[%s1 + $0x8] sm:$0xc]
      %v3448 = vunpack.c.l.b16 %v3436
      %v3449 = vunpack.c.l.b16 %v3439
      %v3450 = vunpack.c.l.b16 %v3443
      %v3451 = vunpack.c.l.b16 %v3446
      %v3452 = vpack.c.b16 %v3449, %v3448
      %v3453 = vpack.c.b16 %v3451, %v3450
      %v3455 = vunpack.c.l.b16 %v3447
      %v3456 = vpack.c.b16 %v3455, %v3455
      %v3457 = vrot.slane %v3456, 2
      %v3459 = vsel %vm1491, %v3452, 0
      %v3462 = vsel %vm1491, %v3453, 0
      %v3465 = vsel %vm1588, %v3457, 0
      %3467 = vmatpush.bf16.msra.mxu0 0
      %3468 = vmatpush.bf16.msra.mxu0 0
      %3469 = vmatpush.bf16.msra.mxu0 0
      %3470 = vmatpush.bf16.msra.mxu0 0
      %3471 = vmatpush.bf16.msra.mxu0 0
      %3472 = vmatpush.bf16.msra.mxu0 0
      %3473 = vmatpush.bf16.msra.mxu0 0
      %3474 = vmatpush.bf16.msra.mxu0 %v3465
      %3475 = vmatmul.bf16.gmra.mxu0 %v2549
      %v3476 = vpop.f32.mrf.mxu0
      %v3477 = vadd.f32 0.0, %v3476
      %v3478 = vpop.f32.mrf.mxu0
      %v3479 = vadd.f32 0.0, %v3478
      %3480 = vmatmul.bf16.gmra.mxu0 %v2552
      %v3481 = vpop.f32.mrf.mxu0
      %v3482 = vadd.f32 0.0, %v3481
      %v3483 = vpop.f32.mrf.mxu0
      %v3484 = vadd.f32 0.0, %v3483
      %3485 = vmatmul.bf16.gmra.mxu0 %v2555
      %v3486 = vpop.f32.mrf.mxu0
      %v3487 = vadd.f32 0.0, %v3486
      %v3488 = vpop.f32.mrf.mxu0
      %v3489 = vadd.f32 0.0, %v3488
      %3490 = vmatmul.bf16.gmra.mxu0 %v2558
      %v3491 = vpop.f32.mrf.mxu0
      %v3492 = vadd.f32 0.0, %v3491
      %v3493 = vpop.f32.mrf.mxu0
      %v3494 = vadd.f32 0.0, %v3493
      %3495 = vmatmul.bf16.gmra.mxu0 %v2561
      %v3496 = vpop.f32.mrf.mxu0
      %v3497 = vadd.f32 0.0, %v3496
      %v3498 = vpop.f32.mrf.mxu0
      %v3499 = vadd.f32 0.0, %v3498
      %3500 = vmatmul.bf16.gmra.mxu0 %v2564
      %v3501 = vpop.f32.mrf.mxu0
      %v3502 = vadd.f32 0.0, %v3501
      %v3503 = vpop.f32.mrf.mxu0
      %v3504 = vadd.f32 0.0, %v3503
      %3505 = vmatmul.bf16.gmra.mxu0 %v2567
      %v3506 = vpop.f32.mrf.mxu0
      %v3507 = vadd.f32 0.0, %v3506
      %v3508 = vpop.f32.mrf.mxu0
      %v3509 = vadd.f32 0.0, %v3508
      %3510 = vmatmul.bf16.gmra.mxu0 %v2570
      %v3511 = vpop.f32.mrf.mxu0
      %v3512 = vadd.f32 0.0, %v3511
      %v3513 = vpop.f32.mrf.mxu0
      %v3514 = vadd.f32 0.0, %v3513
      %3515 = vmatmul.bf16.gmra.mxu0 %v2573
      %v3516 = vpop.f32.mrf.mxu0
      %v3517 = vadd.f32 0.0, %v3516
      %v3518 = vpop.f32.mrf.mxu0
      %v3519 = vadd.f32 0.0, %v3518
      %3520 = vmatmul.bf16.gmra.mxu0 %v2576
      %v3521 = vpop.f32.mrf.mxu0
      %v3522 = vadd.f32 0.0, %v3521
      %v3523 = vpop.f32.mrf.mxu0
      %v3524 = vadd.f32 0.0, %v3523
      %3525 = vmatmul.bf16.gmra.mxu0 %v2579
      %v3526 = vpop.f32.mrf.mxu0
      %v3527 = vadd.f32 0.0, %v3526
      %v3528 = vpop.f32.mrf.mxu0
      %v3529 = vadd.f32 0.0, %v3528
      %3530 = vmatmul.bf16.gmra.mxu0 %v2582
      %v3531 = vpop.f32.mrf.mxu0
      %v3532 = vadd.f32 0.0, %v3531
      %v3533 = vpop.f32.mrf.mxu0
      %v3534 = vadd.f32 0.0, %v3533
      %3535 = vmatmul.bf16.gmra.mxu0 %v2585
      %v3536 = vpop.f32.mrf.mxu0
      %v3537 = vadd.f32 0.0, %v3536
      %v3538 = vpop.f32.mrf.mxu0
      %v3539 = vadd.f32 0.0, %v3538
      %3540 = vmatmul.bf16.gmra.mxu0 %v2588
      %v3541 = vpop.f32.mrf.mxu0
      %v3542 = vadd.f32 0.0, %v3541
      %v3543 = vpop.f32.mrf.mxu0
      %v3544 = vadd.f32 0.0, %v3543
      %3545 = vmatmul.bf16.gmra.mxu0 %v2591
      %v3546 = vpop.f32.mrf.mxu0
      %v3547 = vadd.f32 0.0, %v3546
      %v3548 = vpop.f32.mrf.mxu0
      %v3549 = vadd.f32 0.0, %v3548
      %3550 = vmatmul.bf16.gmra.mxu0 %v3459
      %v3551 = vpop.f32.mrf.mxu0
      %v3552 = vadd.f32 0.0, %v3551
      %v3553 = vpop.f32.mrf.mxu0
      %v3554 = vadd.f32 0.0, %v3553
      %3555 = vmatmul.bf16.gmra.mxu0 %v2597
      %v3556 = vpop.f32.mrf.mxu0
      %v3557 = vadd.f32 0.0, %v3556
      %v3558 = vpop.f32.mrf.mxu0
      %v3559 = vadd.f32 0.0, %v3558
      %3560 = vmatmul.bf16.gmra.mxu0 %v2600
      %v3561 = vpop.f32.mrf.mxu0
      %v3562 = vadd.f32 0.0, %v3561
      %v3563 = vpop.f32.mrf.mxu0
      %v3564 = vadd.f32 0.0, %v3563
      %3565 = vmatmul.bf16.gmra.mxu0 %v2603
      %v3566 = vpop.f32.mrf.mxu0
      %v3567 = vadd.f32 0.0, %v3566
      %v3568 = vpop.f32.mrf.mxu0
      %v3569 = vadd.f32 0.0, %v3568
      %3570 = vmatmul.bf16.gmra.mxu0 %v2606
      %v3571 = vpop.f32.mrf.mxu0
      %v3572 = vadd.f32 0.0, %v3571
      %v3573 = vpop.f32.mrf.mxu0
      %v3574 = vadd.f32 0.0, %v3573
      %3575 = vmatmul.bf16.gmra.mxu0 %v2609
      %v3576 = vpop.f32.mrf.mxu0
      %v3577 = vadd.f32 0.0, %v3576
      %v3578 = vpop.f32.mrf.mxu0
      %v3579 = vadd.f32 0.0, %v3578
      %3580 = vmatmul.bf16.gmra.mxu0 %v2612
      %v3581 = vpop.f32.mrf.mxu0
      %v3582 = vadd.f32 0.0, %v3581
      %v3583 = vpop.f32.mrf.mxu0
      %v3584 = vadd.f32 0.0, %v3583
      %3585 = vmatmul.bf16.gmra.mxu0 %v2615
      %v3586 = vpop.f32.mrf.mxu0
      %v3587 = vadd.f32 0.0, %v3586
      %v3588 = vpop.f32.mrf.mxu0
      %v3589 = vadd.f32 0.0, %v3588
      %3590 = vmatmul.bf16.gmra.mxu0 %v2618
      %v3591 = vpop.f32.mrf.mxu0
      %v3592 = vadd.f32 0.0, %v3591
      %v3593 = vpop.f32.mrf.mxu0
      %v3594 = vadd.f32 0.0, %v3593
      %3595 = vmatmul.bf16.gmra.mxu0 %v2621
      %v3596 = vpop.f32.mrf.mxu0
      %v3597 = vadd.f32 0.0, %v3596
      %v3598 = vpop.f32.mrf.mxu0
      %v3599 = vadd.f32 0.0, %v3598
      %3600 = vmatmul.bf16.gmra.mxu0 %v2624
      %v3601 = vpop.f32.mrf.mxu0
      %v3602 = vadd.f32 0.0, %v3601
      %v3603 = vpop.f32.mrf.mxu0
      %v3604 = vadd.f32 0.0, %v3603
      %3605 = vmatmul.bf16.gmra.mxu0 %v2627
      %v3606 = vpop.f32.mrf.mxu0
      %v3607 = vadd.f32 0.0, %v3606
      %v3608 = vpop.f32.mrf.mxu0
      %v3609 = vadd.f32 0.0, %v3608
      %3610 = vmatmul.bf16.gmra.mxu0 %v2630
      %v3611 = vpop.f32.mrf.mxu0
      %v3612 = vadd.f32 0.0, %v3611
      %v3613 = vpop.f32.mrf.mxu0
      %v3614 = vadd.f32 0.0, %v3613
      %3615 = vmatmul.bf16.gmra.mxu0 %v2633
      %v3616 = vpop.f32.mrf.mxu0
      %v3617 = vadd.f32 0.0, %v3616
      %v3618 = vpop.f32.mrf.mxu0
      %v3619 = vadd.f32 0.0, %v3618
      %3620 = vmatmul.bf16.gmra.mxu0 %v2636
      %v3621 = vpop.f32.mrf.mxu0
      %v3622 = vadd.f32 0.0, %v3621
      %v3623 = vpop.f32.mrf.mxu0
      %v3624 = vadd.f32 0.0, %v3623
      %3625 = vmatmul.bf16.gmra.mxu0 %v2639
      %v3626 = vpop.f32.mrf.mxu0
      %v3627 = vadd.f32 0.0, %v3626
      %v3628 = vpop.f32.mrf.mxu0
      %v3629 = vadd.f32 0.0, %v3628
      %3630 = vmatmul.bf16.gmra.mxu0 %v3462
      %v3631 = vpop.f32.mrf.mxu0
      %v3632 = vadd.f32 0.0, %v3631
      %v3633 = vpop.f32.mrf.mxu0
      %v3634 = vadd.f32 0.0, %v3633
      %3635 = vdwg.mxu0
      %v3636 = vadd.f32 %v3367, %v3477
      %v3637 = vadd.f32 %v3368, %v3479
      %v3638 = vadd.f32 %v3369, %v3482
      %v3639 = vadd.f32 %v3370, %v3484
      %v3640 = vadd.f32 %v3371, %v3487
      %v3641 = vadd.f32 %v3372, %v3489
      %v3642 = vadd.f32 %v3373, %v3492
      %v3643 = vadd.f32 %v3374, %v3494
      %v3644 = vadd.f32 %v3375, %v3497
      %v3645 = vadd.f32 %v3376, %v3499
      %v3646 = vadd.f32 %v3377, %v3502
      %v3647 = vadd.f32 %v3378, %v3504
      %v3648 = vadd.f32 %v3379, %v3507
      %v3649 = vadd.f32 %v3380, %v3509
      %v3650 = vadd.f32 %v3381, %v3512
      %v3651 = vadd.f32 %v3382, %v3514
      %v3652 = vadd.f32 %v3383, %v3517
      %v3653 = vadd.f32 %v3384, %v3519
      %v3654 = vadd.f32 %v3385, %v3522
      %v3655 = vadd.f32 %v3386, %v3524
      %v3656 = vadd.f32 %v3387, %v3527
      %v3657 = vadd.f32 %v3388, %v3529
      %v3658 = vadd.f32 %v3389, %v3532
      %v3659 = vadd.f32 %v3390, %v3534
      %v3660 = vadd.f32 %v3391, %v3537
      %v3661 = vadd.f32 %v3392, %v3539
      %v3662 = vadd.f32 %v3393, %v3542
      %v3663 = vadd.f32 %v3394, %v3544
      %v3664 = vadd.f32 %v3395, %v3547
      %v3665 = vadd.f32 %v3396, %v3549
      %v3666 = vadd.f32 %v3397, %v3552
      %v3667 = vadd.f32 %v3398, %v3554
      %v3668 = vadd.f32 %v3399, %v3557
      %v3669 = vadd.f32 %v3400, %v3559
      %v3670 = vadd.f32 %v3401, %v3562
      %v3671 = vadd.f32 %v3402, %v3564
      %v3672 = vadd.f32 %v3403, %v3567
      %v3673 = vadd.f32 %v3404, %v3569
      %v3674 = vadd.f32 %v3405, %v3572
      %v3675 = vadd.f32 %v3406, %v3574
      %v3676 = vadd.f32 %v3407, %v3577
      %v3677 = vadd.f32 %v3408, %v3579
      %v3678 = vadd.f32 %v3409, %v3582
      %v3679 = vadd.f32 %v3410, %v3584
      %v3680 = vadd.f32 %v3411, %v3587
      %v3681 = vadd.f32 %v3412, %v3589
      %v3682 = vadd.f32 %v3413, %v3592
      %v3683 = vadd.f32 %v3414, %v3594
      %v3684 = vadd.f32 %v3415, %v3597
      %v3685 = vadd.f32 %v3416, %v3599
      %v3686 = vadd.f32 %v3417, %v3602
      %v3687 = vadd.f32 %v3418, %v3604
      %v3688 = vadd.f32 %v3419, %v3607
      %v3689 = vadd.f32 %v3420, %v3609
      %v3690 = vadd.f32 %v3421, %v3612
      %v3691 = vadd.f32 %v3422, %v3614
      %v3692 = vadd.f32 %v3423, %v3617
      %v3693 = vadd.f32 %v3424, %v3619
      %v3694 = vadd.f32 %v3425, %v3622
      %v3695 = vadd.f32 %v3426, %v3624
      %v3696 = vadd.f32 %v3427, %v3627
      %v3697 = vadd.f32 %v3428, %v3629
      %v3698 = vadd.f32 %v3429, %v3632
      %v3699 = vadd.f32 %v3430, %v3634
      %v3700 = vld [vmem:[%s1 + $0xc] sm:$0x3]
      %v3705 = vunpack.c.l.b16 %v561
      %v3706 = vunpack.c.l.b16 %v562
      %v3707 = vunpack.c.l.b16 %v615
      %v3708 = vunpack.c.l.b16 %v616
      %v3709 = vpack.c.b16 %v3706, %v3705
      %v3710 = vpack.c.b16 %v3708, %v3707
      %v3712 = vsel %vm1491, %v3709, 0
      %v3715 = vsel %vm1491, %v3710, 0
      %v3718 = vsel %vm1588, %v3700, 0
      %3720 = vmatpush.bf16.msra.mxu0 0
      %3721 = vmatpush.bf16.msra.mxu0 0
      %3722 = vmatpush.bf16.msra.mxu0 0
      %3723 = vmatpush.bf16.msra.mxu0 0
      %3724 = vmatpush.bf16.msra.mxu0 0
      %3725 = vmatpush.bf16.msra.mxu0 0
      %3726 = vmatpush.bf16.msra.mxu0 0
      %3727 = vmatpush.bf16.msra.mxu0 %v3718
      %3728 = vmatmul.bf16.gmra.mxu0 %v1928
      %v3729 = vpop.f32.mrf.mxu0
      %v3730 = vadd.f32 0.0, %v3729
      %v3731 = vpop.f32.mrf.mxu0
      %v3732 = vadd.f32 0.0, %v3731
      %3733 = vmatmul.bf16.gmra.mxu0 %v1931
      %v3734 = vpop.f32.mrf.mxu0
      %v3735 = vadd.f32 0.0, %v3734
      %v3736 = vpop.f32.mrf.mxu0
      %v3737 = vadd.f32 0.0, %v3736
      %3738 = vmatmul.bf16.gmra.mxu0 %v1934
      %v3739 = vpop.f32.mrf.mxu0
      %v3740 = vadd.f32 0.0, %v3739
      %v3741 = vpop.f32.mrf.mxu0
      %v3742 = vadd.f32 0.0, %v3741
      %3743 = vmatmul.bf16.gmra.mxu0 %v1937
      %v3744 = vpop.f32.mrf.mxu0
      %v3745 = vadd.f32 0.0, %v3744
      %v3746 = vpop.f32.mrf.mxu0
      %v3747 = vadd.f32 0.0, %v3746
      %3748 = vmatmul.bf16.gmra.mxu0 %v1940
      %v3749 = vpop.f32.mrf.mxu0
      %v3750 = vadd.f32 0.0, %v3749
      %v3751 = vpop.f32.mrf.mxu0
      %v3752 = vadd.f32 0.0, %v3751
      %3753 = vmatmul.bf16.gmra.mxu0 %v1943
      %v3754 = vpop.f32.mrf.mxu0
      %v3755 = vadd.f32 0.0, %v3754
      %v3756 = vpop.f32.mrf.mxu0
      %v3757 = vadd.f32 0.0, %v3756
      %3758 = vmatmul.bf16.gmra.mxu0 %v1946
      %v3759 = vpop.f32.mrf.mxu0
      %v3760 = vadd.f32 0.0, %v3759
      %v3761 = vpop.f32.mrf.mxu0
      %v3762 = vadd.f32 0.0, %v3761
      %3763 = vmatmul.bf16.gmra.mxu0 %v1949
      %v3764 = vpop.f32.mrf.mxu0
      %v3765 = vadd.f32 0.0, %v3764
      %v3766 = vpop.f32.mrf.mxu0
      %v3767 = vadd.f32 0.0, %v3766
      %3768 = vmatmul.bf16.gmra.mxu0 %v1952
      %v3769 = vpop.f32.mrf.mxu0
      %v3770 = vadd.f32 0.0, %v3769
      %v3771 = vpop.f32.mrf.mxu0
      %v3772 = vadd.f32 0.0, %v3771
      %3773 = vmatmul.bf16.gmra.mxu0 %v1955
      %v3774 = vpop.f32.mrf.mxu0
      %v3775 = vadd.f32 0.0, %v3774
      %v3776 = vpop.f32.mrf.mxu0
      %v3777 = vadd.f32 0.0, %v3776
      %3778 = vmatmul.bf16.gmra.mxu0 %v1958
      %v3779 = vpop.f32.mrf.mxu0
      %v3780 = vadd.f32 0.0, %v3779
      %v3781 = vpop.f32.mrf.mxu0
      %v3782 = vadd.f32 0.0, %v3781
      %3783 = vmatmul.bf16.gmra.mxu0 %v1961
      %v3784 = vpop.f32.mrf.mxu0
      %v3785 = vadd.f32 0.0, %v3784
      %v3786 = vpop.f32.mrf.mxu0
      %v3787 = vadd.f32 0.0, %v3786
      %3788 = vmatmul.bf16.gmra.mxu0 %v1964
      %v3789 = vpop.f32.mrf.mxu0
      %v3790 = vadd.f32 0.0, %v3789
      %v3791 = vpop.f32.mrf.mxu0
      %v3792 = vadd.f32 0.0, %v3791
      %3793 = vmatmul.bf16.gmra.mxu0 %v1967
      %v3794 = vpop.f32.mrf.mxu0
      %v3795 = vadd.f32 0.0, %v3794
      %v3796 = vpop.f32.mrf.mxu0
      %v3797 = vadd.f32 0.0, %v3796
      %3798 = vmatmul.bf16.gmra.mxu0 %v2893
      %v3799 = vpop.f32.mrf.mxu0
      %v3800 = vadd.f32 0.0, %v3799
      %v3801 = vpop.f32.mrf.mxu0
      %v3802 = vadd.f32 0.0, %v3801
      %3803 = vmatmul.bf16.gmra.mxu0 %v3712
      %v3804 = vpop.f32.mrf.mxu0
      %v3805 = vadd.f32 0.0, %v3804
      %v3806 = vpop.f32.mrf.mxu0
      %v3807 = vadd.f32 0.0, %v3806
      %3808 = vmatmul.bf16.gmra.mxu0 %v1976
      %v3809 = vpop.f32.mrf.mxu0
      %v3810 = vadd.f32 0.0, %v3809
      %v3811 = vpop.f32.mrf.mxu0
      %v3812 = vadd.f32 0.0, %v3811
      %3813 = vmatmul.bf16.gmra.mxu0 %v1979
      %v3814 = vpop.f32.mrf.mxu0
      %v3815 = vadd.f32 0.0, %v3814
      %v3816 = vpop.f32.mrf.mxu0
      %v3817 = vadd.f32 0.0, %v3816
      %3818 = vmatmul.bf16.gmra.mxu0 %v1982
      %v3819 = vpop.f32.mrf.mxu0
      %v3820 = vadd.f32 0.0, %v3819
      %v3821 = vpop.f32.mrf.mxu0
      %v3822 = vadd.f32 0.0, %v3821
      %3823 = vmatmul.bf16.gmra.mxu0 %v1985
      %v3824 = vpop.f32.mrf.mxu0
      %v3825 = vadd.f32 0.0, %v3824
      %v3826 = vpop.f32.mrf.mxu0
      %v3827 = vadd.f32 0.0, %v3826
      %3828 = vmatmul.bf16.gmra.mxu0 %v1988
      %v3829 = vpop.f32.mrf.mxu0
      %v3830 = vadd.f32 0.0, %v3829
      %v3831 = vpop.f32.mrf.mxu0
      %v3832 = vadd.f32 0.0, %v3831
      %3833 = vmatmul.bf16.gmra.mxu0 %v1991
      %v3834 = vpop.f32.mrf.mxu0
      %v3835 = vadd.f32 0.0, %v3834
      %v3836 = vpop.f32.mrf.mxu0
      %v3837 = vadd.f32 0.0, %v3836
      %3838 = vmatmul.bf16.gmra.mxu0 %v1994
      %v3839 = vpop.f32.mrf.mxu0
      %v3840 = vadd.f32 0.0, %v3839
      %v3841 = vpop.f32.mrf.mxu0
      %v3842 = vadd.f32 0.0, %v3841
      %3843 = vmatmul.bf16.gmra.mxu0 %v1997
      %v3844 = vpop.f32.mrf.mxu0
      %v3845 = vadd.f32 0.0, %v3844
      %v3846 = vpop.f32.mrf.mxu0
      %v3847 = vadd.f32 0.0, %v3846
      %3848 = vmatmul.bf16.gmra.mxu0 %v2000
      %v3849 = vpop.f32.mrf.mxu0
      %v3850 = vadd.f32 0.0, %v3849
      %v3851 = vpop.f32.mrf.mxu0
      %v3852 = vadd.f32 0.0, %v3851
      %3853 = vmatmul.bf16.gmra.mxu0 %v2003
      %v3854 = vpop.f32.mrf.mxu0
      %v3855 = vadd.f32 0.0, %v3854
      %v3856 = vpop.f32.mrf.mxu0
      %v3857 = vadd.f32 0.0, %v3856
      %3858 = vmatmul.bf16.gmra.mxu0 %v2006
      %v3859 = vpop.f32.mrf.mxu0
      %v3860 = vadd.f32 0.0, %v3859
      %v3861 = vpop.f32.mrf.mxu0
      %v3862 = vadd.f32 0.0, %v3861
      %3863 = vmatmul.bf16.gmra.mxu0 %v2009
      %v3864 = vpop.f32.mrf.mxu0
      %v3865 = vadd.f32 0.0, %v3864
      %v3866 = vpop.f32.mrf.mxu0
      %v3867 = vadd.f32 0.0, %v3866
      %3868 = vmatmul.bf16.gmra.mxu0 %v2012
      %v3869 = vpop.f32.mrf.mxu0
      %v3870 = vadd.f32 0.0, %v3869
      %v3871 = vpop.f32.mrf.mxu0
      %v3872 = vadd.f32 0.0, %v3871
      %3873 = vmatmul.bf16.gmra.mxu0 %v2015
      %v3874 = vpop.f32.mrf.mxu0
      %v3875 = vadd.f32 0.0, %v3874
      %v3876 = vpop.f32.mrf.mxu0
      %v3877 = vadd.f32 0.0, %v3876
      %3878 = vmatmul.bf16.gmra.mxu0 %v2896
      %v3879 = vpop.f32.mrf.mxu0
      %v3880 = vadd.f32 0.0, %v3879
      %v3881 = vpop.f32.mrf.mxu0
      %v3882 = vadd.f32 0.0, %v3881
      %3883 = vmatmul.bf16.gmra.mxu0 %v3715
      %v3884 = vpop.f32.mrf.mxu0
      %v3885 = vadd.f32 0.0, %v3884
      %v3886 = vpop.f32.mrf.mxu0
      %v3887 = vadd.f32 0.0, %v3886
      %3888 = vdwg.mxu0
      %v3889 = vadd.f32 %v3636, %v3730
      %v3890 = vadd.f32 %v3637, %v3732
      %v3891 = vadd.f32 %v3638, %v3735
      %v3892 = vadd.f32 %v3639, %v3737
      %v3893 = vadd.f32 %v3640, %v3740
      %v3894 = vadd.f32 %v3641, %v3742
      %v3895 = vadd.f32 %v3642, %v3745
      %v3896 = vadd.f32 %v3643, %v3747
      %v3897 = vadd.f32 %v3644, %v3750
      %v3898 = vadd.f32 %v3645, %v3752
      %v3899 = vadd.f32 %v3646, %v3755
      %v3900 = vadd.f32 %v3647, %v3757
      %v3901 = vadd.f32 %v3648, %v3760
      %v3902 = vadd.f32 %v3649, %v3762
      %v3903 = vadd.f32 %v3650, %v3765
      %v3904 = vadd.f32 %v3651, %v3767
      %v3905 = vadd.f32 %v3652, %v3770
      %v3906 = vadd.f32 %v3653, %v3772
      %v3907 = vadd.f32 %v3654, %v3775
      %v3908 = vadd.f32 %v3655, %v3777
      %v3909 = vadd.f32 %v3656, %v3780
      %v3910 = vadd.f32 %v3657, %v3782
      %v3911 = vadd.f32 %v3658, %v3785
      %v3912 = vadd.f32 %v3659, %v3787
      %v3913 = vadd.f32 %v3660, %v3790
      %v3914 = vadd.f32 %v3661, %v3792
      %v3915 = vadd.f32 %v3662, %v3795
      %v3916 = vadd.f32 %v3663, %v3797
      %v3917 = vadd.f32 %v3664, %v3800
      %v3918 = vadd.f32 %v3665, %v3802
      %v3919 = vadd.f32 %v3666, %v3805
      %v3920 = vadd.f32 %v3667, %v3807
      %v3921 = vadd.f32 %v3668, %v3810
      %v3922 = vadd.f32 %v3669, %v3812
      %v3923 = vadd.f32 %v3670, %v3815
      %v3924 = vadd.f32 %v3671, %v3817
      %v3925 = vadd.f32 %v3672, %v3820
      %v3926 = vadd.f32 %v3673, %v3822
      %v3927 = vadd.f32 %v3674, %v3825
      %v3928 = vadd.f32 %v3675, %v3827
      %v3929 = vadd.f32 %v3676, %v3830
      %v3930 = vadd.f32 %v3677, %v3832
      %v3931 = vadd.f32 %v3678, %v3835
      %v3932 = vadd.f32 %v3679, %v3837
      %v3933 = vadd.f32 %v3680, %v3840
      %v3934 = vadd.f32 %v3681, %v3842
      %v3935 = vadd.f32 %v3682, %v3845
      %v3936 = vadd.f32 %v3683, %v3847
      %v3937 = vadd.f32 %v3684, %v3850
      %v3938 = vadd.f32 %v3685, %v3852
      %v3939 = vadd.f32 %v3686, %v3855
      %v3940 = vadd.f32 %v3687, %v3857
      %v3941 = vadd.f32 %v3688, %v3860
      %v3942 = vadd.f32 %v3689, %v3862
      %v3943 = vadd.f32 %v3690, %v3865
      %v3944 = vadd.f32 %v3691, %v3867
      %v3945 = vadd.f32 %v3692, %v3870
      %v3946 = vadd.f32 %v3693, %v3872
      %v3947 = vadd.f32 %v3694, %v3875
      %v3948 = vadd.f32 %v3695, %v3877
      %v3949 = vadd.f32 %v3696, %v3880
      %v3950 = vadd.f32 %v3697, %v3882
      %v3951 = vadd.f32 %v3698, %v3885
      %v3952 = vadd.f32 %v3699, %v3887
      %v3954 = vshrl.u32 %v561, 16
      %v3956 = vrot.slane %v3954, 4
      %v3957 = vshll.u32 %v561, 16
      %v3959 = vrot.slane %v3957, 5
      %v3960 = vor.u32 %v3956, %v3959
      %v3961 = vrot.slane %v3960, 4
      %v3963 = vshll.u32 %v562, 16
      %v3965 = vrot.slane %v3963, 5
      %v3966 = vsel %vm621, %v3961, %v3965
      %v3967 = vshrl.u32 %v562, 16
      %v3969 = vrot.slane %v3967, 4
      %v3970 = vor.u32 %v3969, %v3965
      %v3971 = vrot.slane %v3970, 4
      %v3973 = vshll.u32 %v563, 16
      %v3975 = vrot.slane %v3973, 5
      %v3976 = vsel %vm621, %v3971, %v3975
      %v3978 = vshrl.u32 %v615, 16
      %v3980 = vrot.slane %v3978, 4
      %v3981 = vshll.u32 %v615, 16
      %v3983 = vrot.slane %v3981, 5
      %v3984 = vor.u32 %v3980, %v3983
      %v3985 = vrot.slane %v3984, 4
      %v3987 = vshll.u32 %v616, 16
      %v3989 = vrot.slane %v3987, 5
      %v3990 = vsel %vm621, %v3985, %v3989
      %v3991 = vshrl.u32 %v616, 16
      %v3993 = vrot.slane %v3991, 4
      %v3994 = vor.u32 %v3993, %v3989
      %v3995 = vrot.slane %v3994, 4
      %v3997 = vshll.u32 %v617, 16
      %v3999 = vrot.slane %v3997, 5
      %v4000 = vsel %vm621, %v3995, %v3999
      %v4001 = vld [vmem:[%s1 + $0xc] sm:$0xc]
      %v4002 = vunpack.c.l.b16 %v3966
      %v4003 = vunpack.c.l.b16 %v3976
      %v4004 = vunpack.c.l.b16 %v3990
      %v4005 = vunpack.c.l.b16 %v4000
      %v4006 = vpack.c.b16 %v4003, %v4002
      %v4007 = vpack.c.b16 %v4005, %v4004
      %v4009 = vunpack.c.l.b16 %v4001
      %v4010 = vpack.c.b16 %v4009, %v4009
      %v4011 = vrot.slane %v4010, 2
      %v4013 = vsel %vm1491, %v4006, 0
      %v4016 = vsel %vm1491, %v4007, 0
      %v4019 = vsel %vm1588, %v4011, 0
      %4021 = vmatpush.bf16.msra.mxu0 0
      %4022 = vmatpush.bf16.msra.mxu0 0
      %4023 = vmatpush.bf16.msra.mxu0 0
      %4024 = vmatpush.bf16.msra.mxu0 0
      %4025 = vmatpush.bf16.msra.mxu0 0
      %4026 = vmatpush.bf16.msra.mxu0 0
      %4027 = vmatpush.bf16.msra.mxu0 0
      %4028 = vmatpush.bf16.msra.mxu0 %v4019
      %4029 = vmatmul.bf16.gmra.mxu0 %v1499
      %v4030 = vpop.f32.mrf.mxu0
      %v4031 = vadd.f32 0.0, %v4030
      %v4032 = vpop.f32.mrf.mxu0
      %v4033 = vadd.f32 0.0, %v4032
      %4034 = vmatmul.bf16.gmra.mxu0 %v1502
      %v4035 = vpop.f32.mrf.mxu0
      %v4036 = vadd.f32 0.0, %v4035
      %v4037 = vpop.f32.mrf.mxu0
      %v4038 = vadd.f32 0.0, %v4037
      %4039 = vmatmul.bf16.gmra.mxu0 %v1505
      %v4040 = vpop.f32.mrf.mxu0
      %v4041 = vadd.f32 0.0, %v4040
      %v4042 = vpop.f32.mrf.mxu0
      %v4043 = vadd.f32 0.0, %v4042
      %4044 = vmatmul.bf16.gmra.mxu0 %v1508
      %v4045 = vpop.f32.mrf.mxu0
      %v4046 = vadd.f32 0.0, %v4045
      %v4047 = vpop.f32.mrf.mxu0
      %v4048 = vadd.f32 0.0, %v4047
      %4049 = vmatmul.bf16.gmra.mxu0 %v1511
      %v4050 = vpop.f32.mrf.mxu0
      %v4051 = vadd.f32 0.0, %v4050
      %v4052 = vpop.f32.mrf.mxu0
      %v4053 = vadd.f32 0.0, %v4052
      %4054 = vmatmul.bf16.gmra.mxu0 %v1514
      %v4055 = vpop.f32.mrf.mxu0
      %v4056 = vadd.f32 0.0, %v4055
      %v4057 = vpop.f32.mrf.mxu0
      %v4058 = vadd.f32 0.0, %v4057
      %4059 = vmatmul.bf16.gmra.mxu0 %v1517
      %v4060 = vpop.f32.mrf.mxu0
      %v4061 = vadd.f32 0.0, %v4060
      %v4062 = vpop.f32.mrf.mxu0
      %v4063 = vadd.f32 0.0, %v4062
      %4064 = vmatmul.bf16.gmra.mxu0 %v1520
      %v4065 = vpop.f32.mrf.mxu0
      %v4066 = vadd.f32 0.0, %v4065
      %v4067 = vpop.f32.mrf.mxu0
      %v4068 = vadd.f32 0.0, %v4067
      %4069 = vmatmul.bf16.gmra.mxu0 %v1523
      %v4070 = vpop.f32.mrf.mxu0
      %v4071 = vadd.f32 0.0, %v4070
      %v4072 = vpop.f32.mrf.mxu0
      %v4073 = vadd.f32 0.0, %v4072
      %4074 = vmatmul.bf16.gmra.mxu0 %v1526
      %v4075 = vpop.f32.mrf.mxu0
      %v4076 = vadd.f32 0.0, %v4075
      %v4077 = vpop.f32.mrf.mxu0
      %v4078 = vadd.f32 0.0, %v4077
      %4079 = vmatmul.bf16.gmra.mxu0 %v1529
      %v4080 = vpop.f32.mrf.mxu0
      %v4081 = vadd.f32 0.0, %v4080
      %v4082 = vpop.f32.mrf.mxu0
      %v4083 = vadd.f32 0.0, %v4082
      %4084 = vmatmul.bf16.gmra.mxu0 %v1532
      %v4085 = vpop.f32.mrf.mxu0
      %v4086 = vadd.f32 0.0, %v4085
      %v4087 = vpop.f32.mrf.mxu0
      %v4088 = vadd.f32 0.0, %v4087
      %4089 = vmatmul.bf16.gmra.mxu0 %v1535
      %v4090 = vpop.f32.mrf.mxu0
      %v4091 = vadd.f32 0.0, %v4090
      %v4092 = vpop.f32.mrf.mxu0
      %v4093 = vadd.f32 0.0, %v4092
      %4094 = vmatmul.bf16.gmra.mxu0 %v1538
      %v4095 = vpop.f32.mrf.mxu0
      %v4096 = vadd.f32 0.0, %v4095
      %v4097 = vpop.f32.mrf.mxu0
      %v4098 = vadd.f32 0.0, %v4097
      %4099 = vmatmul.bf16.gmra.mxu0 %v3190
      %v4100 = vpop.f32.mrf.mxu0
      %v4101 = vadd.f32 0.0, %v4100
      %v4102 = vpop.f32.mrf.mxu0
      %v4103 = vadd.f32 0.0, %v4102
      %4104 = vmatmul.bf16.gmra.mxu0 %v4013
      %v4105 = vpop.f32.mrf.mxu0
      %v4106 = vadd.f32 0.0, %v4105
      %v4107 = vpop.f32.mrf.mxu0
      %v4108 = vadd.f32 0.0, %v4107
      %4109 = vmatmul.bf16.gmra.mxu0 %v1547
      %v4110 = vpop.f32.mrf.mxu0
      %v4111 = vadd.f32 0.0, %v4110
      %v4112 = vpop.f32.mrf.mxu0
      %v4113 = vadd.f32 0.0, %v4112
      %4114 = vmatmul.bf16.gmra.mxu0 %v1550
      %v4115 = vpop.f32.mrf.mxu0
      %v4116 = vadd.f32 0.0, %v4115
      %v4117 = vpop.f32.mrf.mxu0
      %v4118 = vadd.f32 0.0, %v4117
      %4119 = vmatmul.bf16.gmra.mxu0 %v1553
      %v4120 = vpop.f32.mrf.mxu0
      %v4121 = vadd.f32 0.0, %v4120
      %v4122 = vpop.f32.mrf.mxu0
      %v4123 = vadd.f32 0.0, %v4122
      %4124 = vmatmul.bf16.gmra.mxu0 %v1556
      %v4125 = vpop.f32.mrf.mxu0
      %v4126 = vadd.f32 0.0, %v4125
      %v4127 = vpop.f32.mrf.mxu0
      %v4128 = vadd.f32 0.0, %v4127
      %4129 = vmatmul.bf16.gmra.mxu0 %v1559
      %v4130 = vpop.f32.mrf.mxu0
      %v4131 = vadd.f32 0.0, %v4130
      %v4132 = vpop.f32.mrf.mxu0
      %v4133 = vadd.f32 0.0, %v4132
      %4134 = vmatmul.bf16.gmra.mxu0 %v1562
      %v4135 = vpop.f32.mrf.mxu0
      %v4136 = vadd.f32 0.0, %v4135
      %v4137 = vpop.f32.mrf.mxu0
      %v4138 = vadd.f32 0.0, %v4137
      %4139 = vmatmul.bf16.gmra.mxu0 %v1565
      %v4140 = vpop.f32.mrf.mxu0
      %v4141 = vadd.f32 0.0, %v4140
      %v4142 = vpop.f32.mrf.mxu0
      %v4143 = vadd.f32 0.0, %v4142
      %4144 = vmatmul.bf16.gmra.mxu0 %v1568
      %v4145 = vpop.f32.mrf.mxu0
      %v4146 = vadd.f32 0.0, %v4145
      %v4147 = vpop.f32.mrf.mxu0
      %v4148 = vadd.f32 0.0, %v4147
      %4149 = vmatmul.bf16.gmra.mxu0 %v1571
      %v4150 = vpop.f32.mrf.mxu0
      %v4151 = vadd.f32 0.0, %v4150
      %v4152 = vpop.f32.mrf.mxu0
      %v4153 = vadd.f32 0.0, %v4152
      %4154 = vmatmul.bf16.gmra.mxu0 %v1574
      %v4155 = vpop.f32.mrf.mxu0
      %v4156 = vadd.f32 0.0, %v4155
      %v4157 = vpop.f32.mrf.mxu0
      %v4158 = vadd.f32 0.0, %v4157
      %4159 = vmatmul.bf16.gmra.mxu0 %v1577
      %v4160 = vpop.f32.mrf.mxu0
      %v4161 = vadd.f32 0.0, %v4160
      %v4162 = vpop.f32.mrf.mxu0
      %v4163 = vadd.f32 0.0, %v4162
      %4164 = vmatmul.bf16.gmra.mxu0 %v1580
      %v4165 = vpop.f32.mrf.mxu0
      %v4166 = vadd.f32 0.0, %v4165
      %v4167 = vpop.f32.mrf.mxu0
      %v4168 = vadd.f32 0.0, %v4167
      %4169 = vmatmul.bf16.gmra.mxu0 %v1583
      %v4170 = vpop.f32.mrf.mxu0
      %v4171 = vadd.f32 0.0, %v4170
      %v4172 = vpop.f32.mrf.mxu0
      %v4173 = vadd.f32 0.0, %v4172
      %4174 = vmatmul.bf16.gmra.mxu0 %v1586
      %v4175 = vpop.f32.mrf.mxu0
      %v4176 = vadd.f32 0.0, %v4175
      %v4177 = vpop.f32.mrf.mxu0
      %v4178 = vadd.f32 0.0, %v4177
      %4179 = vmatmul.bf16.gmra.mxu0 %v3193
      %v4180 = vpop.f32.mrf.mxu0
      %v4181 = vadd.f32 0.0, %v4180
      %v4182 = vpop.f32.mrf.mxu0
      %v4183 = vadd.f32 0.0, %v4182
      %4184 = vmatmul.bf16.gmra.mxu0 %v4016
      %v4185 = vpop.f32.mrf.mxu0
      %v4186 = vadd.f32 0.0, %v4185
      %v4187 = vpop.f32.mrf.mxu0
      %v4188 = vadd.f32 0.0, %v4187
      %4189 = vdwg.mxu0
      %v4190 = vadd.f32 %v3889, %v4031
      %v4191 = vadd.f32 %v3890, %v4033
      %v4192 = vadd.f32 %v3891, %v4036
      %v4193 = vadd.f32 %v3892, %v4038
      %v4194 = vadd.f32 %v3893, %v4041
      %v4195 = vadd.f32 %v3894, %v4043
      %v4196 = vadd.f32 %v3895, %v4046
      %v4197 = vadd.f32 %v3896, %v4048
      %v4198 = vadd.f32 %v3897, %v4051
      %v4199 = vadd.f32 %v3898, %v4053
      %v4200 = vadd.f32 %v3899, %v4056
      %v4201 = vadd.f32 %v3900, %v4058
      %v4202 = vadd.f32 %v3901, %v4061
      %v4203 = vadd.f32 %v3902, %v4063
      %v4204 = vadd.f32 %v3903, %v4066
      %v4205 = vadd.f32 %v3904, %v4068
      %v4206 = vadd.f32 %v3905, %v4071
      %v4207 = vadd.f32 %v3906, %v4073
      %v4208 = vadd.f32 %v3907, %v4076
      %v4209 = vadd.f32 %v3908, %v4078
      %v4210 = vadd.f32 %v3909, %v4081
      %v4211 = vadd.f32 %v3910, %v4083
      %v4212 = vadd.f32 %v3911, %v4086
      %v4213 = vadd.f32 %v3912, %v4088
      %v4214 = vadd.f32 %v3913, %v4091
      %v4215 = vadd.f32 %v3914, %v4093
      %v4216 = vadd.f32 %v3915, %v4096
      %v4217 = vadd.f32 %v3916, %v4098
      %v4218 = vadd.f32 %v3917, %v4101
      %v4219 = vadd.f32 %v3918, %v4103
      %v4220 = vadd.f32 %v3919, %v4106
      %v4221 = vadd.f32 %v3920, %v4108
      %v4222 = vadd.f32 %v3921, %v4111
      %v4223 = vadd.f32 %v3922, %v4113
      %v4224 = vadd.f32 %v3923, %v4116
      %v4225 = vadd.f32 %v3924, %v4118
      %v4226 = vadd.f32 %v3925, %v4121
      %v4227 = vadd.f32 %v3926, %v4123
      %v4228 = vadd.f32 %v3927, %v4126
      %v4229 = vadd.f32 %v3928, %v4128
      %v4230 = vadd.f32 %v3929, %v4131
      %v4231 = vadd.f32 %v3930, %v4133
      %v4232 = vadd.f32 %v3931, %v4136
      %v4233 = vadd.f32 %v3932, %v4138
      %v4234 = vadd.f32 %v3933, %v4141
      %v4235 = vadd.f32 %v3934, %v4143
      %v4236 = vadd.f32 %v3935, %v4146
      %v4237 = vadd.f32 %v3936, %v4148
      %v4238 = vadd.f32 %v3937, %v4151
      %v4239 = vadd.f32 %v3938, %v4153
      %v4240 = vadd.f32 %v3939, %v4156
      %v4241 = vadd.f32 %v3940, %v4158
      %v4242 = vadd.f32 %v3941, %v4161
      %v4243 = vadd.f32 %v3942, %v4163
      %v4244 = vadd.f32 %v3943, %v4166
      %v4245 = vadd.f32 %v3944, %v4168
      %v4246 = vadd.f32 %v3945, %v4171
      %v4247 = vadd.f32 %v3946, %v4173
      %v4248 = vadd.f32 %v3947, %v4176
      %v4249 = vadd.f32 %v3948, %v4178
      %v4250 = vadd.f32 %v3949, %v4181
      %v4251 = vadd.f32 %v3950, %v4183
      %v4252 = vadd.f32 %v3951, %v4186
      %v4253 = vadd.f32 %v3952, %v4188
      %v4256 = vrot.slane %v561, 5
      %v4257 = vrot.slane %v4256, 4
      %v4258 = vrot.slane %v562, 5
      %v4259 = vsel %vm2223, %v4257, %v4258
      %v4260 = vrot.slane %v4258, 4
      %v4261 = vrot.slane %v563, 5
      %v4262 = vsel %vm2223, %v4260, %v4261
      %v4263 = vrot.slane %v615, 5
      %v4264 = vrot.slane %v4263, 4
      %v4265 = vrot.slane %v616, 5
      %v4266 = vsel %vm2223, %v4264, %v4265
      %v4267 = vrot.slane %v4265, 4
      %v4268 = vrot.slane %v617, 5
      %v4269 = vsel %vm2223, %v4267, %v4268
      %v4270 = vld [vmem:[%s1 + $0x10] sm:$0x3]
      %v4271 = vunpack.c.l.b16 %v4259
      %v4272 = vunpack.c.l.b16 %v4262
      %v4273 = vunpack.c.l.b16 %v4266
      %v4274 = vunpack.c.l.b16 %v4269
      %v4275 = vpack.c.b16 %v4272, %v4271
      %v4276 = vpack.c.b16 %v4274, %v4273
      %v4278 = vsel %vm1491, %v4275, 0
      %v4281 = vsel %vm1491, %v4276, 0
      %v4284 = vsel %vm1588, %v4270, 0
      %4286 = vmatpush.bf16.msra.mxu0 0
      %4287 = vmatpush.bf16.msra.mxu0 0
      %4288 = vmatpush.bf16.msra.mxu0 0
      %4289 = vmatpush.bf16.msra.mxu0 0
      %4290 = vmatpush.bf16.msra.mxu0 0
      %4291 = vmatpush.bf16.msra.mxu0 0
      %4292 = vmatpush.bf16.msra.mxu0 0
      %4293 = vmatpush.bf16.msra.mxu0 %v4284
      %4294 = vmatmul.bf16.gmra.mxu0 %v2552
      %v4295 = vpop.f32.mrf.mxu0
      %v4296 = vadd.f32 0.0, %v4295
      %v4297 = vpop.f32.mrf.mxu0
      %v4298 = vadd.f32 0.0, %v4297
      %4299 = vmatmul.bf16.gmra.mxu0 %v2555
      %v4300 = vpop.f32.mrf.mxu0
      %v4301 = vadd.f32 0.0, %v4300
      %v4302 = vpop.f32.mrf.mxu0
      %v4303 = vadd.f32 0.0, %v4302
      %4304 = vmatmul.bf16.gmra.mxu0 %v2558
      %v4305 = vpop.f32.mrf.mxu0
      %v4306 = vadd.f32 0.0, %v4305
      %v4307 = vpop.f32.mrf.mxu0
      %v4308 = vadd.f32 0.0, %v4307
      %4309 = vmatmul.bf16.gmra.mxu0 %v2561
      %v4310 = vpop.f32.mrf.mxu0
      %v4311 = vadd.f32 0.0, %v4310
      %v4312 = vpop.f32.mrf.mxu0
      %v4313 = vadd.f32 0.0, %v4312
      %4314 = vmatmul.bf16.gmra.mxu0 %v2564
      %v4315 = vpop.f32.mrf.mxu0
      %v4316 = vadd.f32 0.0, %v4315
      %v4317 = vpop.f32.mrf.mxu0
      %v4318 = vadd.f32 0.0, %v4317
      %4319 = vmatmul.bf16.gmra.mxu0 %v2567
      %v4320 = vpop.f32.mrf.mxu0
      %v4321 = vadd.f32 0.0, %v4320
      %v4322 = vpop.f32.mrf.mxu0
      %v4323 = vadd.f32 0.0, %v4322
      %4324 = vmatmul.bf16.gmra.mxu0 %v2570
      %v4325 = vpop.f32.mrf.mxu0
      %v4326 = vadd.f32 0.0, %v4325
      %v4327 = vpop.f32.mrf.mxu0
      %v4328 = vadd.f32 0.0, %v4327
      %4329 = vmatmul.bf16.gmra.mxu0 %v2573
      %v4330 = vpop.f32.mrf.mxu0
      %v4331 = vadd.f32 0.0, %v4330
      %v4332 = vpop.f32.mrf.mxu0
      %v4333 = vadd.f32 0.0, %v4332
      %4334 = vmatmul.bf16.gmra.mxu0 %v2576
      %v4335 = vpop.f32.mrf.mxu0
      %v4336 = vadd.f32 0.0, %v4335
      %v4337 = vpop.f32.mrf.mxu0
      %v4338 = vadd.f32 0.0, %v4337
      %4339 = vmatmul.bf16.gmra.mxu0 %v2579
      %v4340 = vpop.f32.mrf.mxu0
      %v4341 = vadd.f32 0.0, %v4340
      %v4342 = vpop.f32.mrf.mxu0
      %v4343 = vadd.f32 0.0, %v4342
      %4344 = vmatmul.bf16.gmra.mxu0 %v2582
      %v4345 = vpop.f32.mrf.mxu0
      %v4346 = vadd.f32 0.0, %v4345
      %v4347 = vpop.f32.mrf.mxu0
      %v4348 = vadd.f32 0.0, %v4347
      %4349 = vmatmul.bf16.gmra.mxu0 %v2585
      %v4350 = vpop.f32.mrf.mxu0
      %v4351 = vadd.f32 0.0, %v4350
      %v4352 = vpop.f32.mrf.mxu0
      %v4353 = vadd.f32 0.0, %v4352
      %4354 = vmatmul.bf16.gmra.mxu0 %v2588
      %v4355 = vpop.f32.mrf.mxu0
      %v4356 = vadd.f32 0.0, %v4355
      %v4357 = vpop.f32.mrf.mxu0
      %v4358 = vadd.f32 0.0, %v4357
      %4359 = vmatmul.bf16.gmra.mxu0 %v2591
      %v4360 = vpop.f32.mrf.mxu0
      %v4361 = vadd.f32 0.0, %v4360
      %v4362 = vpop.f32.mrf.mxu0
      %v4363 = vadd.f32 0.0, %v4362
      %4364 = vmatmul.bf16.gmra.mxu0 %v3459
      %v4365 = vpop.f32.mrf.mxu0
      %v4366 = vadd.f32 0.0, %v4365
      %v4367 = vpop.f32.mrf.mxu0
      %v4368 = vadd.f32 0.0, %v4367
      %4369 = vmatmul.bf16.gmra.mxu0 %v4278
      %v4370 = vpop.f32.mrf.mxu0
      %v4371 = vadd.f32 0.0, %v4370
      %v4372 = vpop.f32.mrf.mxu0
      %v4373 = vadd.f32 0.0, %v4372
      %4374 = vmatmul.bf16.gmra.mxu0 %v2600
      %v4375 = vpop.f32.mrf.mxu0
      %v4376 = vadd.f32 0.0, %v4375
      %v4377 = vpop.f32.mrf.mxu0
      %v4378 = vadd.f32 0.0, %v4377
      %4379 = vmatmul.bf16.gmra.mxu0 %v2603
      %v4380 = vpop.f32.mrf.mxu0
      %v4381 = vadd.f32 0.0, %v4380
      %v4382 = vpop.f32.mrf.mxu0
      %v4383 = vadd.f32 0.0, %v4382
      %4384 = vmatmul.bf16.gmra.mxu0 %v2606
      %v4385 = vpop.f32.mrf.mxu0
      %v4386 = vadd.f32 0.0, %v4385
      %v4387 = vpop.f32.mrf.mxu0
      %v4388 = vadd.f32 0.0, %v4387
      %4389 = vmatmul.bf16.gmra.mxu0 %v2609
      %v4390 = vpop.f32.mrf.mxu0
      %v4391 = vadd.f32 0.0, %v4390
      %v4392 = vpop.f32.mrf.mxu0
      %v4393 = vadd.f32 0.0, %v4392
      %4394 = vmatmul.bf16.gmra.mxu0 %v2612
      %v4395 = vpop.f32.mrf.mxu0
      %v4396 = vadd.f32 0.0, %v4395
      %v4397 = vpop.f32.mrf.mxu0
      %v4398 = vadd.f32 0.0, %v4397
      %4399 = vmatmul.bf16.gmra.mxu0 %v2615
      %v4400 = vpop.f32.mrf.mxu0
      %v4401 = vadd.f32 0.0, %v4400
      %v4402 = vpop.f32.mrf.mxu0
      %v4403 = vadd.f32 0.0, %v4402
      %4404 = vmatmul.bf16.gmra.mxu0 %v2618
      %v4405 = vpop.f32.mrf.mxu0
      %v4406 = vadd.f32 0.0, %v4405
      %v4407 = vpop.f32.mrf.mxu0
      %v4408 = vadd.f32 0.0, %v4407
      %4409 = vmatmul.bf16.gmra.mxu0 %v2621
      %v4410 = vpop.f32.mrf.mxu0
      %v4411 = vadd.f32 0.0, %v4410
      %v4412 = vpop.f32.mrf.mxu0
      %v4413 = vadd.f32 0.0, %v4412
      %4414 = vmatmul.bf16.gmra.mxu0 %v2624
      %v4415 = vpop.f32.mrf.mxu0
      %v4416 = vadd.f32 0.0, %v4415
      %v4417 = vpop.f32.mrf.mxu0
      %v4418 = vadd.f32 0.0, %v4417
      %4419 = vmatmul.bf16.gmra.mxu0 %v2627
      %v4420 = vpop.f32.mrf.mxu0
      %v4421 = vadd.f32 0.0, %v4420
      %v4422 = vpop.f32.mrf.mxu0
      %v4423 = vadd.f32 0.0, %v4422
      %4424 = vmatmul.bf16.gmra.mxu0 %v2630
      %v4425 = vpop.f32.mrf.mxu0
      %v4426 = vadd.f32 0.0, %v4425
      %v4427 = vpop.f32.mrf.mxu0
      %v4428 = vadd.f32 0.0, %v4427
      %4429 = vmatmul.bf16.gmra.mxu0 %v2633
      %v4430 = vpop.f32.mrf.mxu0
      %v4431 = vadd.f32 0.0, %v4430
      %v4432 = vpop.f32.mrf.mxu0
      %v4433 = vadd.f32 0.0, %v4432
      %4434 = vmatmul.bf16.gmra.mxu0 %v2636
      %v4435 = vpop.f32.mrf.mxu0
      %v4436 = vadd.f32 0.0, %v4435
      %v4437 = vpop.f32.mrf.mxu0
      %v4438 = vadd.f32 0.0, %v4437
      %4439 = vmatmul.bf16.gmra.mxu0 %v2639
      %v4440 = vpop.f32.mrf.mxu0
      %v4441 = vadd.f32 0.0, %v4440
      %v4442 = vpop.f32.mrf.mxu0
      %v4443 = vadd.f32 0.0, %v4442
      %4444 = vmatmul.bf16.gmra.mxu0 %v3462
      %v4445 = vpop.f32.mrf.mxu0
      %v4446 = vadd.f32 0.0, %v4445
      %v4447 = vpop.f32.mrf.mxu0
      %v4448 = vadd.f32 0.0, %v4447
      %4449 = vmatmul.bf16.gmra.mxu0 %v4281
      %v4450 = vpop.f32.mrf.mxu0
      %v4451 = vadd.f32 0.0, %v4450
      %v4452 = vpop.f32.mrf.mxu0
      %v4453 = vadd.f32 0.0, %v4452
      %4454 = vdwg.mxu0
      %v4455 = vadd.f32 %v4190, %v4296
      %v4456 = vadd.f32 %v4191, %v4298
      %v4457 = vadd.f32 %v4192, %v4301
      %v4458 = vadd.f32 %v4193, %v4303
      %v4459 = vadd.f32 %v4194, %v4306
      %v4460 = vadd.f32 %v4195, %v4308
      %v4461 = vadd.f32 %v4196, %v4311
      %v4462 = vadd.f32 %v4197, %v4313
      %v4463 = vadd.f32 %v4198, %v4316
      %v4464 = vadd.f32 %v4199, %v4318
      %v4465 = vadd.f32 %v4200, %v4321
      %v4466 = vadd.f32 %v4201, %v4323
      %v4467 = vadd.f32 %v4202, %v4326
      %v4468 = vadd.f32 %v4203, %v4328
      %v4469 = vadd.f32 %v4204, %v4331
      %v4470 = vadd.f32 %v4205, %v4333
      %v4471 = vadd.f32 %v4206, %v4336
      %v4472 = vadd.f32 %v4207, %v4338
      %v4473 = vadd.f32 %v4208, %v4341
      %v4474 = vadd.f32 %v4209, %v4343
      %v4475 = vadd.f32 %v4210, %v4346
      %v4476 = vadd.f32 %v4211, %v4348
      %v4477 = vadd.f32 %v4212, %v4351
      %v4478 = vadd.f32 %v4213, %v4353
      %v4479 = vadd.f32 %v4214, %v4356
      %v4480 = vadd.f32 %v4215, %v4358
      %v4481 = vadd.f32 %v4216, %v4361
      %v4482 = vadd.f32 %v4217, %v4363
      %v4483 = vadd.f32 %v4218, %v4366
      %v4484 = vadd.f32 %v4219, %v4368
      %v4485 = vadd.f32 %v4220, %v4371
      %v4486 = vadd.f32 %v4221, %v4373
      %v4487 = vadd.f32 %v4222, %v4376
      %v4488 = vadd.f32 %v4223, %v4378
      %v4489 = vadd.f32 %v4224, %v4381
      %v4490 = vadd.f32 %v4225, %v4383
      %v4491 = vadd.f32 %v4226, %v4386
      %v4492 = vadd.f32 %v4227, %v4388
      %v4493 = vadd.f32 %v4228, %v4391
      %v4494 = vadd.f32 %v4229, %v4393
      %v4495 = vadd.f32 %v4230, %v4396
      %v4496 = vadd.f32 %v4231, %v4398
      %v4497 = vadd.f32 %v4232, %v4401
      %v4498 = vadd.f32 %v4233, %v4403
      %v4499 = vadd.f32 %v4234, %v4406
      %v4500 = vadd.f32 %v4235, %v4408
      %v4501 = vadd.f32 %v4236, %v4411
      %v4502 = vadd.f32 %v4237, %v4413
      %v4503 = vadd.f32 %v4238, %v4416
      %v4504 = vadd.f32 %v4239, %v4418
      %v4505 = vadd.f32 %v4240, %v4421
      %v4506 = vadd.f32 %v4241, %v4423
      %v4507 = vadd.f32 %v4242, %v4426
      %v4508 = vadd.f32 %v4243, %v4428
      %v4509 = vadd.f32 %v4244, %v4431
      %v4510 = vadd.f32 %v4245, %v4433
      %v4511 = vadd.f32 %v4246, %v4436
      %v4512 = vadd.f32 %v4247, %v4438
      %v4513 = vadd.f32 %v4248, %v4441
      %v4514 = vadd.f32 %v4249, %v4443
      %v4515 = vadd.f32 %v4250, %v4446
      %v4516 = vadd.f32 %v4251, %v4448
      %v4517 = vadd.f32 %v4252, %v4451
      %v4518 = vadd.f32 %v4253, %v4453
      %v4519 = vmax.f32 %v4455, 0.0
      %v4520 = vmax.f32 %v4456, 0.0
      %v4521 = vmax.f32 %v4457, 0.0
      %v4522 = vmax.f32 %v4458, 0.0
      %v4523 = vmax.f32 %v4459, 0.0
      %v4524 = vmax.f32 %v4460, 0.0
      %v4525 = vmax.f32 %v4461, 0.0
      %v4526 = vmax.f32 %v4462, 0.0
      %v4527 = vmax.f32 %v4463, 0.0
      %v4528 = vmax.f32 %v4464, 0.0
      %v4529 = vmax.f32 %v4465, 0.0
      %v4530 = vmax.f32 %v4466, 0.0
      %v4531 = vmax.f32 %v4467, 0.0
      %v4532 = vmax.f32 %v4468, 0.0
      %v4533 = vmax.f32 %v4469, 0.0
      %v4534 = vmax.f32 %v4470, 0.0
      %v4535 = vmax.f32 %v4471, 0.0
      %v4536 = vmax.f32 %v4472, 0.0
      %v4537 = vmax.f32 %v4473, 0.0
      %v4538 = vmax.f32 %v4474, 0.0
      %v4539 = vmax.f32 %v4475, 0.0
      %v4540 = vmax.f32 %v4476, 0.0
      %v4541 = vmax.f32 %v4477, 0.0
      %v4542 = vmax.f32 %v4478, 0.0
      %v4543 = vmax.f32 %v4479, 0.0
      %v4544 = vmax.f32 %v4480, 0.0
      %v4545 = vmax.f32 %v4481, 0.0
      %v4546 = vmax.f32 %v4482, 0.0
      %v4547 = vmax.f32 %v4483, 0.0
      %v4548 = vmax.f32 %v4484, 0.0
      %v4549 = vmax.f32 %v4485, 0.0
      %v4550 = vmax.f32 %v4486, 0.0
      %v4551 = vmax.f32 %v4487, 0.0
      %v4552 = vmax.f32 %v4488, 0.0
      %v4553 = vmax.f32 %v4489, 0.0
      %v4554 = vmax.f32 %v4490, 0.0
      %v4555 = vmax.f32 %v4491, 0.0
      %v4556 = vmax.f32 %v4492, 0.0
      %v4557 = vmax.f32 %v4493, 0.0
      %v4558 = vmax.f32 %v4494, 0.0
      %v4559 = vmax.f32 %v4495, 0.0
      %v4560 = vmax.f32 %v4496, 0.0
      %v4561 = vmax.f32 %v4497, 0.0
      %v4562 = vmax.f32 %v4498, 0.0
      %v4563 = vmax.f32 %v4499, 0.0
      %v4564 = vmax.f32 %v4500, 0.0
      %v4565 = vmax.f32 %v4501, 0.0
      %v4566 = vmax.f32 %v4502, 0.0
      %v4567 = vmax.f32 %v4503, 0.0
      %v4568 = vmax.f32 %v4504, 0.0
      %v4569 = vmax.f32 %v4505, 0.0
      %v4570 = vmax.f32 %v4506, 0.0
      %v4571 = vmax.f32 %v4507, 0.0
      %v4572 = vmax.f32 %v4508, 0.0
      %v4573 = vmax.f32 %v4509, 0.0
      %v4574 = vmax.f32 %v4510, 0.0
      %v4575 = vmax.f32 %v4511, 0.0
      %v4576 = vmax.f32 %v4512, 0.0
      %v4577 = vmax.f32 %v4513, 0.0
      %v4578 = vmax.f32 %v4514, 0.0
      %v4579 = vmax.f32 %v4515, 0.0
      %v4580 = vmax.f32 %v4516, 0.0
      %v4581 = vmax.f32 %v4517, 0.0
      %v4582 = vmax.f32 %v4518, 0.0
      %v4583 = vadd.f32 %v4519, %v4520
      %v4584 = vadd.f32 %v4583, %v4521
      %v4585 = vadd.f32 %v4584, %v4522
      %v4586 = vadd.f32 %v4585, %v4523
      %v4587 = vadd.f32 %v4586, %v4524
      %v4588 = vadd.f32 %v4587, %v4525
      %v4589 = vadd.f32 %v4588, %v4526
      %v4590 = vadd.f32 %v4589, %v4527
      %v4591 = vadd.f32 %v4590, %v4528
      %v4592 = vadd.f32 %v4591, %v4529
      %v4593 = vadd.f32 %v4592, %v4530
      %v4594 = vadd.f32 %v4593, %v4531
      %v4595 = vadd.f32 %v4594, %v4532
      %v4596 = vadd.f32 %v4595, %v4533
      %v4597 = vadd.f32 %v4596, %v4534
      %v4598 = vadd.f32 %v4597, %v4535
      %v4599 = vadd.f32 %v4598, %v4536
      %v4600 = vadd.f32 %v4599, %v4537
      %v4601 = vadd.f32 %v4600, %v4538
      %v4602 = vadd.f32 %v4601, %v4539
      %v4603 = vadd.f32 %v4602, %v4540
      %v4604 = vadd.f32 %v4603, %v4541
      %v4605 = vadd.f32 %v4604, %v4542
      %v4606 = vadd.f32 %v4605, %v4543
      %v4607 = vadd.f32 %v4606, %v4544
      %v4608 = vadd.f32 %v4607, %v4545
      %v4609 = vadd.f32 %v4608, %v4546
      %v4610 = vadd.f32 %v4609, %v4547
      %v4611 = vadd.f32 %v4610, %v4548
      %v4612 = vadd.f32 %v4611, %v4549
      %v4613 = vadd.f32 %v4612, %v4550
      %v4614 = vrot.slane %v4613, 4
      %v4615 = vadd.f32 %v4613, %v4614
      %v4616 = vrot.slane %v4615, 2
      %v4617 = vadd.f32 %v4615, %v4616
      %v4618 = vrot.slane %v4617, 1
      %v4619 = vadd.f32 %v4617, %v4618
      %v4620 = vadd.f32 %v4551, %v4552
      %v4621 = vadd.f32 %v4620, %v4553
      %v4622 = vadd.f32 %v4621, %v4554
      %v4623 = vadd.f32 %v4622, %v4555
      %v4624 = vadd.f32 %v4623, %v4556
      %v4625 = vadd.f32 %v4624, %v4557
      %v4626 = vadd.f32 %v4625, %v4558
      %v4627 = vadd.f32 %v4626, %v4559
      %v4628 = vadd.f32 %v4627, %v4560
      %v4629 = vadd.f32 %v4628, %v4561
      %v4630 = vadd.f32 %v4629, %v4562
      %v4631 = vadd.f32 %v4630, %v4563
      %v4632 = vadd.f32 %v4631, %v4564
      %v4633 = vadd.f32 %v4632, %v4565
      %v4634 = vadd.f32 %v4633, %v4566
      %v4635 = vadd.f32 %v4634, %v4567
      %v4636 = vadd.f32 %v4635, %v4568
      %v4637 = vadd.f32 %v4636, %v4569
      %v4638 = vadd.f32 %v4637, %v4570
      %v4639 = vadd.f32 %v4638, %v4571
      %v4640 = vadd.f32 %v4639, %v4572
      %v4641 = vadd.f32 %v4640, %v4573
      %v4642 = vadd.f32 %v4641, %v4574
      %v4643 = vadd.f32 %v4642, %v4575
      %v4644 = vadd.f32 %v4643, %v4576
      %v4645 = vadd.f32 %v4644, %v4577
      %v4646 = vadd.f32 %v4645, %v4578
      %v4647 = vadd.f32 %v4646, %v4579
      %v4648 = vadd.f32 %v4647, %v4580
      %v4649 = vadd.f32 %v4648, %v4581
      %v4650 = vadd.f32 %v4649, %v4582
      %v4651 = vrot.slane %v4650, 4
      %v4652 = vadd.f32 %v4650, %v4651
      %v4653 = vrot.slane %v4652, 2
      %v4654 = vadd.f32 %v4652, %v4653
      %v4655 = vrot.slane %v4654, 1
      %v4656 = vadd.f32 %v4654, %v4655
      %v4657 = vrcp.pop 256.0
      %v4658 = vmul.f32 256.0, %v4657
      %v4659 = vsub.f32 1.0, %v4658
      %v4660 = vmul.f32 %v4657, %v4659
      %v4661 = vadd.f32 %v4657, %v4660
      %vm4662 = vweird.f32 %v4657
      %v4663 = vsel %vm4662, %v4657, %v4661
      %v4664 = vmul.f32 %v4619, %v4663
      %v4665 = vmul.f32 %v4656, %v4663
      %v4666 = vpack.c.bf16 %v4664, %v4664
      %v4667 = vpack.c.bf16 %v4665, %v4665
      %v4668 = vld [vmem:[%s2] sm:$0xf]
      %v4669 = vld [vmem:[%s2 + $0x4] sm:$0xf]
      %v4670 = vld [vmem:[%s2 + $0x8] sm:$0xf]
      %v4671 = vld [vmem:[%s2 + $0xc] sm:$0xf]
      %v4672 = vld [vmem:[%s2 + $0x10] sm:$0xf]
      %v4673 = vld [vmem:[%s2 + $0x14] sm:$0xf]
      %v4674 = vld [vmem:[%s2 + $0x18] sm:$0xf]
      %v4675 = vld [vmem:[%s2 + $0x1c] sm:$0xf]
      %v4676 = vld [vmem:[%s2 + $0x20] sm:$0xf]
      %v4677 = vld [vmem:[%s2 + $0x24] sm:$0xf]
      %v4678 = vld [vmem:[%s2 + $0x28] sm:$0xf]
      %v4679 = vld [vmem:[%s2 + $0x2c] sm:$0xf]
      %v4680 = vld [vmem:[%s2 + $0x30] sm:$0xf]
      %v4681 = vld [vmem:[%s2 + $0x34] sm:$0xf]
      %v4682 = vld [vmem:[%s2 + $0x38] sm:$0xf]
      %v4683 = vld [vmem:[%s2 + $0x3c] sm:$0xf]
      %v4686 = vunpack.c.l.b16 %v4666
      %v4687 = vunpack.c.l.b16 %v4667
      %vm4688 = vcmask 1041409
      %v4689 = vsel %vm4688, %v4687, %v4686
      %v4690 = vpack.c.b16 %v4689, %v4689
      %v4708 = vunpack.c.l.b16 %v4668
      %v4709 = vunpack.c.l.b16 %v4669
      %v4710 = vunpack.c.l.b16 %v4670
      %v4711 = vunpack.c.l.b16 %v4671
      %v4712 = vunpack.c.l.b16 %v4672
      %v4713 = vunpack.c.l.b16 %v4673
      %v4714 = vunpack.c.l.b16 %v4674
      %v4715 = vunpack.c.l.b16 %v4675
      %v4716 = vunpack.c.l.b16 %v4676
      %v4717 = vunpack.c.l.b16 %v4677
      %v4718 = vunpack.c.l.b16 %v4678
      %v4719 = vunpack.c.l.b16 %v4679
      %v4720 = vunpack.c.l.b16 %v4680
      %v4721 = vunpack.c.l.b16 %v4681
      %v4722 = vunpack.c.l.b16 %v4682
      %v4723 = vunpack.c.l.b16 %v4683
      %v4724 = vpack.c.b16 %v4709, %v4708
      %v4725 = vpack.c.b16 %v4711, %v4710
      %v4726 = vpack.c.b16 %v4713, %v4712
      %v4727 = vpack.c.b16 %v4715, %v4714
      %v4728 = vpack.c.b16 %v4717, %v4716
      %v4729 = vpack.c.b16 %v4719, %v4718
      %v4730 = vpack.c.b16 %v4721, %v4720
      %v4731 = vpack.c.b16 %v4723, %v4722
      %4740 = vmatpush.bf16.msra.mxu0 %v4731
      %4741 = vmatpush.bf16.msra.mxu0 %v4730
      %4742 = vmatpush.bf16.msra.mxu0 %v4729
      %4743 = vmatpush.bf16.msra.mxu0 %v4728
      %4744 = vmatpush.bf16.msra.mxu0 %v4727
      %4745 = vmatpush.bf16.msra.mxu0 %v4726
      %4746 = vmatpush.bf16.msra.mxu0 %v4725
      %4747 = vmatpush.bf16.msra.mxu0 %v4724
      %4748 = vmatmul.bf16.gmra.mxu0 %v4690
      %v4749 = vpop.f32.mrf.mxu0
      %v4750 = vadd.f32 0.0, %v4749
      %v4751 = vpop.f32.mrf.mxu0
      %4752 = vdwg.mxu0
      %v4753 = vld [vmem:[%s3] sm:$0x1]
      %v4754 = vld [vmem:[%s4] sm:$0x1]
      %v4755 = vsel %vm1588, %v4750, 0.0
      %v4756 = vrot.slane %v4755, 4
      %v4757 = vadd.f32 %v4755, %v4756
      %v4758 = vrot.slane %v4757, 2
      %v4759 = vadd.f32 %v4757, %v4758
      %v4760 = vrot.slane %v4759, 1
      %v4761 = vadd.f32 %v4759, %v4760
      %v4762 = vrcp.pop 2.0
      %v4763 = vmul.f32 2.0, %v4762
      %v4764 = vsub.f32 1.0, %v4763
      %v4765 = vmul.f32 %v4762, %v4764
      %v4766 = vadd.f32 %v4762, %v4765
      %vm4767 = vweird.f32 %v4762
      %v4768 = vsel %vm4767, %v4762, %v4766
      %v4769 = vmul.f32 %v4761, %v4768
      %v4770 = vsub.f32 %v4750, %v4769
      %v4771 = vmul.f32 %v4770, %v4770
      %v4772 = vsel %vm1588, %v4771, 0.0
      %v4773 = vrot.slane %v4772, 4
      %v4774 = vadd.f32 %v4772, %v4773
      %v4775 = vrot.slane %v4774, 2
      %v4776 = vadd.f32 %v4774, %v4775
      %v4777 = vrot.slane %v4776, 1
      %v4778 = vadd.f32 %v4776, %v4777
      %v4779 = vmul.f32 %v4778, %v4768
      %v4780 = vadd.f32 %v4779, 1e-05
      %v4781 = vrsqrt.pop %v4780
      %v4782 = vmul.f32 %v4781, %v4780
      %v4783 = vmul.f32 %v4782, %v4781
      %v4784 = vmul.f32 0.5, %v4783
      %v4785 = vsub.f32 1.5, %v4784
      %v4786 = vmul.f32 %v4781, %v4785
      %vm4787 = vweird.f32 %v4780
      %vm4788 = vweird.f32 %v4781
      %vm4789 = vmor %vm4787, %vm4788
      %v4790 = vsel %vm4789, %v4781, %v4786
      %v4791 = vmul.f32 %v4770, %v4790
      %v4793 = vperm.slane %v4753, 0
      %v4795 = vmul.f32 %v4791, %v4793
      %v4797 = vperm.slane %v4754, 0
      %v4799 = vadd.f32 %v4795, %v4797
      %v4800 = vmax.f32 %v4799, 0.0
      %v4801 = vpack.c.bf16 %v4800, %v4800
      %v4802 = vld [vmem:[%s5] sm:$0xf]
      %v4803 = vld [vmem:[%s5 + $0x4] sm:$0xf]
      %v4804 = vld [vmem:[%s5 + $0x8] sm:$0xf]
      %v4805 = vld [vmem:[%s5 + $0xc] sm:$0xf]
      %v4806 = vld [vmem:[%s5 + $0x10] sm:$0xf]
      %v4807 = vld [vmem:[%s5 + $0x14] sm:$0xf]
      %v4808 = vld [vmem:[%s5 + $0x18] sm:$0xf]
      %v4809 = vld [vmem:[%s5 + $0x1c] sm:$0xf]
      %v4810 = vld [vmem:[%s5 + $0x20] sm:$0xf]
      %v4811 = vld [vmem:[%s5 + $0x24] sm:$0xf]
      %v4812 = vld [vmem:[%s5 + $0x28] sm:$0xf]
      %v4813 = vld [vmem:[%s5 + $0x2c] sm:$0xf]
      %v4814 = vld [vmem:[%s5 + $0x30] sm:$0xf]
      %v4815 = vld [vmem:[%s5 + $0x34] sm:$0xf]
      %v4816 = vld [vmem:[%s5 + $0x38] sm:$0xf]
      %v4817 = vld [vmem:[%s5 + $0x3c] sm:$0xf]
      %v4834 = vunpack.c.l.b16 %v4802
      %v4835 = vunpack.c.l.b16 %v4803
      %v4836 = vunpack.c.l.b16 %v4804
      %v4837 = vunpack.c.l.b16 %v4805
      %v4838 = vunpack.c.l.b16 %v4806
      %v4839 = vunpack.c.l.b16 %v4807
      %v4840 = vunpack.c.l.b16 %v4808
      %v4841 = vunpack.c.l.b16 %v4809
      %v4842 = vunpack.c.l.b16 %v4810
      %v4843 = vunpack.c.l.b16 %v4811
      %v4844 = vunpack.c.l.b16 %v4812
      %v4845 = vunpack.c.l.b16 %v4813
      %v4846 = vunpack.c.l.b16 %v4814
      %v4847 = vunpack.c.l.b16 %v4815
      %v4848 = vunpack.c.l.b16 %v4816
      %v4849 = vunpack.c.l.b16 %v4817
      %v4850 = vpack.c.b16 %v4835, %v4834
      %v4851 = vpack.c.b16 %v4837, %v4836
      %v4852 = vpack.c.b16 %v4839, %v4838
      %v4853 = vpack.c.b16 %v4841, %v4840
      %v4854 = vpack.c.b16 %v4843, %v4842
      %v4855 = vpack.c.b16 %v4845, %v4844
      %v4856 = vpack.c.b16 %v4847, %v4846
      %v4857 = vpack.c.b16 %v4849, %v4848
      %4866 = vmatpush.bf16.msra.mxu0 %v4857
      %4867 = vmatpush.bf16.msra.mxu0 %v4856
      %4868 = vmatpush.bf16.msra.mxu0 %v4855
      %4869 = vmatpush.bf16.msra.mxu0 %v4854
      %4870 = vmatpush.bf16.msra.mxu0 %v4853
      %4871 = vmatpush.bf16.msra.mxu0 %v4852
      %4872 = vmatpush.bf16.msra.mxu0 %v4851
      %4873 = vmatpush.bf16.msra.mxu0 %v4850
      %4874 = vmatmul.bf16.gmra.mxu0 %v4801
      %v4875 = vpop.f32.mrf.mxu0
      %v4876 = vadd.f32 0.0, %v4875
      %v4877 = vpop.f32.mrf.mxu0
      %4878 = vdwg.mxu0
      %v4879 = vld [vmem:[%s6] sm:$0x1]
      %v4880 = vld [vmem:[%s7] sm:$0x1]
      %v4881 = vsel %vm1588, %v4876, 0.0
      %v4882 = vrot.slane %v4881, 4
      %v4883 = vadd.f32 %v4881, %v4882
      %v4884 = vrot.slane %v4883, 2
      %v4885 = vadd.f32 %v4883, %v4884
      %v4886 = vrot.slane %v4885, 1
      %v4887 = vadd.f32 %v4885, %v4886
      %v4888 = vmul.f32 %v4887, %v4768
      %v4889 = vsub.f32 %v4876, %v4888
      %v4890 = vmul.f32 %v4889, %v4889
      %v4891 = vsel %vm1588, %v4890, 0.0
      %v4892 = vrot.slane %v4891, 4
      %v4893 = vadd.f32 %v4891, %v4892
      %v4894 = vrot.slane %v4893, 2
      %v4895 = vadd.f32 %v4893, %v4894
      %v4896 = vrot.slane %v4895, 1
      %v4897 = vadd.f32 %v4895, %v4896
      %v4898 = vmul.f32 %v4897, %v4768
      %v4899 = vadd.f32 %v4898, 1e-05
      %v4900 = vrsqrt.pop %v4899
      %v4901 = vmul.f32 %v4900, %v4899
      %v4902 = vmul.f32 %v4901, %v4900
      %v4903 = vmul.f32 0.5, %v4902
      %v4904 = vsub.f32 1.5, %v4903
      %v4905 = vmul.f32 %v4900, %v4904
      %vm4906 = vweird.f32 %v4899
      %vm4907 = vweird.f32 %v4900
      %vm4908 = vmor %vm4906, %vm4907
      %v4909 = vsel %vm4908, %v4900, %v4905
      %v4910 = vmul.f32 %v4889, %v4909
      %v4912 = vperm.slane %v4879, 0
      %v4914 = vmul.f32 %v4910, %v4912
      %v4916 = vperm.slane %v4880, 0
      %v4918 = vadd.f32 %v4914, %v4916
      %v4919 = vmax.f32 %v4918, 0.0
      %v4920 = vpack.c.bf16 %v4919, %v4919
      %v4921 = vld [vmem:[%s8] sm:$0xf]
      %v4922 = vld [vmem:[%s8 + $0x4] sm:$0xf]
      %v4923 = vld [vmem:[%s8 + $0x8] sm:$0xf]
      %v4924 = vld [vmem:[%s8 + $0xc] sm:$0xf]
      %v4925 = vld [vmem:[%s8 + $0x10] sm:$0xf]
      %v4926 = vld [vmem:[%s8 + $0x14] sm:$0xf]
      %v4927 = vld [vmem:[%s8 + $0x18] sm:$0xf]
      %v4928 = vld [vmem:[%s8 + $0x1c] sm:$0xf]
      %v4929 = vld [vmem:[%s8 + $0x20] sm:$0xf]
      %v4930 = vld [vmem:[%s8 + $0x24] sm:$0xf]
      %v4931 = vld [vmem:[%s8 + $0x28] sm:$0xf]
      %v4932 = vld [vmem:[%s8 + $0x2c] sm:$0xf]
      %v4933 = vld [vmem:[%s8 + $0x30] sm:$0xf]
      %v4934 = vld [vmem:[%s8 + $0x34] sm:$0xf]
      %v4935 = vld [vmem:[%s8 + $0x38] sm:$0xf]
      %v4936 = vld [vmem:[%s8 + $0x3c] sm:$0xf]
      %v4953 = vunpack.c.l.b16 %v4921
      %v4954 = vunpack.c.l.b16 %v4922
      %v4955 = vunpack.c.l.b16 %v4923
      %v4956 = vunpack.c.l.b16 %v4924
      %v4957 = vunpack.c.l.b16 %v4925
      %v4958 = vunpack.c.l.b16 %v4926
      %v4959 = vunpack.c.l.b16 %v4927
      %v4960 = vunpack.c.l.b16 %v4928
      %v4961 = vunpack.c.l.b16 %v4929
      %v4962 = vunpack.c.l.b16 %v4930
      %v4963 = vunpack.c.l.b16 %v4931
      %v4964 = vunpack.c.l.b16 %v4932
      %v4965 = vunpack.c.l.b16 %v4933
      %v4966 = vunpack.c.l.b16 %v4934
      %v4967 = vunpack.c.l.b16 %v4935
      %v4968 = vunpack.c.l.b16 %v4936
      %v4969 = vpack.c.b16 %v4954, %v4953
      %v4970 = vpack.c.b16 %v4956, %v4955
      %v4971 = vpack.c.b16 %v4958, %v4957
      %v4972 = vpack.c.b16 %v4960, %v4959
      %v4973 = vpack.c.b16 %v4962, %v4961
      %v4974 = vpack.c.b16 %v4964, %v4963
      %v4975 = vpack.c.b16 %v4966, %v4965
      %v4976 = vpack.c.b16 %v4968, %v4967
      %4985 = vmatpush.bf16.msra.mxu0 %v4976
      %4986 = vmatpush.bf16.msra.mxu0 %v4975
      %4987 = vmatpush.bf16.msra.mxu0 %v4974
      %4988 = vmatpush.bf16.msra.mxu0 %v4973
      %4989 = vmatpush.bf16.msra.mxu0 %v4972
      %4990 = vmatpush.bf16.msra.mxu0 %v4971
      %4991 = vmatpush.bf16.msra.mxu0 %v4970
      %4992 = vmatpush.bf16.msra.mxu0 %v4969
      %4993 = vmatmul.bf16.gmra.mxu0 %v4920
      %v4994 = vpop.f32.mrf.mxu0
      %v4995 = vadd.f32 0.0, %v4994
      %v4996 = vpop.f32.mrf.mxu0
      %4997 = vdwg.mxu0
      %v4998 = vsel %vm1588, %v4995, 0.0
      %v4999 = vrot.slane %v4998, 4
      %v5000 = vadd.f32 %v4998, %v4999
      %v5001 = vrot.slane %v5000, 2
      %v5002 = vadd.f32 %v5000, %v5001
      %v5003 = vrot.slane %v5002, 1
      %v5004 = vadd.f32 %v5002, %v5003
      %v5005 = vmul.f32 %v5004, %v4768
      %v5006 = vsub.f32 %v4995, %v5005
      %v5007 = vmul.f32 %v5006, %v5006
      %v5008 = vsel %vm1588, %v5007, 0.0
      %v5009 = vrot.slane %v5008, 4
      %v5010 = vadd.f32 %v5008, %v5009
      %v5011 = vrot.slane %v5010, 2
      %v5012 = vadd.f32 %v5010, %v5011
      %v5013 = vrot.slane %v5012, 1
      %v5014 = vadd.f32 %v5012, %v5013
      %v5015 = vmul.f32 %v5014, %v4768
      %v5016 = vadd.f32 %v5015, 1e-05
      %v5017 = vrsqrt.pop %v5016
      %v5018 = vmul.f32 %v5017, %v5016
      %v5019 = vmul.f32 %v5018, %v5017
      %v5020 = vmul.f32 0.5, %v5019
      %v5021 = vsub.f32 1.5, %v5020
      %v5022 = vmul.f32 %v5017, %v5021
      %vm5023 = vweird.f32 %v5016
      %vm5024 = vweird.f32 %v5017
      %vm5025 = vmor %vm5023, %vm5024
      %v5026 = vsel %vm5025, %v5017, %v5022
      %v5027 = vmul.f32 %v5006, %v5026
      %5028 = vst [vmem:[%s508] sm:$0x3] %v5027
      %v5029 = vpack.c.bf16 %v5027, %v5027
      %v5030 = vld [vmem:[%s9] sm:$0xf]
      %v5031 = vld [vmem:[%s9 + $0x4] sm:$0xf]
      %v5032 = vld [vmem:[%s9 + $0x8] sm:$0xf]
      %v5033 = vld [vmem:[%s9 + $0xc] sm:$0xf]
      %v5034 = vld [vmem:[%s9 + $0x10] sm:$0xf]
      %v5035 = vld [vmem:[%s9 + $0x14] sm:$0xf]
      %v5036 = vld [vmem:[%s9 + $0x18] sm:$0xf]
      %v5037 = vld [vmem:[%s9 + $0x1c] sm:$0xf]
      %v5038 = vld [vmem:[%s9 + $0x20] sm:$0xf]
      %v5039 = vld [vmem:[%s9 + $0x24] sm:$0xf]
      %v5040 = vld [vmem:[%s9 + $0x28] sm:$0xf]
      %v5041 = vld [vmem:[%s9 + $0x2c] sm:$0xf]
      %v5042 = vld [vmem:[%s9 + $0x30] sm:$0xf]
      %v5043 = vld [vmem:[%s9 + $0x34] sm:$0xf]
      %v5044 = vld [vmem:[%s9 + $0x38] sm:$0xf]
      %v5045 = vld [vmem:[%s9 + $0x3c] sm:$0xf]
      %v5062 = vunpack.c.l.b16 %v5030
      %v5063 = vunpack.c.l.b16 %v5031
      %v5064 = vunpack.c.l.b16 %v5032
      %v5065 = vunpack.c.l.b16 %v5033
      %v5066 = vunpack.c.l.b16 %v5034
      %v5067 = vunpack.c.l.b16 %v5035
      %v5068 = vunpack.c.l.b16 %v5036
      %v5069 = vunpack.c.l.b16 %v5037
      %v5070 = vunpack.c.l.b16 %v5038
      %v5071 = vunpack.c.l.b16 %v5039
      %v5072 = vunpack.c.l.b16 %v5040
      %v5073 = vunpack.c.l.b16 %v5041
      %v5074 = vunpack.c.l.b16 %v5042
      %v5075 = vunpack.c.l.b16 %v5043
      %v5076 = vunpack.c.l.b16 %v5044
      %v5077 = vunpack.c.l.b16 %v5045
      %v5078 = vpack.c.b16 %v5063, %v5062
      %v5079 = vpack.c.b16 %v5065, %v5064
      %v5080 = vpack.c.b16 %v5067, %v5066
      %v5081 = vpack.c.b16 %v5069, %v5068
      %v5082 = vpack.c.b16 %v5071, %v5070
      %v5083 = vpack.c.b16 %v5073, %v5072
      %v5084 = vpack.c.b16 %v5075, %v5074
      %v5085 = vpack.c.b16 %v5077, %v5076
      %5094 = vmatpush.bf16.msra.mxu0 %v5085
      %5095 = vmatpush.bf16.msra.mxu0 %v5084
      %5096 = vmatpush.bf16.msra.mxu0 %v5083
      %5097 = vmatpush.bf16.msra.mxu0 %v5082
      %5098 = vmatpush.bf16.msra.mxu0 %v5081
      %5099 = vmatpush.bf16.msra.mxu0 %v5080
      %5100 = vmatpush.bf16.msra.mxu0 %v5079
      %5101 = vmatpush.bf16.msra.mxu0 %v5078
      %5102 = vmatmul.bf16.gmra.mxu0 %v5029
      %v5103 = vpop.f32.mrf.mxu0
      %v5104 = vadd.f32 0.0, %v5103
      %v5105 = vpop.f32.mrf.mxu0
      %5106 = vdwg.mxu0
      %v5107 = vld [vmem:[%s10] sm:$0x1]
      %v5108 = vld [vmem:[%s11] sm:$0x1]
      %v5109 = vsel %vm1588, %v5104, 0.0
      %v5110 = vrot.slane %v5109, 4
      %v5111 = vadd.f32 %v5109, %v5110
      %v5112 = vrot.slane %v5111, 2
      %v5113 = vadd.f32 %v5111, %v5112
      %v5114 = vrot.slane %v5113, 1
      %v5115 = vadd.f32 %v5113, %v5114
      %v5116 = vmul.f32 %v5115, %v4768
      %v5117 = vsub.f32 %v5104, %v5116
      %v5118 = vmul.f32 %v5117, %v5117
      %v5119 = vsel %vm1588, %v5118, 0.0
      %v5120 = vrot.slane %v5119, 4
      %v5121 = vadd.f32 %v5119, %v5120
      %v5122 = vrot.slane %v5121, 2
      %v5123 = vadd.f32 %v5121, %v5122
      %v5124 = vrot.slane %v5123, 1
      %v5125 = vadd.f32 %v5123, %v5124
      %v5126 = vmul.f32 %v5125, %v4768
      %v5127 = vadd.f32 %v5126, 1e-05
      %v5128 = vrsqrt.pop %v5127
      %v5129 = vmul.f32 %v5128, %v5127
      %v5130 = vmul.f32 %v5129, %v5128
      %v5131 = vmul.f32 0.5, %v5130
      %v5132 = vsub.f32 1.5, %v5131
      %v5133 = vmul.f32 %v5128, %v5132
      %vm5134 = vweird.f32 %v5127
      %vm5135 = vweird.f32 %v5128
      %vm5136 = vmor %vm5134, %vm5135
      %v5137 = vsel %vm5136, %v5128, %v5133
      %v5138 = vmul.f32 %v5117, %v5137
      %v5140 = vperm.slane %v5107, 0
      %v5142 = vmul.f32 %v5138, %v5140
      %v5144 = vperm.slane %v5108, 0
      %v5146 = vadd.f32 %v5142, %v5144
      %v5147 = vmax.f32 %v5146, 0.0
      %v5148 = vpack.c.bf16 %v5147, %v5147
      %v5149 = vld [vmem:[%s12] sm:$0xf]
      %v5150 = vld [vmem:[%s12 + $0x4] sm:$0xf]
      %v5151 = vld [vmem:[%s12 + $0x8] sm:$0xf]
      %v5152 = vld [vmem:[%s12 + $0xc] sm:$0xf]
      %v5153 = vld [vmem:[%s12 + $0x10] sm:$0xf]
      %v5154 = vld [vmem:[%s12 + $0x14] sm:$0xf]
      %v5155 = vld [vmem:[%s12 + $0x18] sm:$0xf]
      %v5156 = vld [vmem:[%s12 + $0x1c] sm:$0xf]
      %v5157 = vld [vmem:[%s12 + $0x20] sm:$0xf]
      %v5158 = vld [vmem:[%s12 + $0x24] sm:$0xf]
      %v5159 = vld [vmem:[%s12 + $0x28] sm:$0xf]
      %v5160 = vld [vmem:[%s12 + $0x2c] sm:$0xf]
      %v5161 = vld [vmem:[%s12 + $0x30] sm:$0xf]
      %v5162 = vld [vmem:[%s12 + $0x34] sm:$0xf]
      %v5163 = vld [vmem:[%s12 + $0x38] sm:$0xf]
      %v5164 = vld [vmem:[%s12 + $0x3c] sm:$0xf]
      %v5165 = vld [vmem:[%s13] sm:$0x1]
      %v5167 = vperm.slane %v5165, 0
      %v5185 = vunpack.c.l.b16 %v5149
      %v5186 = vunpack.c.l.b16 %v5150
      %v5187 = vunpack.c.l.b16 %v5151
      %v5188 = vunpack.c.l.b16 %v5152
      %v5189 = vunpack.c.l.b16 %v5153
      %v5190 = vunpack.c.l.b16 %v5154
      %v5191 = vunpack.c.l.b16 %v5155
      %v5192 = vunpack.c.l.b16 %v5156
      %v5193 = vunpack.c.l.b16 %v5157
      %v5194 = vunpack.c.l.b16 %v5158
      %v5195 = vunpack.c.l.b16 %v5159
      %v5196 = vunpack.c.l.b16 %v5160
      %v5197 = vunpack.c.l.b16 %v5161
      %v5198 = vunpack.c.l.b16 %v5162
      %v5199 = vunpack.c.l.b16 %v5163
      %v5200 = vunpack.c.l.b16 %v5164
      %v5201 = vpack.c.b16 %v5186, %v5185
      %v5202 = vpack.c.b16 %v5188, %v5187
      %v5203 = vpack.c.b16 %v5190, %v5189
      %v5204 = vpack.c.b16 %v5192, %v5191
      %v5205 = vpack.c.b16 %v5194, %v5193
      %v5206 = vpack.c.b16 %v5196, %v5195
      %v5207 = vpack.c.b16 %v5198, %v5197
      %v5208 = vpack.c.b16 %v5200, %v5199
      %5217 = vmatpush.bf16.msra.mxu0 %v5208
      %5218 = vmatpush.bf16.msra.mxu0 %v5207
      %5219 = vmatpush.bf16.msra.mxu0 %v5206
      %5220 = vmatpush.bf16.msra.mxu0 %v5205
      %5221 = vmatpush.bf16.msra.mxu0 %v5204
      %5222 = vmatpush.bf16.msra.mxu0 %v5203
      %5223 = vmatpush.bf16.msra.mxu0 %v5202
      %5224 = vmatpush.bf16.msra.mxu0 %v5201
      %5225 = vmatmul.bf16.gmra.mxu0 %v5148
      %v5226 = vpop.f32.mrf.mxu0
      %v5227 = vadd.f32 %v5167, %v5226
      %v5228 = vpop.f32.mrf.mxu0
      %5229 = vdwg.mxu0
      %5230 = vst [vmem:[%s504] sm:$0x3] %v5227
      %p5231 = scmp.lt.s32.totalorder %s27, 1
      %s5232 = scalar_select %p5231, %s27, 1
      %s5233 = smul.addr %s5232, 2
      %s5234 = scalar_lea.vmem %s14, %s5233
      %p5235 = scmp.lt.s32.totalorder %s27, 1
      %s5236 = scalar_select %p5235, %s27, 1
      %s5237 = smul.addr %s5236, 2
      %s5238 = scalar_lea.vmem %s15, %s5237
      // Predicated region
      $region77: #{_simsiam_forward.1} parent=75 // pred_check
        %p5239 = pneg %p344
      $region78: #{_simsiam_forward.1} parent=75 // pred_check_branch
        %5241 = sbr.rel (%p5239) target = $region80
      $region79: #{_simsiam_forward.1} parent=75 // pred_region
        _
      $region80: #{_simsiam_forward.1} parent=75 // pred_fallthru
        _
      // Predicated region
      $region81: #{_simsiam_forward.1} parent=75 // pred_check
        %p5242 = pneg %p370
      $region82: #{_simsiam_forward.1} parent=75 // pred_check_branch
        %5244 = sbr.rel (%p5242) target = $region84
      $region83: #{_simsiam_forward.1} parent=75 // pred_region
        _
      $region84: #{_simsiam_forward.1} parent=75 // pred_fallthru
        _
    $region76: #{_simsiam_forward.1} parent=5 // pred_fallthru
      _
    %p5245 = scmp.le.s32.totalorder 2, %s22
    // Predicated region
    $region85: #{_simsiam_forward.1} parent=5 // pred_check
      %p5246 = pneg %p5245
    $region86: #{_simsiam_forward.1} parent=5 // pred_check_branch
      %5248 = sbr.rel (%p5246) target = $region88
    $region87: #{_simsiam_forward.1} parent=5 // pred_region
      %s5249 = ssub.s32 %s22, 2
      // Predicated region
      $region89: #{_simsiam_forward.1} parent=87 // pred_check
        %p5250 = pneg %p350
      $region90: #{_simsiam_forward.1} parent=87 // pred_check_branch
        %5252 = sbr.rel (%p5250) target = $region92
      $region91: #{_simsiam_forward.1} parent=87 // pred_region
        %p5253 = scmp.lt.s32.totalorder %s28, 1
        %s5254 = scalar_select %p5253, %s28, 1
        %s5255 = smul.addr %s5254, 2
        %s5256 = scalar_lea.vmem %s14, %s5255
      $region92: #{_simsiam_forward.1} parent=87 // pred_fallthru
        _
      // Predicated region
      $region93: #{_simsiam_forward.1} parent=87 // pred_check
        %p5257 = pneg %p376
      $region94: #{_simsiam_forward.1} parent=87 // pred_check_branch
        %5259 = sbr.rel (%p5257) target = $region96
      $region95: #{_simsiam_forward.1} parent=87 // pred_region
        %p5260 = scmp.lt.s32.totalorder %s28, 1
        %s5261 = scalar_select %p5260, %s28, 1
        %s5262 = smul.addr %s5261, 2
        %s5263 = scalar_lea.vmem %s15, %s5262
      $region96: #{_simsiam_forward.1} parent=87 // pred_fallthru
        _
    $region88: #{_simsiam_forward.1} parent=5 // pred_fallthru
      _
  $region6: #{_simsiam_forward.1} parent=0 // loop_footer
    %s26 = sadd.s32 1, %s22
  $region7: #{_simsiam_forward.1} parent=0 // loop_footer_branch
    %21 = sbr.rel target = $region3
  $region8: #{_simsiam_forward.1} parent=0 // loop_exit
    _

</llo_original>
